<compile_context>
chip_gen: v7x
topology: tpu7x:2x2x1
jax: 0.10.0
libtpu: 0.0.40
codegen_flags: <defaults>
</compile_context>

<pallas_src>
import jax
import jax.numpy as jnp
from jax.experimental import pallas as pl
from jax.experimental.pallas import tpu as pltpu

# ----------------------------- problem sizes -------------------------------
B = 8            # batchSize
SRC_LEN = 8      # english (source) sequence length
TGT_LEN = 4      # chinese (target) sequence length
D = 128          # inputSize
H = 128          # hiddenSize
EN_SIZE = 256    # EN vocab
ZH_SIZE = 256    # ZH vocab (decoder dictLen)
ATT = 128        # q/k/v size of SelfDotProductAttention
TF_RATE = 1.0    # start_TF_rate -> teacher forcing always (deterministic)

_VMEM = pl.BlockSpec(memory_space=pltpu.MemorySpace.VMEM)
_ANY = pl.BlockSpec(memory_space=pl.ANY)


def _sigmoid(x):
    # One EUP op per gate: sigmoid(x) = 0.5*tanh(0.5*x) + 0.5.
    return 0.5 * jnp.tanh(0.5 * x) + 0.5


def _lstm_cell(gates, c):
    """gates: (N, 4H) f32 in PyTorch i,f,g,o order. Returns (h_new, c_new)."""
    i_g = _sigmoid(gates[:, 0 * H:1 * H])
    f_g = _sigmoid(gates[:, 1 * H:2 * H])
    g_g = jnp.tanh(gates[:, 2 * H:3 * H])
    o_g = _sigmoid(gates[:, 3 * H:4 * H])       # depends only on gates; EUP overlaps c_new VPU work
    c_new = f_g * c + i_g * g_g
    h_new = o_g * jnp.tanh(c_new)
    return h_new, c_new


# ------------------------ single fused Pallas kernel ------------------------
def _seq2seq_kernel(x_ref, y_ref,
                    enc_wih_ref, enc_whh_ref, enc_b_ref,
                    dec_b_ref, lin_b_ref,
                    dec_wih_hbm, att_dec_wih_hbm, dec_whh_hbm, lin_w_hbm,
                    out_ref,
                    xproj_enc, xproj_dec, act_buf,
                    dec_wih_v, att_dec_wih_v, dec_whh_v, lin_w_v,
                    sems):
    bf16 = jnp.bfloat16
    f32 = jnp.float32

    # -------- kick off decoder-side weight DMAs; overlap with encoder -------
    cp_wih = pltpu.make_async_copy(dec_wih_hbm, dec_wih_v, sems.at[0])
    cp_att = pltpu.make_async_copy(att_dec_wih_hbm, att_dec_wih_v, sems.at[1])
    cp_whh = pltpu.make_async_copy(dec_whh_hbm, dec_whh_v, sems.at[2])
    cp_lin = pltpu.make_async_copy(lin_w_hbm, lin_w_v, sems.at[3])
    cp_wih.start()
    cp_att.start()
    cp_whh.start()
    cp_lin.start()

    # -------------------- encoder --------------------
    # Hoisted input projection for ALL timesteps: (S*B, D) @ (D, 4H).
    xproj_enc[...] = (
        jnp.dot(x_ref[...].astype(bf16), enc_wih_ref[...],
                preferred_element_type=f32)
        + enc_b_ref[...])                                       # (S*B, 4H) f32

    h = jnp.zeros((B, H), f32)
    c = jnp.zeros((B, H), f32)
    for t in range(SRC_LEN):                                    # sequential recurrence
        # Read W_hh inside the step (do not pin it across the unrolled loop).
        gates = (xproj_enc[t * B:(t + 1) * B, :]
                 + jnp.dot(h.astype(bf16), enc_whh_ref[...],
                           preferred_element_type=f32))         # (B, 4H)
        h, c = _lstm_cell(gates, c)

    # -------------------- decoder input projection --------------------
    # Step 0 uses y[0] directly; steps 1..T-1 use attention(y[t]).  For a
    # length-1 sequence attention == y @ (Wv @ Wo), folded into W_ih at init:
    #   xproj[t>0] = y[t] @ (W_att @ W_ih) + b.
    cp_wih.wait()
    cp_att.wait()
    xproj_dec[0:B, :] = (
        jnp.dot(y_ref[0:B, :].astype(bf16), dec_wih_v[...],
                preferred_element_type=f32)
        + dec_b_ref[...])                                       # (B, 4H)
    xproj_dec[B:TGT_LEN * B, :] = (
        jnp.dot(y_ref[B:TGT_LEN * B, :].astype(bf16), att_dec_wih_v[...],
                preferred_element_type=f32)
        + dec_b_ref[...])                                       # ((T-1)*B, 4H)

    # -------------------- decoder recurrence --------------------
    cp_whh.wait()
    for t in range(TGT_LEN):
        gates = (xproj_dec[t * B:(t + 1) * B, :]
                 + jnp.dot(h.astype(bf16), dec_whh_v[...],
                           preferred_element_type=f32))         # (B, 4H)
        h, c = _lstm_cell(gates, c)
        act_buf[t * B:(t + 1) * B, :] = jnp.maximum(h, 0.0)     # nn.ReLU

    # -------------------- batched output Linear --------------------
    cp_lin.wait()
    logits = (jnp.dot(act_buf[...].astype(bf16), lin_w_v[...],
                      preferred_element_type=f32)
              + lin_b_ref[...])                                 # (T*B, ZH)

    # Lane-dense (B, T*ZH) output block; reshaped to (B, T, ZH) by the caller.
    for t in range(TGT_LEN):
        out_ref[:, t * ZH_SIZE:(t + 1) * ZH_SIZE] = logits[t * B:(t + 1) * B, :]


def _fused_forward_call(x_flat, y_flat, p):
    cost = pl.CostEstimate(flops=19_000_000,
                           transcendentals=62_000,
                           bytes_accessed=750_000)
    return pl.pallas_call(
        _seq2seq_kernel,
        out_shape=jax.ShapeDtypeStruct((B, TGT_LEN * ZH_SIZE), jnp.float32),
        in_specs=[_VMEM] * 7 + [_ANY] * 4,
        out_specs=_VMEM,
        scratch_shapes=[
            pltpu.VMEM((SRC_LEN * B, 4 * H), jnp.float32),     # encoder x-projection
            pltpu.VMEM((TGT_LEN * B, 4 * H), jnp.float32),     # decoder x-projection
            pltpu.VMEM((TGT_LEN * B, H), jnp.float32),         # ReLU(h_t) collection
            pltpu.VMEM((D, 4 * H), jnp.bfloat16),              # dec_wih landing buffer
            pltpu.VMEM((D, 4 * H), jnp.bfloat16),              # att_dec_wih landing buffer
            pltpu.VMEM((H, 4 * H), jnp.bfloat16),              # dec_whh landing buffer
            pltpu.VMEM((H, ZH_SIZE), jnp.bfloat16),            # dec_lin_w landing buffer
            pltpu.SemaphoreType.DMA((4,)),                     # one sem per weight DMA
        ],
        cost_estimate=cost,
    )(x_flat, y_flat,
      p["enc_wih"], p["enc_whh"], p["enc_b"],
      p["dec_b"], p["dec_lin_b"],
      p["dec_wih"], p["att_dec_wih"], p["dec_whh"], p["dec_lin_w"])


# ----------------------------- parameters ----------------------------------
def init_params(key):
    ks = jax.random.split(key, 16)
    n = lambda k, shape, s=0.05: (s * jax.random.normal(k, shape)).astype(jnp.float32)

    bf = jnp.bfloat16

    # attention fold: softmax over a length-1 seq == 1, so attention == x @ Wv @ Wo.
    att_wv = n(ks[12], (D, ATT))
    att_wo = n(ks[13], (ATT, D))
    att_w = jnp.dot(att_wv, att_wo)                             # (D, D) f32

    # decoder LSTM input weight (stored transposed: (D, 4H)), f32 master copy
    dec_wih_f32 = n(ks[5], (D, 4 * H))
    # fold attention into the decoder input projection IN F32, then cast
    att_dec_wih_f32 = jnp.dot(att_w, dec_wih_f32)               # (D, 4H) f32

    params = {
        # embeddings (activations -> stay f32)
        "embEN": n(ks[0], (EN_SIZE, D), 0.1),
        "embZH": n(ks[1], (ZH_SIZE, D), 0.1),
        # encoder LSTM (weights stored transposed: (in, 4H)); b = b_ih + b_hh
        "enc_wih": n(ks[2], (D, 4 * H)).astype(bf),
        "enc_whh": n(ks[3], (H, 4 * H)).astype(bf),
        "enc_b":   n(ks[4], (1, 4 * H)),
        # decoder LSTM
        "dec_wih": dec_wih_f32.astype(bf),
        "att_dec_wih": att_dec_wih_f32.astype(bf),
        "dec_whh": n(ks[6], (H, 4 * H)).astype(bf),
        "dec_b":   n(ks[7], (1, 4 * H)),
        # decoder linear H -> ZH_SIZE (xavier-ish scale), stored transposed
        "dec_lin_w": (jax.random.normal(ks[8], (H, ZH_SIZE))
                      * jnp.sqrt(2.0 / (H + ZH_SIZE))).astype(bf),
        "dec_lin_b": n(ks[9], (1, ZH_SIZE)),
    }
    return params


# ----------------------------- full forward --------------------------------
@jax.jit
def seq2seq_forward(x_ids, y_ids, params):
    # embedding lookups (glue, plain JAX gather) + time-major flatten
    x_emb = jnp.take(params["embEN"], x_ids, axis=0)            # (B, S, D)
    y_emb = jnp.take(params["embZH"], y_ids, axis=0)            # (B, T, D)
    x_flat = jnp.transpose(x_emb, (1, 0, 2)).reshape(SRC_LEN * B, D)
    y_flat = jnp.transpose(y_emb, (1, 0, 2)).reshape(TGT_LEN * B, D)

    out_flat = _fused_forward_call(x_flat, y_flat, params)      # (B, T*ZH)
    return out_flat.reshape(B, TGT_LEN, ZH_SIZE)                # (B, T, ZH)


# ----------------------------- main -----------------------------------------
if __name__ == "__main__":
    key = jax.random.PRNGKey(0)
    k_param, k_x, k_y = jax.random.split(key, 3)

    params = init_params(k_param)
    x_ids = jax.random.randint(k_x, (B, SRC_LEN), 0, EN_SIZE, dtype=jnp.int32)
    y_ids = jax.random.randint(k_y, (B, TGT_LEN), 0, ZH_SIZE, dtype=jnp.int32)

    out = seq2seq_forward(x_ids, y_ids, params)
    out = jax.block_until_ready(out)

    assert out.shape == (B, TGT_LEN, ZH_SIZE), out.shape
    assert out.dtype == jnp.float32
    assert bool(jnp.all(jnp.isfinite(out)))
    print("KERNEL_OK")
</pallas_src>

<mosaic_0001>
module attributes {stable_mosaic.version = 11 : i64} {
  func.func @_seq2seq_kernel(%arg0: memref<64x128xf32, #tpu.memory_space<vmem>>, %arg1: memref<32x128xf32, #tpu.memory_space<vmem>>, %arg2: memref<128x512xbf16, #tpu.memory_space<vmem>>, %arg3: memref<128x512xbf16, #tpu.memory_space<vmem>>, %arg4: memref<1x512xf32, #tpu.memory_space<vmem>>, %arg5: memref<1x512xf32, #tpu.memory_space<vmem>>, %arg6: memref<1x256xf32, #tpu.memory_space<vmem>>, %arg7: memref<128x512xbf16, #tpu.memory_space<any>>, %arg8: memref<128x512xbf16, #tpu.memory_space<any>>, %arg9: memref<128x512xbf16, #tpu.memory_space<any>>, %arg10: memref<128x256xbf16, #tpu.memory_space<any>>, %arg11: memref<8x1024xf32, #tpu.memory_space<vmem>>, %arg12: memref<64x512xf32, #tpu.memory_space<vmem>>, %arg13: memref<32x512xf32, #tpu.memory_space<vmem>>, %arg14: memref<32x128xf32, #tpu.memory_space<vmem>>, %arg15: memref<128x512xbf16, #tpu.memory_space<vmem>>, %arg16: memref<128x512xbf16, #tpu.memory_space<vmem>>, %arg17: memref<128x512xbf16, #tpu.memory_space<vmem>>, %arg18: memref<128x256xbf16, #tpu.memory_space<vmem>>, %arg19: memref<4x!tpu.dma_semaphore, #tpu.memory_space<semaphore_mem>>) attributes {dimension_semantics = [], scalar_prefetch = 0 : i64, scratch_operands = 8 : i64, tpu.core_type = #tpu.core_type<tc>} {
    %c0_i32 = arith.constant 0 : i32
    %0 = tpu.memref_slice %arg19[%c0_i32] : memref<4x!tpu.dma_semaphore, #tpu.memory_space<semaphore_mem>> -> memref<1x!tpu.dma_semaphore, #tpu.memory_space<semaphore_mem>>
    %1 = tpu.memref_squeeze %0 : memref<1x!tpu.dma_semaphore, #tpu.memory_space<semaphore_mem>> -> memref<!tpu.dma_semaphore, #tpu.memory_space<semaphore_mem>>
    tpu.enqueue_dma source(%arg7 : memref<128x512xbf16, #tpu.memory_space<any>>) target(%arg15 : memref<128x512xbf16, #tpu.memory_space<vmem>>) target_semaphore(%1 : memref<!tpu.dma_semaphore, #tpu.memory_space<semaphore_mem>>)
    %c1_i32 = arith.constant 1 : i32
    %2 = tpu.memref_slice %arg19[%c1_i32] : memref<4x!tpu.dma_semaphore, #tpu.memory_space<semaphore_mem>> -> memref<1x!tpu.dma_semaphore, #tpu.memory_space<semaphore_mem>>
    %3 = tpu.memref_squeeze %2 : memref<1x!tpu.dma_semaphore, #tpu.memory_space<semaphore_mem>> -> memref<!tpu.dma_semaphore, #tpu.memory_space<semaphore_mem>>
    tpu.enqueue_dma source(%arg8 : memref<128x512xbf16, #tpu.memory_space<any>>) target(%arg16 : memref<128x512xbf16, #tpu.memory_space<vmem>>) target_semaphore(%3 : memref<!tpu.dma_semaphore, #tpu.memory_space<semaphore_mem>>)
    %c2_i32 = arith.constant 2 : i32
    %4 = tpu.memref_slice %arg19[%c2_i32] : memref<4x!tpu.dma_semaphore, #tpu.memory_space<semaphore_mem>> -> memref<1x!tpu.dma_semaphore, #tpu.memory_space<semaphore_mem>>
    %5 = tpu.memref_squeeze %4 : memref<1x!tpu.dma_semaphore, #tpu.memory_space<semaphore_mem>> -> memref<!tpu.dma_semaphore, #tpu.memory_space<semaphore_mem>>
    tpu.enqueue_dma source(%arg9 : memref<128x512xbf16, #tpu.memory_space<any>>) target(%arg17 : memref<128x512xbf16, #tpu.memory_space<vmem>>) target_semaphore(%5 : memref<!tpu.dma_semaphore, #tpu.memory_space<semaphore_mem>>)
    %c3_i32 = arith.constant 3 : i32
    %6 = tpu.memref_slice %arg19[%c3_i32] : memref<4x!tpu.dma_semaphore, #tpu.memory_space<semaphore_mem>> -> memref<1x!tpu.dma_semaphore, #tpu.memory_space<semaphore_mem>>
    %7 = tpu.memref_squeeze %6 : memref<1x!tpu.dma_semaphore, #tpu.memory_space<semaphore_mem>> -> memref<!tpu.dma_semaphore, #tpu.memory_space<semaphore_mem>>
    tpu.enqueue_dma source(%arg10 : memref<128x256xbf16, #tpu.memory_space<any>>) target(%arg18 : memref<128x256xbf16, #tpu.memory_space<vmem>>) target_semaphore(%7 : memref<!tpu.dma_semaphore, #tpu.memory_space<semaphore_mem>>)
    %c0 = arith.constant 0 : index
    %c0_0 = arith.constant 0 : index
    %8 = vector.load %arg0[%c0, %c0_0] : memref<64x128xf32, #tpu.memory_space<vmem>>, vector<64x128xf32>
    %9 = arith.truncf %8 : vector<64x128xf32> to vector<64x128xbf16>
    %c0_1 = arith.constant 0 : index
    %c0_2 = arith.constant 0 : index
    %10 = vector.load %arg2[%c0_1, %c0_2] : memref<128x512xbf16, #tpu.memory_space<vmem>>, vector<128x512xbf16>
    %cst = arith.constant dense<0.000000e+00> : vector<64x512xf32>
    %11 = tpu.matmul %9, %10, %cst {dimension_numbers = #tpu.dot_dimension_numbers<[1], [0], [0], [1], [0, 0, 1, 1], [], []>} : vector<64x128xbf16>, vector<128x512xbf16>, vector<64x512xf32> -> vector<64x512xf32>
    %c0_3 = arith.constant 0 : index
    %c0_4 = arith.constant 0 : index
    %12 = vector.load %arg4[%c0_3, %c0_4] : memref<1x512xf32, #tpu.memory_space<vmem>>, vector<1x512xf32>
    %13 = vector.broadcast %12 : vector<1x512xf32> to vector<64x512xf32>
    %14 = arith.addf %11, %13 : vector<64x512xf32>
    %c0_5 = arith.constant 0 : index
    %c0_6 = arith.constant 0 : index
    %15 = vector.load %arg12[%c0_5, %c0_6] : memref<64x512xf32, #tpu.memory_space<vmem>>, vector<64x512xf32>
    tpu.vector_store %arg12[%c0_5, %c0_6], %14 {strides = array<i32>} : memref<64x512xf32, #tpu.memory_space<vmem>>, vector<64x512xf32>,
    %cst_7 = arith.constant 0.000000e+00 : f32
    %16 = vector.broadcast %cst_7 : f32 to vector<8x128xf32>
    %cst_8 = arith.constant 0.000000e+00 : f32
    %17 = vector.broadcast %cst_8 : f32 to vector<8x128xf32>
    %c0_9 = arith.constant 0 : index
    %c0_10 = arith.constant 0 : index
    %18 = vector.load %arg12[%c0_9, %c0_10] : memref<64x512xf32, #tpu.memory_space<vmem>>, vector<8x512xf32>
    %19 = arith.truncf %16 : vector<8x128xf32> to vector<8x128xbf16>
    %c0_11 = arith.constant 0 : index
    %c0_12 = arith.constant 0 : index
    %20 = vector.load %arg3[%c0_11, %c0_12] : memref<128x512xbf16, #tpu.memory_space<vmem>>, vector<128x512xbf16>
    %cst_13 = arith.constant dense<0.000000e+00> : vector<8x512xf32>
    %21 = tpu.matmul %19, %20, %cst_13 {dimension_numbers = #tpu.dot_dimension_numbers<[1], [0], [0], [1], [0, 0, 1, 1], [], []>} : vector<8x128xbf16>, vector<128x512xbf16>, vector<8x512xf32> -> vector<8x512xf32>
    %22 = arith.addf %18, %21 : vector<8x512xf32>
    %23 = vector.extract_strided_slice %22 {offsets = [0, 0], sizes = [8, 128], strides = [1, 1]} : vector<8x512xf32> to vector<8x128xf32>
    %cst_14 = arith.constant 5.000000e-01 : f32
    %24 = vector.broadcast %cst_14 : f32 to vector<8x128xf32>
    %25 = arith.mulf %24, %23 : vector<8x128xf32>
    %26 = math.tanh %25 : vector<8x128xf32>
    %cst_15 = arith.constant 5.000000e-01 : f32
    %27 = vector.broadcast %cst_15 : f32 to vector<8x128xf32>
    %28 = arith.mulf %27, %26 : vector<8x128xf32>
    %cst_16 = arith.constant 5.000000e-01 : f32
    %29 = vector.broadcast %cst_16 : f32 to vector<8x128xf32>
    %30 = arith.addf %28, %29 : vector<8x128xf32>
    %31 = vector.extract_strided_slice %22 {offsets = [0, 128], sizes = [8, 128], strides = [1, 1]} : vector<8x512xf32> to vector<8x128xf32>
    %cst_17 = arith.constant 5.000000e-01 : f32
    %32 = vector.broadcast %cst_17 : f32 to vector<8x128xf32>
    %33 = arith.mulf %32, %31 : vector<8x128xf32>
    %34 = math.tanh %33 : vector<8x128xf32>
    %cst_18 = arith.constant 5.000000e-01 : f32
    %35 = vector.broadcast %cst_18 : f32 to vector<8x128xf32>
    %36 = arith.mulf %35, %34 : vector<8x128xf32>
    %cst_19 = arith.constant 5.000000e-01 : f32
    %37 = vector.broadcast %cst_19 : f32 to vector<8x128xf32>
    %38 = arith.addf %36, %37 : vector<8x128xf32>
    %39 = vector.extract_strided_slice %22 {offsets = [0, 256], sizes = [8, 128], strides = [1, 1]} : vector<8x512xf32> to vector<8x128xf32>
    %40 = math.tanh %39 : vector<8x128xf32>
    %41 = vector.extract_strided_slice %22 {offsets = [0, 384], sizes = [8, 128], strides = [1, 1]} : vector<8x512xf32> to vector<8x128xf32>
    %cst_20 = arith.constant 5.000000e-01 : f32
    %42 = vector.broadcast %cst_20 : f32 to vector<8x128xf32>
    %43 = arith.mulf %42, %41 : vector<8x128xf32>
    %44 = math.tanh %43 : vector<8x128xf32>
    %cst_21 = arith.constant 5.000000e-01 : f32
    %45 = vector.broadcast %cst_21 : f32 to vector<8x128xf32>
    %46 = arith.mulf %45, %44 : vector<8x128xf32>
    %cst_22 = arith.constant 5.000000e-01 : f32
    %47 = vector.broadcast %cst_22 : f32 to vector<8x128xf32>
    %48 = arith.addf %46, %47 : vector<8x128xf32>
    %49 = arith.mulf %38, %17 : vector<8x128xf32>
    %50 = arith.mulf %30, %40 : vector<8x128xf32>
    %51 = arith.addf %49, %50 : vector<8x128xf32>
    %52 = math.tanh %51 : vector<8x128xf32>
    %53 = arith.mulf %48, %52 : vector<8x128xf32>
    %c8 = arith.constant 8 : index
    %c0_23 = arith.constant 0 : index
    %54 = vector.load %arg12[%c8, %c0_23] : memref<64x512xf32, #tpu.memory_space<vmem>>, vector<8x512xf32>
    %55 = arith.truncf %53 : vector<8x128xf32> to vector<8x128xbf16>
    %c0_24 = arith.constant 0 : index
    %c0_25 = arith.constant 0 : index
    %56 = vector.load %arg3[%c0_24, %c0_25] : memref<128x512xbf16, #tpu.memory_space<vmem>>, vector<128x512xbf16>
    %cst_26 = arith.constant dense<0.000000e+00> : vector<8x512xf32>
    %57 = tpu.matmul %55, %56, %cst_26 {dimension_numbers = #tpu.dot_dimension_numbers<[1], [0], [0], [1], [0, 0, 1, 1], [], []>} : vector<8x128xbf16>, vector<128x512xbf16>, vector<8x512xf32> -> vector<8x512xf32>
    %58 = arith.addf %54, %57 : vector<8x512xf32>
    %59 = vector.extract_strided_slice %58 {offsets = [0, 0], sizes = [8, 128], strides = [1, 1]} : vector<8x512xf32> to vector<8x128xf32>
    %cst_27 = arith.constant 5.000000e-01 : f32
    %60 = vector.broadcast %cst_27 : f32 to vector<8x128xf32>
    %61 = arith.mulf %60, %59 : vector<8x128xf32>
    %62 = math.tanh %61 : vector<8x128xf32>
    %cst_28 = arith.constant 5.000000e-01 : f32
    %63 = vector.broadcast %cst_28 : f32 to vector<8x128xf32>
    %64 = arith.mulf %63, %62 : vector<8x128xf32>
    %cst_29 = arith.constant 5.000000e-01 : f32
    %65 = vector.broadcast %cst_29 : f32 to vector<8x128xf32>
    %66 = arith.addf %64, %65 : vector<8x128xf32>
    %67 = vector.extract_strided_slice %58 {offsets = [0, 128], sizes = [8, 128], strides = [1, 1]} : vector<8x512xf32> to vector<8x128xf32>
    %cst_30 = arith.constant 5.000000e-01 : f32
    %68 = vector.broadcast %cst_30 : f32 to vector<8x128xf32>
    %69 = arith.mulf %68, %67 : vector<8x128xf32>
    %70 = math.tanh %69 : vector<8x128xf32>
    %cst_31 = arith.constant 5.000000e-01 : f32
    %71 = vector.broadcast %cst_31 : f32 to vector<8x128xf32>
    %72 = arith.mulf %71, %70 : vector<8x128xf32>
    %cst_32 = arith.constant 5.000000e-01 : f32
    %73 = vector.broadcast %cst_32 : f32 to vector<8x128xf32>
    %74 = arith.addf %72, %73 : vector<8x128xf32>
    %75 = vector.extract_strided_slice %58 {offsets = [0, 256], sizes = [8, 128], strides = [1, 1]} : vector<8x512xf32> to vector<8x128xf32>
    %76 = math.tanh %75 : vector<8x128xf32>
    %77 = vector.extract_strided_slice %58 {offsets = [0, 384], sizes = [8, 128], strides = [1, 1]} : vector<8x512xf32> to vector<8x128xf32>
    %cst_33 = arith.constant 5.000000e-01 : f32
    %78 = vector.broadcast %cst_33 : f32 to vector<8x128xf32>
    %79 = arith.mulf %78, %77 : vector<8x128xf32>
    %80 = math.tanh %79 : vector<8x128xf32>
    %cst_34 = arith.constant 5.000000e-01 : f32
    %81 = vector.broadcast %cst_34 : f32 to vector<8x128xf32>
    %82 = arith.mulf %81, %80 : vector<8x128xf32>
    %cst_35 = arith.constant 5.000000e-01 : f32
    %83 = vector.broadcast %cst_35 : f32 to vector<8x128xf32>
    %84 = arith.addf %82, %83 : vector<8x128xf32>
    %85 = arith.mulf %74, %51 : vector<8x128xf32>
    %86 = arith.mulf %66, %76 : vector<8x128xf32>
    %87 = arith.addf %85, %86 : vector<8x128xf32>
    %88 = math.tanh %87 : vector<8x128xf32>
    %89 = arith.mulf %84, %88 : vector<8x128xf32>
    %c16 = arith.constant 16 : index
    %c0_36 = arith.constant 0 : index
    %90 = vector.load %arg12[%c16, %c0_36] : memref<64x512xf32, #tpu.memory_space<vmem>>, vector<8x512xf32>
    %91 = arith.truncf %89 : vector<8x128xf32> to vector<8x128xbf16>
    %c0_37 = arith.constant 0 : index
    %c0_38 = arith.constant 0 : index
    %92 = vector.load %arg3[%c0_37, %c0_38] : memref<128x512xbf16, #tpu.memory_space<vmem>>, vector<128x512xbf16>
    %cst_39 = arith.constant dense<0.000000e+00> : vector<8x512xf32>
    %93 = tpu.matmul %91, %92, %cst_39 {dimension_numbers = #tpu.dot_dimension_numbers<[1], [0], [0], [1], [0, 0, 1, 1], [], []>} : vector<8x128xbf16>, vector<128x512xbf16>, vector<8x512xf32> -> vector<8x512xf32>
    %94 = arith.addf %90, %93 : vector<8x512xf32>
    %95 = vector.extract_strided_slice %94 {offsets = [0, 0], sizes = [8, 128], strides = [1, 1]} : vector<8x512xf32> to vector<8x128xf32>
    %cst_40 = arith.constant 5.000000e-01 : f32
    %96 = vector.broadcast %cst_40 : f32 to vector<8x128xf32>
    %97 = arith.mulf %96, %95 : vector<8x128xf32>
    %98 = math.tanh %97 : vector<8x128xf32>
    %cst_41 = arith.constant 5.000000e-01 : f32
    %99 = vector.broadcast %cst_41 : f32 to vector<8x128xf32>
    %100 = arith.mulf %99, %98 : vector<8x128xf32>
    %cst_42 = arith.constant 5.000000e-01 : f32
    %101 = vector.broadcast %cst_42 : f32 to vector<8x128xf32>
    %102 = arith.addf %100, %101 : vector<8x128xf32>
    %103 = vector.extract_strided_slice %94 {offsets = [0, 128], sizes = [8, 128], strides = [1, 1]} : vector<8x512xf32> to vector<8x128xf32>
    %cst_43 = arith.constant 5.000000e-01 : f32
    %104 = vector.broadcast %cst_43 : f32 to vector<8x128xf32>
    %105 = arith.mulf %104, %103 : vector<8x128xf32>
    %106 = math.tanh %105 : vector<8x128xf32>
    %cst_44 = arith.constant 5.000000e-01 : f32
    %107 = vector.broadcast %cst_44 : f32 to vector<8x128xf32>
    %108 = arith.mulf %107, %106 : vector<8x128xf32>
    %cst_45 = arith.constant 5.000000e-01 : f32
    %109 = vector.broadcast %cst_45 : f32 to vector<8x128xf32>
    %110 = arith.addf %108, %109 : vector<8x128xf32>
    %111 = vector.extract_strided_slice %94 {offsets = [0, 256], sizes = [8, 128], strides = [1, 1]} : vector<8x512xf32> to vector<8x128xf32>
    %112 = math.tanh %111 : vector<8x128xf32>
    %113 = vector.extract_strided_slice %94 {offsets = [0, 384], sizes = [8, 128], strides = [1, 1]} : vector<8x512xf32> to vector<8x128xf32>
    %cst_46 = arith.constant 5.000000e-01 : f32
    %114 = vector.broadcast %cst_46 : f32 to vector<8x128xf32>
    %115 = arith.mulf %114, %113 : vector<8x128xf32>
    %116 = math.tanh %115 : vector<8x128xf32>
    %cst_47 = arith.constant 5.000000e-01 : f32
    %117 = vector.broadcast %cst_47 : f32 to vector<8x128xf32>
    %118 = arith.mulf %117, %116 : vector<8x128xf32>
    %cst_48 = arith.constant 5.000000e-01 : f32
    %119 = vector.broadcast %cst_48 : f32 to vector<8x128xf32>
    %120 = arith.addf %118, %119 : vector<8x128xf32>
    %121 = arith.mulf %110, %87 : vector<8x128xf32>
    %122 = arith.mulf %102, %112 : vector<8x128xf32>
    %123 = arith.addf %121, %122 : vector<8x128xf32>
    %124 = math.tanh %123 : vector<8x128xf32>
    %125 = arith.mulf %120, %124 : vector<8x128xf32>
    %c24 = arith.constant 24 : index
    %c0_49 = arith.constant 0 : index
    %126 = vector.load %arg12[%c24, %c0_49] : memref<64x512xf32, #tpu.memory_space<vmem>>, vector<8x512xf32>
    %127 = arith.truncf %125 : vector<8x128xf32> to vector<8x128xbf16>
    %c0_50 = arith.constant 0 : index
    %c0_51 = arith.constant 0 : index
    %128 = vector.load %arg3[%c0_50, %c0_51] : memref<128x512xbf16, #tpu.memory_space<vmem>>, vector<128x512xbf16>
    %cst_52 = arith.constant dense<0.000000e+00> : vector<8x512xf32>
    %129 = tpu.matmul %127, %128, %cst_52 {dimension_numbers = #tpu.dot_dimension_numbers<[1], [0], [0], [1], [0, 0, 1, 1], [], []>} : vector<8x128xbf16>, vector<128x512xbf16>, vector<8x512xf32> -> vector<8x512xf32>
    %130 = arith.addf %126, %129 : vector<8x512xf32>
    %131 = vector.extract_strided_slice %130 {offsets = [0, 0], sizes = [8, 128], strides = [1, 1]} : vector<8x512xf32> to vector<8x128xf32>
    %cst_53 = arith.constant 5.000000e-01 : f32
    %132 = vector.broadcast %cst_53 : f32 to vector<8x128xf32>
    %133 = arith.mulf %132, %131 : vector<8x128xf32>
    %134 = math.tanh %133 : vector<8x128xf32>
    %cst_54 = arith.constant 5.000000e-01 : f32
    %135 = vector.broadcast %cst_54 : f32 to vector<8x128xf32>
    %136 = arith.mulf %135, %134 : vector<8x128xf32>
    %cst_55 = arith.constant 5.000000e-01 : f32
    %137 = vector.broadcast %cst_55 : f32 to vector<8x128xf32>
    %138 = arith.addf %136, %137 : vector<8x128xf32>
    %139 = vector.extract_strided_slice %130 {offsets = [0, 128], sizes = [8, 128], strides = [1, 1]} : vector<8x512xf32> to vector<8x128xf32>
    %cst_56 = arith.constant 5.000000e-01 : f32
    %140 = vector.broadcast %cst_56 : f32 to vector<8x128xf32>
    %141 = arith.mulf %140, %139 : vector<8x128xf32>
    %142 = math.tanh %141 : vector<8x128xf32>
    %cst_57 = arith.constant 5.000000e-01 : f32
    %143 = vector.broadcast %cst_57 : f32 to vector<8x128xf32>
    %144 = arith.mulf %143, %142 : vector<8x128xf32>
    %cst_58 = arith.constant 5.000000e-01 : f32
    %145 = vector.broadcast %cst_58 : f32 to vector<8x128xf32>
    %146 = arith.addf %144, %145 : vector<8x128xf32>
    %147 = vector.extract_strided_slice %130 {offsets = [0, 256], sizes = [8, 128], strides = [1, 1]} : vector<8x512xf32> to vector<8x128xf32>
    %148 = math.tanh %147 : vector<8x128xf32>
    %149 = vector.extract_strided_slice %130 {offsets = [0, 384], sizes = [8, 128], strides = [1, 1]} : vector<8x512xf32> to vector<8x128xf32>
    %cst_59 = arith.constant 5.000000e-01 : f32
    %150 = vector.broadcast %cst_59 : f32 to vector<8x128xf32>
    %151 = arith.mulf %150, %149 : vector<8x128xf32>
    %152 = math.tanh %151 : vector<8x128xf32>
    %cst_60 = arith.constant 5.000000e-01 : f32
    %153 = vector.broadcast %cst_60 : f32 to vector<8x128xf32>
    %154 = arith.mulf %153, %152 : vector<8x128xf32>
    %cst_61 = arith.constant 5.000000e-01 : f32
    %155 = vector.broadcast %cst_61 : f32 to vector<8x128xf32>
    %156 = arith.addf %154, %155 : vector<8x128xf32>
    %157 = arith.mulf %146, %123 : vector<8x128xf32>
    %158 = arith.mulf %138, %148 : vector<8x128xf32>
    %159 = arith.addf %157, %158 : vector<8x128xf32>
    %160 = math.tanh %159 : vector<8x128xf32>
    %161 = arith.mulf %156, %160 : vector<8x128xf32>
    %c32 = arith.constant 32 : index
    %c0_62 = arith.constant 0 : index
    %162 = vector.load %arg12[%c32, %c0_62] : memref<64x512xf32, #tpu.memory_space<vmem>>, vector<8x512xf32>
    %163 = arith.truncf %161 : vector<8x128xf32> to vector<8x128xbf16>
    %c0_63 = arith.constant 0 : index
    %c0_64 = arith.constant 0 : index
    %164 = vector.load %arg3[%c0_63, %c0_64] : memref<128x512xbf16, #tpu.memory_space<vmem>>, vector<128x512xbf16>
    %cst_65 = arith.constant dense<0.000000e+00> : vector<8x512xf32>
    %165 = tpu.matmul %163, %164, %cst_65 {dimension_numbers = #tpu.dot_dimension_numbers<[1], [0], [0], [1], [0, 0, 1, 1], [], []>} : vector<8x128xbf16>, vector<128x512xbf16>, vector<8x512xf32> -> vector<8x512xf32>
    %166 = arith.addf %162, %165 : vector<8x512xf32>
    %167 = vector.extract_strided_slice %166 {offsets = [0, 0], sizes = [8, 128], strides = [1, 1]} : vector<8x512xf32> to vector<8x128xf32>
    %cst_66 = arith.constant 5.000000e-01 : f32
    %168 = vector.broadcast %cst_66 : f32 to vector<8x128xf32>
    %169 = arith.mulf %168, %167 : vector<8x128xf32>
    %170 = math.tanh %169 : vector<8x128xf32>
    %cst_67 = arith.constant 5.000000e-01 : f32
    %171 = vector.broadcast %cst_67 : f32 to vector<8x128xf32>
    %172 = arith.mulf %171, %170 : vector<8x128xf32>
    %cst_68 = arith.constant 5.000000e-01 : f32
    %173 = vector.broadcast %cst_68 : f32 to vector<8x128xf32>
    %174 = arith.addf %172, %173 : vector<8x128xf32>
    %175 = vector.extract_strided_slice %166 {offsets = [0, 128], sizes = [8, 128], strides = [1, 1]} : vector<8x512xf32> to vector<8x128xf32>
    %cst_69 = arith.constant 5.000000e-01 : f32
    %176 = vector.broadcast %cst_69 : f32 to vector<8x128xf32>
    %177 = arith.mulf %176, %175 : vector<8x128xf32>
    %178 = math.tanh %177 : vector<8x128xf32>
    %cst_70 = arith.constant 5.000000e-01 : f32
    %179 = vector.broadcast %cst_70 : f32 to vector<8x128xf32>
    %180 = arith.mulf %179, %178 : vector<8x128xf32>
    %cst_71 = arith.constant 5.000000e-01 : f32
    %181 = vector.broadcast %cst_71 : f32 to vector<8x128xf32>
    %182 = arith.addf %180, %181 : vector<8x128xf32>
    %183 = vector.extract_strided_slice %166 {offsets = [0, 256], sizes = [8, 128], strides = [1, 1]} : vector<8x512xf32> to vector<8x128xf32>
    %184 = math.tanh %183 : vector<8x128xf32>
    %185 = vector.extract_strided_slice %166 {offsets = [0, 384], sizes = [8, 128], strides = [1, 1]} : vector<8x512xf32> to vector<8x128xf32>
    %cst_72 = arith.constant 5.000000e-01 : f32
    %186 = vector.broadcast %cst_72 : f32 to vector<8x128xf32>
    %187 = arith.mulf %186, %185 : vector<8x128xf32>
    %188 = math.tanh %187 : vector<8x128xf32>
    %cst_73 = arith.constant 5.000000e-01 : f32
    %189 = vector.broadcast %cst_73 : f32 to vector<8x128xf32>
    %190 = arith.mulf %189, %188 : vector<8x128xf32>
    %cst_74 = arith.constant 5.000000e-01 : f32
    %191 = vector.broadcast %cst_74 : f32 to vector<8x128xf32>
    %192 = arith.addf %190, %191 : vector<8x128xf32>
    %193 = arith.mulf %182, %159 : vector<8x128xf32>
    %194 = arith.mulf %174, %184 : vector<8x128xf32>
    %195 = arith.addf %193, %194 : vector<8x128xf32>
    %196 = math.tanh %195 : vector<8x128xf32>
    %197 = arith.mulf %192, %196 : vector<8x128xf32>
    %c40 = arith.constant 40 : index
    %c0_75 = arith.constant 0 : index
    %198 = vector.load %arg12[%c40, %c0_75] : memref<64x512xf32, #tpu.memory_space<vmem>>, vector<8x512xf32>
    %199 = arith.truncf %197 : vector<8x128xf32> to vector<8x128xbf16>
    %c0_76 = arith.constant 0 : index
    %c0_77 = arith.constant 0 : index
    %200 = vector.load %arg3[%c0_76, %c0_77] : memref<128x512xbf16, #tpu.memory_space<vmem>>, vector<128x512xbf16>
    %cst_78 = arith.constant dense<0.000000e+00> : vector<8x512xf32>
    %201 = tpu.matmul %199, %200, %cst_78 {dimension_numbers = #tpu.dot_dimension_numbers<[1], [0], [0], [1], [0, 0, 1, 1], [], []>} : vector<8x128xbf16>, vector<128x512xbf16>, vector<8x512xf32> -> vector<8x512xf32>
    %202 = arith.addf %198, %201 : vector<8x512xf32>
    %203 = vector.extract_strided_slice %202 {offsets = [0, 0], sizes = [8, 128], strides = [1, 1]} : vector<8x512xf32> to vector<8x128xf32>
    %cst_79 = arith.constant 5.000000e-01 : f32
    %204 = vector.broadcast %cst_79 : f32 to vector<8x128xf32>
    %205 = arith.mulf %204, %203 : vector<8x128xf32>
    %206 = math.tanh %205 : vector<8x128xf32>
    %cst_80 = arith.constant 5.000000e-01 : f32
    %207 = vector.broadcast %cst_80 : f32 to vector<8x128xf32>
    %208 = arith.mulf %207, %206 : vector<8x128xf32>
    %cst_81 = arith.constant 5.000000e-01 : f32
    %209 = vector.broadcast %cst_81 : f32 to vector<8x128xf32>
    %210 = arith.addf %208, %209 : vector<8x128xf32>
    %211 = vector.extract_strided_slice %202 {offsets = [0, 128], sizes = [8, 128], strides = [1, 1]} : vector<8x512xf32> to vector<8x128xf32>
    %cst_82 = arith.constant 5.000000e-01 : f32
    %212 = vector.broadcast %cst_82 : f32 to vector<8x128xf32>
    %213 = arith.mulf %212, %211 : vector<8x128xf32>
    %214 = math.tanh %213 : vector<8x128xf32>
    %cst_83 = arith.constant 5.000000e-01 : f32
    %215 = vector.broadcast %cst_83 : f32 to vector<8x128xf32>
    %216 = arith.mulf %215, %214 : vector<8x128xf32>
    %cst_84 = arith.constant 5.000000e-01 : f32
    %217 = vector.broadcast %cst_84 : f32 to vector<8x128xf32>
    %218 = arith.addf %216, %217 : vector<8x128xf32>
    %219 = vector.extract_strided_slice %202 {offsets = [0, 256], sizes = [8, 128], strides = [1, 1]} : vector<8x512xf32> to vector<8x128xf32>
    %220 = math.tanh %219 : vector<8x128xf32>
    %221 = vector.extract_strided_slice %202 {offsets = [0, 384], sizes = [8, 128], strides = [1, 1]} : vector<8x512xf32> to vector<8x128xf32>
    %cst_85 = arith.constant 5.000000e-01 : f32
    %222 = vector.broadcast %cst_85 : f32 to vector<8x128xf32>
    %223 = arith.mulf %222, %221 : vector<8x128xf32>
    %224 = math.tanh %223 : vector<8x128xf32>
    %cst_86 = arith.constant 5.000000e-01 : f32
    %225 = vector.broadcast %cst_86 : f32 to vector<8x128xf32>
    %226 = arith.mulf %225, %224 : vector<8x128xf32>
    %cst_87 = arith.constant 5.000000e-01 : f32
    %227 = vector.broadcast %cst_87 : f32 to vector<8x128xf32>
    %228 = arith.addf %226, %227 : vector<8x128xf32>
    %229 = arith.mulf %218, %195 : vector<8x128xf32>
    %230 = arith.mulf %210, %220 : vector<8x128xf32>
    %231 = arith.addf %229, %230 : vector<8x128xf32>
    %232 = math.tanh %231 : vector<8x128xf32>
    %233 = arith.mulf %228, %232 : vector<8x128xf32>
    %c48 = arith.constant 48 : index
    %c0_88 = arith.constant 0 : index
    %234 = vector.load %arg12[%c48, %c0_88] : memref<64x512xf32, #tpu.memory_space<vmem>>, vector<8x512xf32>
    %235 = arith.truncf %233 : vector<8x128xf32> to vector<8x128xbf16>
    %c0_89 = arith.constant 0 : index
    %c0_90 = arith.constant 0 : index
    %236 = vector.load %arg3[%c0_89, %c0_90] : memref<128x512xbf16, #tpu.memory_space<vmem>>, vector<128x512xbf16>
    %cst_91 = arith.constant dense<0.000000e+00> : vector<8x512xf32>
    %237 = tpu.matmul %235, %236, %cst_91 {dimension_numbers = #tpu.dot_dimension_numbers<[1], [0], [0], [1], [0, 0, 1, 1], [], []>} : vector<8x128xbf16>, vector<128x512xbf16>, vector<8x512xf32> -> vector<8x512xf32>
    %238 = arith.addf %234, %237 : vector<8x512xf32>
    %239 = vector.extract_strided_slice %238 {offsets = [0, 0], sizes = [8, 128], strides = [1, 1]} : vector<8x512xf32> to vector<8x128xf32>
    %cst_92 = arith.constant 5.000000e-01 : f32
    %240 = vector.broadcast %cst_92 : f32 to vector<8x128xf32>
    %241 = arith.mulf %240, %239 : vector<8x128xf32>
    %242 = math.tanh %241 : vector<8x128xf32>
    %cst_93 = arith.constant 5.000000e-01 : f32
    %243 = vector.broadcast %cst_93 : f32 to vector<8x128xf32>
    %244 = arith.mulf %243, %242 : vector<8x128xf32>
    %cst_94 = arith.constant 5.000000e-01 : f32
    %245 = vector.broadcast %cst_94 : f32 to vector<8x128xf32>
    %246 = arith.addf %244, %245 : vector<8x128xf32>
    %247 = vector.extract_strided_slice %238 {offsets = [0, 128], sizes = [8, 128], strides = [1, 1]} : vector<8x512xf32> to vector<8x128xf32>
    %cst_95 = arith.constant 5.000000e-01 : f32
    %248 = vector.broadcast %cst_95 : f32 to vector<8x128xf32>
    %249 = arith.mulf %248, %247 : vector<8x128xf32>
    %250 = math.tanh %249 : vector<8x128xf32>
    %cst_96 = arith.constant 5.000000e-01 : f32
    %251 = vector.broadcast %cst_96 : f32 to vector<8x128xf32>
    %252 = arith.mulf %251, %250 : vector<8x128xf32>
    %cst_97 = arith.constant 5.000000e-01 : f32
    %253 = vector.broadcast %cst_97 : f32 to vector<8x128xf32>
    %254 = arith.addf %252, %253 : vector<8x128xf32>
    %255 = vector.extract_strided_slice %238 {offsets = [0, 256], sizes = [8, 128], strides = [1, 1]} : vector<8x512xf32> to vector<8x128xf32>
    %256 = math.tanh %255 : vector<8x128xf32>
    %257 = vector.extract_strided_slice %238 {offsets = [0, 384], sizes = [8, 128], strides = [1, 1]} : vector<8x512xf32> to vector<8x128xf32>
    %cst_98 = arith.constant 5.000000e-01 : f32
    %258 = vector.broadcast %cst_98 : f32 to vector<8x128xf32>
    %259 = arith.mulf %258, %257 : vector<8x128xf32>
    %260 = math.tanh %259 : vector<8x128xf32>
    %cst_99 = arith.constant 5.000000e-01 : f32
    %261 = vector.broadcast %cst_99 : f32 to vector<8x128xf32>
    %262 = arith.mulf %261, %260 : vector<8x128xf32>
    %cst_100 = arith.constant 5.000000e-01 : f32
    %263 = vector.broadcast %cst_100 : f32 to vector<8x128xf32>
    %264 = arith.addf %262, %263 : vector<8x128xf32>
    %265 = arith.mulf %254, %231 : vector<8x128xf32>
    %266 = arith.mulf %246, %256 : vector<8x128xf32>
    %267 = arith.addf %265, %266 : vector<8x128xf32>
    %268 = math.tanh %267 : vector<8x128xf32>
    %269 = arith.mulf %264, %268 : vector<8x128xf32>
    %c56 = arith.constant 56 : index
    %c0_101 = arith.constant 0 : index
    %270 = vector.load %arg12[%c56, %c0_101] : memref<64x512xf32, #tpu.memory_space<vmem>>, vector<8x512xf32>
    %271 = arith.truncf %269 : vector<8x128xf32> to vector<8x128xbf16>
    %c0_102 = arith.constant 0 : index
    %c0_103 = arith.constant 0 : index
    %272 = vector.load %arg3[%c0_102, %c0_103] : memref<128x512xbf16, #tpu.memory_space<vmem>>, vector<128x512xbf16>
    %cst_104 = arith.constant dense<0.000000e+00> : vector<8x512xf32>
    %273 = tpu.matmul %271, %272, %cst_104 {dimension_numbers = #tpu.dot_dimension_numbers<[1], [0], [0], [1], [0, 0, 1, 1], [], []>} : vector<8x128xbf16>, vector<128x512xbf16>, vector<8x512xf32> -> vector<8x512xf32>
    %274 = arith.addf %270, %273 : vector<8x512xf32>
    %275 = vector.extract_strided_slice %274 {offsets = [0, 0], sizes = [8, 128], strides = [1, 1]} : vector<8x512xf32> to vector<8x128xf32>
    %cst_105 = arith.constant 5.000000e-01 : f32
    %276 = vector.broadcast %cst_105 : f32 to vector<8x128xf32>
    %277 = arith.mulf %276, %275 : vector<8x128xf32>
    %278 = math.tanh %277 : vector<8x128xf32>
    %cst_106 = arith.constant 5.000000e-01 : f32
    %279 = vector.broadcast %cst_106 : f32 to vector<8x128xf32>
    %280 = arith.mulf %279, %278 : vector<8x128xf32>
    %cst_107 = arith.constant 5.000000e-01 : f32
    %281 = vector.broadcast %cst_107 : f32 to vector<8x128xf32>
    %282 = arith.addf %280, %281 : vector<8x128xf32>
    %283 = vector.extract_strided_slice %274 {offsets = [0, 128], sizes = [8, 128], strides = [1, 1]} : vector<8x512xf32> to vector<8x128xf32>
    %cst_108 = arith.constant 5.000000e-01 : f32
    %284 = vector.broadcast %cst_108 : f32 to vector<8x128xf32>
    %285 = arith.mulf %284, %283 : vector<8x128xf32>
    %286 = math.tanh %285 : vector<8x128xf32>
    %cst_109 = arith.constant 5.000000e-01 : f32
    %287 = vector.broadcast %cst_109 : f32 to vector<8x128xf32>
    %288 = arith.mulf %287, %286 : vector<8x128xf32>
    %cst_110 = arith.constant 5.000000e-01 : f32
    %289 = vector.broadcast %cst_110 : f32 to vector<8x128xf32>
    %290 = arith.addf %288, %289 : vector<8x128xf32>
    %291 = vector.extract_strided_slice %274 {offsets = [0, 256], sizes = [8, 128], strides = [1, 1]} : vector<8x512xf32> to vector<8x128xf32>
    %292 = math.tanh %291 : vector<8x128xf32>
    %293 = vector.extract_strided_slice %274 {offsets = [0, 384], sizes = [8, 128], strides = [1, 1]} : vector<8x512xf32> to vector<8x128xf32>
    %cst_111 = arith.constant 5.000000e-01 : f32
    %294 = vector.broadcast %cst_111 : f32 to vector<8x128xf32>
    %295 = arith.mulf %294, %293 : vector<8x128xf32>
    %296 = math.tanh %295 : vector<8x128xf32>
    %cst_112 = arith.constant 5.000000e-01 : f32
    %297 = vector.broadcast %cst_112 : f32 to vector<8x128xf32>
    %298 = arith.mulf %297, %296 : vector<8x128xf32>
    %cst_113 = arith.constant 5.000000e-01 : f32
    %299 = vector.broadcast %cst_113 : f32 to vector<8x128xf32>
    %300 = arith.addf %298, %299 : vector<8x128xf32>
    %301 = arith.mulf %290, %267 : vector<8x128xf32>
    %302 = arith.mulf %282, %292 : vector<8x128xf32>
    %303 = arith.addf %301, %302 : vector<8x128xf32>
    %304 = math.tanh %303 : vector<8x128xf32>
    %305 = arith.mulf %300, %304 : vector<8x128xf32>
    %c0_i32_114 = arith.constant 0 : i32
    %306 = tpu.memref_slice %arg19[%c0_i32_114] : memref<4x!tpu.dma_semaphore, #tpu.memory_space<semaphore_mem>> -> memref<1x!tpu.dma_semaphore, #tpu.memory_space<semaphore_mem>>
    %307 = tpu.memref_squeeze %306 : memref<1x!tpu.dma_semaphore, #tpu.memory_space<semaphore_mem>> -> memref<!tpu.dma_semaphore, #tpu.memory_space<semaphore_mem>>
    tpu.wait_dma2 semaphore(%307 : memref<!tpu.dma_semaphore, #tpu.memory_space<semaphore_mem>>) src(%arg7 : memref<128x512xbf16, #tpu.memory_space<any>>) dst(%arg15 : memref<128x512xbf16, #tpu.memory_space<vmem>>)
    %c1_i32_115 = arith.constant 1 : i32
    %308 = tpu.memref_slice %arg19[%c1_i32_115] : memref<4x!tpu.dma_semaphore, #tpu.memory_space<semaphore_mem>> -> memref<1x!tpu.dma_semaphore, #tpu.memory_space<semaphore_mem>>
    %309 = tpu.memref_squeeze %308 : memref<1x!tpu.dma_semaphore, #tpu.memory_space<semaphore_mem>> -> memref<!tpu.dma_semaphore, #tpu.memory_space<semaphore_mem>>
    tpu.wait_dma2 semaphore(%309 : memref<!tpu.dma_semaphore, #tpu.memory_space<semaphore_mem>>) src(%arg8 : memref<128x512xbf16, #tpu.memory_space<any>>) dst(%arg16 : memref<128x512xbf16, #tpu.memory_space<vmem>>)
    %c0_116 = arith.constant 0 : index
    %c0_117 = arith.constant 0 : index
    %310 = vector.load %arg1[%c0_116, %c0_117] : memref<32x128xf32, #tpu.memory_space<vmem>>, vector<8x128xf32>
    %311 = arith.truncf %310 : vector<8x128xf32> to vector<8x128xbf16>
    %c0_118 = arith.constant 0 : index
    %c0_119 = arith.constant 0 : index
    %312 = vector.load %arg15[%c0_118, %c0_119] : memref<128x512xbf16, #tpu.memory_space<vmem>>, vector<128x512xbf16>
    %cst_120 = arith.constant dense<0.000000e+00> : vector<8x512xf32>
    %313 = tpu.matmul %311, %312, %cst_120 {dimension_numbers = #tpu.dot_dimension_numbers<[1], [0], [0], [1], [0, 0, 1, 1], [], []>} : vector<8x128xbf16>, vector<128x512xbf16>, vector<8x512xf32> -> vector<8x512xf32>
    %c0_121 = arith.constant 0 : index
    %c0_122 = arith.constant 0 : index
    %314 = vector.load %arg5[%c0_121, %c0_122] : memref<1x512xf32, #tpu.memory_space<vmem>>, vector<1x512xf32>
    %315 = vector.broadcast %314 : vector<1x512xf32> to vector<8x512xf32>
    %316 = arith.addf %313, %315 : vector<8x512xf32>
    %c0_123 = arith.constant 0 : index
    %c0_124 = arith.constant 0 : index
    %317 = vector.load %arg13[%c0_123, %c0_124] : memref<32x512xf32, #tpu.memory_space<vmem>>, vector<8x512xf32>
    tpu.vector_store %arg13[%c0_123, %c0_124], %316 {strides = array<i32>} : memref<32x512xf32, #tpu.memory_space<vmem>>, vector<8x512xf32>,
    %c8_125 = arith.constant 8 : index
    %c0_126 = arith.constant 0 : index
    %318 = vector.load %arg1[%c8_125, %c0_126] : memref<32x128xf32, #tpu.memory_space<vmem>>, vector<24x128xf32>
    %319 = arith.truncf %318 : vector<24x128xf32> to vector<24x128xbf16>
    %c0_127 = arith.constant 0 : index
    %c0_128 = arith.constant 0 : index
    %320 = vector.load %arg16[%c0_127, %c0_128] : memref<128x512xbf16, #tpu.memory_space<vmem>>, vector<128x512xbf16>
    %cst_129 = arith.constant dense<0.000000e+00> : vector<24x512xf32>
    %321 = tpu.matmul %319, %320, %cst_129 {dimension_numbers = #tpu.dot_dimension_numbers<[1], [0], [0], [1], [0, 0, 1, 1], [], []>} : vector<24x128xbf16>, vector<128x512xbf16>, vector<24x512xf32> -> vector<24x512xf32>
    %c0_130 = arith.constant 0 : index
    %c0_131 = arith.constant 0 : index
    %322 = vector.load %arg5[%c0_130, %c0_131] : memref<1x512xf32, #tpu.memory_space<vmem>>, vector<1x512xf32>
    %323 = vector.broadcast %322 : vector<1x512xf32> to vector<24x512xf32>
    %324 = arith.addf %321, %323 : vector<24x512xf32>
    %c8_132 = arith.constant 8 : index
    %c0_133 = arith.constant 0 : index
    %325 = vector.load %arg13[%c8_132, %c0_133] : memref<32x512xf32, #tpu.memory_space<vmem>>, vector<24x512xf32>
    tpu.vector_store %arg13[%c8_132, %c0_133], %324 {strides = array<i32>} : memref<32x512xf32, #tpu.memory_space<vmem>>, vector<24x512xf32>,
    %c2_i32_134 = arith.constant 2 : i32
    %326 = tpu.memref_slice %arg19[%c2_i32_134] : memref<4x!tpu.dma_semaphore, #tpu.memory_space<semaphore_mem>> -> memref<1x!tpu.dma_semaphore, #tpu.memory_space<semaphore_mem>>
    %327 = tpu.memref_squeeze %326 : memref<1x!tpu.dma_semaphore, #tpu.memory_space<semaphore_mem>> -> memref<!tpu.dma_semaphore, #tpu.memory_space<semaphore_mem>>
    tpu.wait_dma2 semaphore(%327 : memref<!tpu.dma_semaphore, #tpu.memory_space<semaphore_mem>>) src(%arg9 : memref<128x512xbf16, #tpu.memory_space<any>>) dst(%arg17 : memref<128x512xbf16, #tpu.memory_space<vmem>>)
    %c0_135 = arith.constant 0 : index
    %c0_136 = arith.constant 0 : index
    %328 = vector.load %arg13[%c0_135, %c0_136] : memref<32x512xf32, #tpu.memory_space<vmem>>, vector<8x512xf32>
    %329 = arith.truncf %305 : vector<8x128xf32> to vector<8x128xbf16>
    %c0_137 = arith.constant 0 : index
    %c0_138 = arith.constant 0 : index
    %330 = vector.load %arg17[%c0_137, %c0_138] : memref<128x512xbf16, #tpu.memory_space<vmem>>, vector<128x512xbf16>
    %cst_139 = arith.constant dense<0.000000e+00> : vector<8x512xf32>
    %331 = tpu.matmul %329, %330, %cst_139 {dimension_numbers = #tpu.dot_dimension_numbers<[1], [0], [0], [1], [0, 0, 1, 1], [], []>} : vector<8x128xbf16>, vector<128x512xbf16>, vector<8x512xf32> -> vector<8x512xf32>
    %332 = arith.addf %328, %331 : vector<8x512xf32>
    %333 = vector.extract_strided_slice %332 {offsets = [0, 0], sizes = [8, 128], strides = [1, 1]} : vector<8x512xf32> to vector<8x128xf32>
    %cst_140 = arith.constant 5.000000e-01 : f32
    %334 = vector.broadcast %cst_140 : f32 to vector<8x128xf32>
    %335 = arith.mulf %334, %333 : vector<8x128xf32>
    %336 = math.tanh %335 : vector<8x128xf32>
    %cst_141 = arith.constant 5.000000e-01 : f32
    %337 = vector.broadcast %cst_141 : f32 to vector<8x128xf32>
    %338 = arith.mulf %337, %336 : vector<8x128xf32>
    %cst_142 = arith.constant 5.000000e-01 : f32
    %339 = vector.broadcast %cst_142 : f32 to vector<8x128xf32>
    %340 = arith.addf %338, %339 : vector<8x128xf32>
    %341 = vector.extract_strided_slice %332 {offsets = [0, 128], sizes = [8, 128], strides = [1, 1]} : vector<8x512xf32> to vector<8x128xf32>
    %cst_143 = arith.constant 5.000000e-01 : f32
    %342 = vector.broadcast %cst_143 : f32 to vector<8x128xf32>
    %343 = arith.mulf %342, %341 : vector<8x128xf32>
    %344 = math.tanh %343 : vector<8x128xf32>
    %cst_144 = arith.constant 5.000000e-01 : f32
    %345 = vector.broadcast %cst_144 : f32 to vector<8x128xf32>
    %346 = arith.mulf %345, %344 : vector<8x128xf32>
    %cst_145 = arith.constant 5.000000e-01 : f32
    %347 = vector.broadcast %cst_145 : f32 to vector<8x128xf32>
    %348 = arith.addf %346, %347 : vector<8x128xf32>
    %349 = vector.extract_strided_slice %332 {offsets = [0, 256], sizes = [8, 128], strides = [1, 1]} : vector<8x512xf32> to vector<8x128xf32>
    %350 = math.tanh %349 : vector<8x128xf32>
    %351 = vector.extract_strided_slice %332 {offsets = [0, 384], sizes = [8, 128], strides = [1, 1]} : vector<8x512xf32> to vector<8x128xf32>
    %cst_146 = arith.constant 5.000000e-01 : f32
    %352 = vector.broadcast %cst_146 : f32 to vector<8x128xf32>
    %353 = arith.mulf %352, %351 : vector<8x128xf32>
    %354 = math.tanh %353 : vector<8x128xf32>
    %cst_147 = arith.constant 5.000000e-01 : f32
    %355 = vector.broadcast %cst_147 : f32 to vector<8x128xf32>
    %356 = arith.mulf %355, %354 : vector<8x128xf32>
    %cst_148 = arith.constant 5.000000e-01 : f32
    %357 = vector.broadcast %cst_148 : f32 to vector<8x128xf32>
    %358 = arith.addf %356, %357 : vector<8x128xf32>
    %359 = arith.mulf %348, %303 : vector<8x128xf32>
    %360 = arith.mulf %340, %350 : vector<8x128xf32>
    %361 = arith.addf %359, %360 : vector<8x128xf32>
    %362 = math.tanh %361 : vector<8x128xf32>
    %363 = arith.mulf %358, %362 : vector<8x128xf32>
    %cst_149 = arith.constant 0.000000e+00 : f32
    %364 = vector.broadcast %cst_149 : f32 to vector<8x128xf32>
    %365 = arith.maximumf %363, %364 : vector<8x128xf32>
    %c0_150 = arith.constant 0 : index
    %c0_151 = arith.constant 0 : index
    %366 = vector.load %arg14[%c0_150, %c0_151] : memref<32x128xf32, #tpu.memory_space<vmem>>, vector<8x128xf32>
    tpu.vector_store %arg14[%c0_150, %c0_151], %365 {strides = array<i32>} : memref<32x128xf32, #tpu.memory_space<vmem>>, vector<8x128xf32>,
    %c8_152 = arith.constant 8 : index
    %c0_153 = arith.constant 0 : index
    %367 = vector.load %arg13[%c8_152, %c0_153] : memref<32x512xf32, #tpu.memory_space<vmem>>, vector<8x512xf32>
    %368 = arith.truncf %363 : vector<8x128xf32> to vector<8x128xbf16>
    %c0_154 = arith.constant 0 : index
    %c0_155 = arith.constant 0 : index
    %369 = vector.load %arg17[%c0_154, %c0_155] : memref<128x512xbf16, #tpu.memory_space<vmem>>, vector<128x512xbf16>
    %cst_156 = arith.constant dense<0.000000e+00> : vector<8x512xf32>
    %370 = tpu.matmul %368, %369, %cst_156 {dimension_numbers = #tpu.dot_dimension_numbers<[1], [0], [0], [1], [0, 0, 1, 1], [], []>} : vector<8x128xbf16>, vector<128x512xbf16>, vector<8x512xf32> -> vector<8x512xf32>
    %371 = arith.addf %367, %370 : vector<8x512xf32>
    %372 = vector.extract_strided_slice %371 {offsets = [0, 0], sizes = [8, 128], strides = [1, 1]} : vector<8x512xf32> to vector<8x128xf32>
    %cst_157 = arith.constant 5.000000e-01 : f32
    %373 = vector.broadcast %cst_157 : f32 to vector<8x128xf32>
    %374 = arith.mulf %373, %372 : vector<8x128xf32>
    %375 = math.tanh %374 : vector<8x128xf32>
    %cst_158 = arith.constant 5.000000e-01 : f32
    %376 = vector.broadcast %cst_158 : f32 to vector<8x128xf32>
    %377 = arith.mulf %376, %375 : vector<8x128xf32>
    %cst_159 = arith.constant 5.000000e-01 : f32
    %378 = vector.broadcast %cst_159 : f32 to vector<8x128xf32>
    %379 = arith.addf %377, %378 : vector<8x128xf32>
    %380 = vector.extract_strided_slice %371 {offsets = [0, 128], sizes = [8, 128], strides = [1, 1]} : vector<8x512xf32> to vector<8x128xf32>
    %cst_160 = arith.constant 5.000000e-01 : f32
    %381 = vector.broadcast %cst_160 : f32 to vector<8x128xf32>
    %382 = arith.mulf %381, %380 : vector<8x128xf32>
    %383 = math.tanh %382 : vector<8x128xf32>
    %cst_161 = arith.constant 5.000000e-01 : f32
    %384 = vector.broadcast %cst_161 : f32 to vector<8x128xf32>
    %385 = arith.mulf %384, %383 : vector<8x128xf32>
    %cst_162 = arith.constant 5.000000e-01 : f32
    %386 = vector.broadcast %cst_162 : f32 to vector<8x128xf32>
    %387 = arith.addf %385, %386 : vector<8x128xf32>
    %388 = vector.extract_strided_slice %371 {offsets = [0, 256], sizes = [8, 128], strides = [1, 1]} : vector<8x512xf32> to vector<8x128xf32>
    %389 = math.tanh %388 : vector<8x128xf32>
    %390 = vector.extract_strided_slice %371 {offsets = [0, 384], sizes = [8, 128], strides = [1, 1]} : vector<8x512xf32> to vector<8x128xf32>
    %cst_163 = arith.constant 5.000000e-01 : f32
    %391 = vector.broadcast %cst_163 : f32 to vector<8x128xf32>
    %392 = arith.mulf %391, %390 : vector<8x128xf32>
    %393 = math.tanh %392 : vector<8x128xf32>
    %cst_164 = arith.constant 5.000000e-01 : f32
    %394 = vector.broadcast %cst_164 : f32 to vector<8x128xf32>
    %395 = arith.mulf %394, %393 : vector<8x128xf32>
    %cst_165 = arith.constant 5.000000e-01 : f32
    %396 = vector.broadcast %cst_165 : f32 to vector<8x128xf32>
    %397 = arith.addf %395, %396 : vector<8x128xf32>
    %398 = arith.mulf %387, %361 : vector<8x128xf32>
    %399 = arith.mulf %379, %389 : vector<8x128xf32>
    %400 = arith.addf %398, %399 : vector<8x128xf32>
    %401 = math.tanh %400 : vector<8x128xf32>
    %402 = arith.mulf %397, %401 : vector<8x128xf32>
    %cst_166 = arith.constant 0.000000e+00 : f32
    %403 = vector.broadcast %cst_166 : f32 to vector<8x128xf32>
    %404 = arith.maximumf %402, %403 : vector<8x128xf32>
    %c8_167 = arith.constant 8 : index
    %c0_168 = arith.constant 0 : index
    %405 = vector.load %arg14[%c8_167, %c0_168] : memref<32x128xf32, #tpu.memory_space<vmem>>, vector<8x128xf32>
    tpu.vector_store %arg14[%c8_167, %c0_168], %404 {strides = array<i32>} : memref<32x128xf32, #tpu.memory_space<vmem>>, vector<8x128xf32>,
    %c16_169 = arith.constant 16 : index
    %c0_170 = arith.constant 0 : index
    %406 = vector.load %arg13[%c16_169, %c0_170] : memref<32x512xf32, #tpu.memory_space<vmem>>, vector<8x512xf32>
    %407 = arith.truncf %402 : vector<8x128xf32> to vector<8x128xbf16>
    %c0_171 = arith.constant 0 : index
    %c0_172 = arith.constant 0 : index
    %408 = vector.load %arg17[%c0_171, %c0_172] : memref<128x512xbf16, #tpu.memory_space<vmem>>, vector<128x512xbf16>
    %cst_173 = arith.constant dense<0.000000e+00> : vector<8x512xf32>
    %409 = tpu.matmul %407, %408, %cst_173 {dimension_numbers = #tpu.dot_dimension_numbers<[1], [0], [0], [1], [0, 0, 1, 1], [], []>} : vector<8x128xbf16>, vector<128x512xbf16>, vector<8x512xf32> -> vector<8x512xf32>
    %410 = arith.addf %406, %409 : vector<8x512xf32>
    %411 = vector.extract_strided_slice %410 {offsets = [0, 0], sizes = [8, 128], strides = [1, 1]} : vector<8x512xf32> to vector<8x128xf32>
    %cst_174 = arith.constant 5.000000e-01 : f32
    %412 = vector.broadcast %cst_174 : f32 to vector<8x128xf32>
    %413 = arith.mulf %412, %411 : vector<8x128xf32>
    %414 = math.tanh %413 : vector<8x128xf32>
    %cst_175 = arith.constant 5.000000e-01 : f32
    %415 = vector.broadcast %cst_175 : f32 to vector<8x128xf32>
    %416 = arith.mulf %415, %414 : vector<8x128xf32>
    %cst_176 = arith.constant 5.000000e-01 : f32
    %417 = vector.broadcast %cst_176 : f32 to vector<8x128xf32>
    %418 = arith.addf %416, %417 : vector<8x128xf32>
    %419 = vector.extract_strided_slice %410 {offsets = [0, 128], sizes = [8, 128], strides = [1, 1]} : vector<8x512xf32> to vector<8x128xf32>
    %cst_177 = arith.constant 5.000000e-01 : f32
    %420 = vector.broadcast %cst_177 : f32 to vector<8x128xf32>
    %421 = arith.mulf %420, %419 : vector<8x128xf32>
    %422 = math.tanh %421 : vector<8x128xf32>
    %cst_178 = arith.constant 5.000000e-01 : f32
    %423 = vector.broadcast %cst_178 : f32 to vector<8x128xf32>
    %424 = arith.mulf %423, %422 : vector<8x128xf32>
    %cst_179 = arith.constant 5.000000e-01 : f32
    %425 = vector.broadcast %cst_179 : f32 to vector<8x128xf32>
    %426 = arith.addf %424, %425 : vector<8x128xf32>
    %427 = vector.extract_strided_slice %410 {offsets = [0, 256], sizes = [8, 128], strides = [1, 1]} : vector<8x512xf32> to vector<8x128xf32>
    %428 = math.tanh %427 : vector<8x128xf32>
    %429 = vector.extract_strided_slice %410 {offsets = [0, 384], sizes = [8, 128], strides = [1, 1]} : vector<8x512xf32> to vector<8x128xf32>
    %cst_180 = arith.constant 5.000000e-01 : f32
    %430 = vector.broadcast %cst_180 : f32 to vector<8x128xf32>
    %431 = arith.mulf %430, %429 : vector<8x128xf32>
    %432 = math.tanh %431 : vector<8x128xf32>
    %cst_181 = arith.constant 5.000000e-01 : f32
    %433 = vector.broadcast %cst_181 : f32 to vector<8x128xf32>
    %434 = arith.mulf %433, %432 : vector<8x128xf32>
    %cst_182 = arith.constant 5.000000e-01 : f32
    %435 = vector.broadcast %cst_182 : f32 to vector<8x128xf32>
    %436 = arith.addf %434, %435 : vector<8x128xf32>
    %437 = arith.mulf %426, %400 : vector<8x128xf32>
    %438 = arith.mulf %418, %428 : vector<8x128xf32>
    %439 = arith.addf %437, %438 : vector<8x128xf32>
    %440 = math.tanh %439 : vector<8x128xf32>
    %441 = arith.mulf %436, %440 : vector<8x128xf32>
    %cst_183 = arith.constant 0.000000e+00 : f32
    %442 = vector.broadcast %cst_183 : f32 to vector<8x128xf32>
    %443 = arith.maximumf %441, %442 : vector<8x128xf32>
    %c16_184 = arith.constant 16 : index
    %c0_185 = arith.constant 0 : index
    %444 = vector.load %arg14[%c16_184, %c0_185] : memref<32x128xf32, #tpu.memory_space<vmem>>, vector<8x128xf32>
    tpu.vector_store %arg14[%c16_184, %c0_185], %443 {strides = array<i32>} : memref<32x128xf32, #tpu.memory_space<vmem>>, vector<8x128xf32>,
    %c24_186 = arith.constant 24 : index
    %c0_187 = arith.constant 0 : index
    %445 = vector.load %arg13[%c24_186, %c0_187] : memref<32x512xf32, #tpu.memory_space<vmem>>, vector<8x512xf32>
    %446 = arith.truncf %441 : vector<8x128xf32> to vector<8x128xbf16>
    %c0_188 = arith.constant 0 : index
    %c0_189 = arith.constant 0 : index
    %447 = vector.load %arg17[%c0_188, %c0_189] : memref<128x512xbf16, #tpu.memory_space<vmem>>, vector<128x512xbf16>
    %cst_190 = arith.constant dense<0.000000e+00> : vector<8x512xf32>
    %448 = tpu.matmul %446, %447, %cst_190 {dimension_numbers = #tpu.dot_dimension_numbers<[1], [0], [0], [1], [0, 0, 1, 1], [], []>} : vector<8x128xbf16>, vector<128x512xbf16>, vector<8x512xf32> -> vector<8x512xf32>
    %449 = arith.addf %445, %448 : vector<8x512xf32>
    %450 = vector.extract_strided_slice %449 {offsets = [0, 0], sizes = [8, 128], strides = [1, 1]} : vector<8x512xf32> to vector<8x128xf32>
    %cst_191 = arith.constant 5.000000e-01 : f32
    %451 = vector.broadcast %cst_191 : f32 to vector<8x128xf32>
    %452 = arith.mulf %451, %450 : vector<8x128xf32>
    %453 = math.tanh %452 : vector<8x128xf32>
    %cst_192 = arith.constant 5.000000e-01 : f32
    %454 = vector.broadcast %cst_192 : f32 to vector<8x128xf32>
    %455 = arith.mulf %454, %453 : vector<8x128xf32>
    %cst_193 = arith.constant 5.000000e-01 : f32
    %456 = vector.broadcast %cst_193 : f32 to vector<8x128xf32>
    %457 = arith.addf %455, %456 : vector<8x128xf32>
    %458 = vector.extract_strided_slice %449 {offsets = [0, 128], sizes = [8, 128], strides = [1, 1]} : vector<8x512xf32> to vector<8x128xf32>
    %cst_194 = arith.constant 5.000000e-01 : f32
    %459 = vector.broadcast %cst_194 : f32 to vector<8x128xf32>
    %460 = arith.mulf %459, %458 : vector<8x128xf32>
    %461 = math.tanh %460 : vector<8x128xf32>
    %cst_195 = arith.constant 5.000000e-01 : f32
    %462 = vector.broadcast %cst_195 : f32 to vector<8x128xf32>
    %463 = arith.mulf %462, %461 : vector<8x128xf32>
    %cst_196 = arith.constant 5.000000e-01 : f32
    %464 = vector.broadcast %cst_196 : f32 to vector<8x128xf32>
    %465 = arith.addf %463, %464 : vector<8x128xf32>
    %466 = vector.extract_strided_slice %449 {offsets = [0, 256], sizes = [8, 128], strides = [1, 1]} : vector<8x512xf32> to vector<8x128xf32>
    %467 = math.tanh %466 : vector<8x128xf32>
    %468 = vector.extract_strided_slice %449 {offsets = [0, 384], sizes = [8, 128], strides = [1, 1]} : vector<8x512xf32> to vector<8x128xf32>
    %cst_197 = arith.constant 5.000000e-01 : f32
    %469 = vector.broadcast %cst_197 : f32 to vector<8x128xf32>
    %470 = arith.mulf %469, %468 : vector<8x128xf32>
    %471 = math.tanh %470 : vector<8x128xf32>
    %cst_198 = arith.constant 5.000000e-01 : f32
    %472 = vector.broadcast %cst_198 : f32 to vector<8x128xf32>
    %473 = arith.mulf %472, %471 : vector<8x128xf32>
    %cst_199 = arith.constant 5.000000e-01 : f32
    %474 = vector.broadcast %cst_199 : f32 to vector<8x128xf32>
    %475 = arith.addf %473, %474 : vector<8x128xf32>
    %476 = arith.mulf %465, %439 : vector<8x128xf32>
    %477 = arith.mulf %457, %467 : vector<8x128xf32>
    %478 = arith.addf %476, %477 : vector<8x128xf32>
    %479 = math.tanh %478 : vector<8x128xf32>
    %480 = arith.mulf %475, %479 : vector<8x128xf32>
    %cst_200 = arith.constant 0.000000e+00 : f32
    %481 = vector.broadcast %cst_200 : f32 to vector<8x128xf32>
    %482 = arith.maximumf %480, %481 : vector<8x128xf32>
    %c24_201 = arith.constant 24 : index
    %c0_202 = arith.constant 0 : index
    %483 = vector.load %arg14[%c24_201, %c0_202] : memref<32x128xf32, #tpu.memory_space<vmem>>, vector<8x128xf32>
    tpu.vector_store %arg14[%c24_201, %c0_202], %482 {strides = array<i32>} : memref<32x128xf32, #tpu.memory_space<vmem>>, vector<8x128xf32>,
    %c3_i32_203 = arith.constant 3 : i32
    %484 = tpu.memref_slice %arg19[%c3_i32_203] : memref<4x!tpu.dma_semaphore, #tpu.memory_space<semaphore_mem>> -> memref<1x!tpu.dma_semaphore, #tpu.memory_space<semaphore_mem>>
    %485 = tpu.memref_squeeze %484 : memref<1x!tpu.dma_semaphore, #tpu.memory_space<semaphore_mem>> -> memref<!tpu.dma_semaphore, #tpu.memory_space<semaphore_mem>>
    tpu.wait_dma2 semaphore(%485 : memref<!tpu.dma_semaphore, #tpu.memory_space<semaphore_mem>>) src(%arg10 : memref<128x256xbf16, #tpu.memory_space<any>>) dst(%arg18 : memref<128x256xbf16, #tpu.memory_space<vmem>>)
    %c0_204 = arith.constant 0 : index
    %c0_205 = arith.constant 0 : index
    %486 = vector.load %arg14[%c0_204, %c0_205] : memref<32x128xf32, #tpu.memory_space<vmem>>, vector<32x128xf32>
    %487 = arith.truncf %486 : vector<32x128xf32> to vector<32x128xbf16>
    %c0_206 = arith.constant 0 : index
    %c0_207 = arith.constant 0 : index
    %488 = vector.load %arg18[%c0_206, %c0_207] : memref<128x256xbf16, #tpu.memory_space<vmem>>, vector<128x256xbf16>
    %cst_208 = arith.constant dense<0.000000e+00> : vector<32x256xf32>
    %489 = tpu.matmul %487, %488, %cst_208 {dimension_numbers = #tpu.dot_dimension_numbers<[1], [0], [0], [1], [0, 0, 1, 1], [], []>} : vector<32x128xbf16>, vector<128x256xbf16>, vector<32x256xf32> -> vector<32x256xf32>
    %c0_209 = arith.constant 0 : index
    %c0_210 = arith.constant 0 : index
    %490 = vector.load %arg6[%c0_209, %c0_210] : memref<1x256xf32, #tpu.memory_space<vmem>>, vector<1x256xf32>
    %491 = vector.broadcast %490 : vector<1x256xf32> to vector<32x256xf32>
    %492 = arith.addf %489, %491 : vector<32x256xf32>
    %493 = vector.extract_strided_slice %492 {offsets = [0, 0], sizes = [8, 256], strides = [1, 1]} : vector<32x256xf32> to vector<8x256xf32>
    %c0_211 = arith.constant 0 : index
    %c0_212 = arith.constant 0 : index
    %494 = vector.load %arg11[%c0_211, %c0_212] : memref<8x1024xf32, #tpu.memory_space<vmem>>, vector<8x256xf32>
    tpu.vector_store %arg11[%c0_211, %c0_212], %493 {strides = array<i32>} : memref<8x1024xf32, #tpu.memory_space<vmem>>, vector<8x256xf32>,
    %495 = vector.extract_strided_slice %492 {offsets = [8, 0], sizes = [8, 256], strides = [1, 1]} : vector<32x256xf32> to vector<8x256xf32>
    %c0_213 = arith.constant 0 : index
    %c256 = arith.constant 256 : index
    %496 = vector.load %arg11[%c0_213, %c256] : memref<8x1024xf32, #tpu.memory_space<vmem>>, vector<8x256xf32>
    tpu.vector_store %arg11[%c0_213, %c256], %495 {strides = array<i32>} : memref<8x1024xf32, #tpu.memory_space<vmem>>, vector<8x256xf32>,
    %497 = vector.extract_strided_slice %492 {offsets = [16, 0], sizes = [8, 256], strides = [1, 1]} : vector<32x256xf32> to vector<8x256xf32>
    %c0_214 = arith.constant 0 : index
    %c512 = arith.constant 512 : index
    %498 = vector.load %arg11[%c0_214, %c512] : memref<8x1024xf32, #tpu.memory_space<vmem>>, vector<8x256xf32>
    tpu.vector_store %arg11[%c0_214, %c512], %497 {strides = array<i32>} : memref<8x1024xf32, #tpu.memory_space<vmem>>, vector<8x256xf32>,
    %499 = vector.extract_strided_slice %492 {offsets = [24, 0], sizes = [8, 256], strides = [1, 1]} : vector<32x256xf32> to vector<8x256xf32>
    %c0_215 = arith.constant 0 : index
    %c768 = arith.constant 768 : index
    %500 = vector.load %arg11[%c0_215, %c768] : memref<8x1024xf32, #tpu.memory_space<vmem>>, vector<8x256xf32>
    tpu.vector_store %arg11[%c0_215, %c768], %499 {strides = array<i32>} : memref<8x1024xf32, #tpu.memory_space<vmem>>, vector<8x256xf32>,
    return
  }
}

</mosaic_0001>

<llo_original>
// kernel: seq2seq_forward.1
$region0: #{seq2seq_forward.1}
  #allocation0 [shape = 'u32[]', space=smem, size = 0x4, offset = 0x4, fixed_abs, tag = 'smem constant byte address 0x4 - core index']
  #allocation1 [shape = 'u32[144,128]{1,0:T(1,128)}', space=vmem, size = 0x12000, scoped, tag = 'internal scratch']
  #allocation2 [shape = 'f32[64,512]{1,0:T(8,128)}', space=vmem, size = 0x20000, scoped, tag = 'scratch operand']
  #allocation3 [shape = 'f32[32,512]{1,0:T(8,128)}', space=vmem, size = 0x10000, scoped, tag = 'scratch operand']
  #allocation4 [shape = 'f32[32,128]{1,0:T(8,128)}', space=vmem, size = 0x4000, scoped, tag = 'scratch operand']
  #allocation5 [shape = 'bf16[128,512]{1,0:T(16,128)(2,1)}', space=vmem, size = 0x20000, scoped, tag = 'scratch operand']
  #allocation6 [shape = 'bf16[128,512]{1,0:T(16,128)(2,1)}', space=vmem, size = 0x20000, scoped, tag = 'scratch operand']
  #allocation7 [shape = 'bf16[128,512]{1,0:T(16,128)(2,1)}', space=vmem, size = 0x20000, scoped, tag = 'scratch operand']
  #allocation8 [shape = 'bf16[128,256]{1,0:T(16,128)(2,1)}', space=vmem, size = 0x10000, scoped, tag = 'scratch operand']
  #allocation9 [shape = 's32[4]{0}', space=sflag, size = 0x10, scoped, tag = 'scratch operand']
  #allocation10 [shape = 's32[]', space=sflag, size = 0x4, offset = 0, fixed_abs, tag = 'sflag constant byte address 0x0 - dummy sync flag']
  #allocation11 [shape = 's32[]', space=sflag, size = 0x4, offset = 0, fixed_abs, tag = 'sflag constant byte address 0x0 - dummy sync flag']
  #allocation12 [shape = 's32[]', space=sflag, size = 0x4, offset = 0, fixed_abs, tag = 'sflag constant byte address 0x0 - dummy sync flag']
  #allocation14 [shape = 's32[]', space=sflag, size = 0x4, offset = 0, fixed_abs, tag = 'sflag constant byte address 0x0 - dummy sync flag']
  %s0 = inlined_call_operand.vmem [shape: f32[64,128], index: 0, kind: input, shape index: {}]
  %s1 = inlined_call_operand.vmem [shape: f32[32,128], index: 1, kind: input, shape index: {}]
  %s2 = inlined_call_operand.vmem [shape: bf16[128,512], index: 2, kind: input, shape index: {}]
  %s3 = inlined_call_operand.vmem [shape: bf16[128,512], index: 3, kind: input, shape index: {}]
  %s4 = inlined_call_operand.vmem [shape: f32[1,512], index: 4, kind: input, shape index: {}]
  %s5 = inlined_call_operand.vmem [shape: f32[1,512], index: 5, kind: input, shape index: {}]
  %s6 = inlined_call_operand.vmem [shape: f32[1,256], index: 6, kind: input, shape index: {}]
  %s7 = inlined_call_operand.vmem [shape: bf16[128,512], index: 7, kind: input, shape index: {}]
  %s8 = inlined_call_operand.vmem [shape: bf16[128,512], index: 8, kind: input, shape index: {}]
  %s9 = inlined_call_operand.hbm [shape: bf16[128,512], index: 9, kind: input, shape index: {}]
  %s10 = inlined_call_operand.vmem [shape: bf16[128,256], index: 10, kind: input, shape index: {}]
  %s11 = inlined_call_operand.vmem [shape: f32[8,1024], index: 11, kind: output, shape index: {}]
  %s12 = sld [smem:[#allocation0]]
  $region149: #{seq2seq_forward.1} parent=0
    _
  %s14 = ssub.s32 1, %s12
  %s15 = scalar_select 0, %s14, %s12
  $region1: #{seq2seq_forward.1} parent=0
    #allocation13 [shape = 'u32[9]{0}', space=smem, size = 0x24, scoped, tag = 'DMA stride descriptor']
    // Predicated region
    $region2: #{seq2seq_forward.1} parent=1 // pred_check
      _
    $region3: #{seq2seq_forward.1} parent=1 // pred_check_branch
      %17 = sbr.rel (0) target = $region5
    $region4: #{seq2seq_forward.1} parent=1 // pred_region
      _
    $region5: #{seq2seq_forward.1} parent=1 // pred_fallthru
      _
    // Predicated region
    $region6: #{seq2seq_forward.1} parent=1 // pred_check
      _
    $region7: #{seq2seq_forward.1} parent=1 // pred_check_branch
      %19 = sbr.rel (0) target = $region9
    $region8: #{seq2seq_forward.1} parent=1 // pred_region
      _
    $region9: #{seq2seq_forward.1} parent=1 // pred_fallthru
      _
    // Predicated region
    $region10: #{seq2seq_forward.1} parent=1 // pred_check
      _
    $region11: #{seq2seq_forward.1} parent=1 // pred_check_branch
      %21 = sbr.rel (0) target = $region13
    $region12: #{seq2seq_forward.1} parent=1 // pred_region
      _
    $region13: #{seq2seq_forward.1} parent=1 // pred_fallthru
      _
    // Predicated region
    $region14: #{seq2seq_forward.1} parent=1 // pred_check
      _
    $region15: #{seq2seq_forward.1} parent=1 // pred_check_branch
      %23 = sbr.rel (0) target = $region17
    $region16: #{seq2seq_forward.1} parent=1 // pred_region
      _
    $region17: #{seq2seq_forward.1} parent=1 // pred_fallthru
      _
    // Predicated region
    $region18: #{seq2seq_forward.1} parent=1 // pred_check
      _
    $region19: #{seq2seq_forward.1} parent=1 // pred_check_branch
      %25 = sbr.rel (0) target = $region21
    $region20: #{seq2seq_forward.1} parent=1 // pred_region
      _
    $region21: #{seq2seq_forward.1} parent=1 // pred_fallthru
      _
    // Predicated region
    $region22: #{seq2seq_forward.1} parent=1 // pred_check
      _
    $region23: #{seq2seq_forward.1} parent=1 // pred_check_branch
      %27 = sbr.rel (0) target = $region25
    $region24: #{seq2seq_forward.1} parent=1 // pred_region
      _
    $region25: #{seq2seq_forward.1} parent=1 // pred_fallthru
      _
    // Predicated region
    $region26: #{seq2seq_forward.1} parent=1 // pred_check
      _
    $region27: #{seq2seq_forward.1} parent=1 // pred_check_branch
      %29 = sbr.rel (0) target = $region29
    $region28: #{seq2seq_forward.1} parent=1 // pred_region
      _
    $region29: #{seq2seq_forward.1} parent=1 // pred_fallthru
      _
    %p32 = scmp.lt.u32.totalorder 4, 8
    %p33 = pneg %p32
    // Predicated region
    $region30: #{seq2seq_forward.1} parent=1 // pred_check
      _
    $region31: #{seq2seq_forward.1} parent=1 // pred_check_branch
      %35 = sbr.rel (%p32) target = $region33
    $region32: #{seq2seq_forward.1} parent=1 // pred_region
      %s176 = sand.u32 4, 7
      %p177 = scmp.eq.s32.totalorder %s176, 0
      %p178 = pneg %p177
      // Predicated region
      $region45: #{seq2seq_forward.1} parent=32 // pred_check
        _
      $region46: #{seq2seq_forward.1} parent=32 // pred_check_branch
        %180 = sbr.rel (%p177) target = $region48
      $region47: #{seq2seq_forward.1} parent=32 // pred_region
        %s181 = sand.u32 4, 7
        %s182 = ssub.s32 4, %s181
        %s183 = scalar_lea.vmem %s7, %s182
        %s184 = ssub.s32 4, %s181
        %s185 = scalar_lea.vmem [#allocation5], %s184
        loop: start=0, step=1, limit=1
        $region49: #{seq2seq_forward.1} parent=47 // loop_pre_header
          _
        $region50: #{seq2seq_forward.1} parent=47 // loop_header
          %s187 = sphi 0, %s191
          %p188 = scmp.ge.s32.totalorder %s187, 1
          %s192 = sphi %s7, %s7
          %s193 = sphi [#allocation5], [#allocation5]
        $region51: #{seq2seq_forward.1} parent=47 // loop_header_branch
          %190 = sbr.rel (%p188) target = $region55
        $region52: #{seq2seq_forward.1} parent=47 // loop_body
          _
        $region53: #{seq2seq_forward.1} parent=47 // loop_footer
          %s191 = sadd.s32 1, %s187
        $region54: #{seq2seq_forward.1} parent=47 // loop_footer_branch
          %186 = sbr.rel target = $region50
        $region55: #{seq2seq_forward.1} parent=47 // loop_exit
          _
        %s194 = sshllo.u32 0, %s181
        loop: start=0, step=1, limit=1
        $region56: #{seq2seq_forward.1} parent=47 // loop_pre_header
          _
        $region57: #{seq2seq_forward.1} parent=47 // loop_header
          %s196 = sphi 0, %s200
          %p197 = scmp.ge.s32.totalorder %s196, 1
          %s201 = sphi %s183, %s183
          %s202 = sphi %s185, %s185
        $region58: #{seq2seq_forward.1} parent=47 // loop_header_branch
          %199 = sbr.rel (%p197) target = $region62
        $region59: #{seq2seq_forward.1} parent=47 // loop_body
          %v203 = vld [vmem:[%s201] sm:%s194]
          %204 = vst [vmem:[%s202] sm:%s194] %v203
          %v205 = vld [vmem:[%s201 + $0x10] sm:%s194]
          %206 = vst [vmem:[%s202 + $0x4] sm:%s194] %v205
          %v207 = vld [vmem:[%s201 + $0x4] sm:%s194]
          %208 = vst [vmem:[%s202 + $0x8] sm:%s194] %v207
          %v209 = vld [vmem:[%s201 + $0x14] sm:%s194]
          %210 = vst [vmem:[%s202 + $0xc] sm:%s194] %v209
          %v211 = vld [vmem:[%s201 + $0x8] sm:%s194]
          %212 = vst [vmem:[%s202 + $0x10] sm:%s194] %v211
          %v213 = vld [vmem:[%s201 + $0x18] sm:%s194]
          %214 = vst [vmem:[%s202 + $0x14] sm:%s194] %v213
          %v215 = vld [vmem:[%s201 + $0xc] sm:%s194]
          %216 = vst [vmem:[%s202 + $0x18] sm:%s194] %v215
          %v217 = vld [vmem:[%s201 + $0x1c] sm:%s194]
          %218 = vst [vmem:[%s202 + $0x1c] sm:%s194] %v217
          %v219 = vld [vmem:[%s201 + $0x20] sm:%s194]
          %220 = vst [vmem:[%s202 + $0x20] sm:%s194] %v219
          %v221 = vld [vmem:[%s201 + $0x30] sm:%s194]
          %222 = vst [vmem:[%s202 + $0x24] sm:%s194] %v221
          %v223 = vld [vmem:[%s201 + $0x24] sm:%s194]
          %224 = vst [vmem:[%s202 + $0x28] sm:%s194] %v223
          %v225 = vld [vmem:[%s201 + $0x34] sm:%s194]
          %226 = vst [vmem:[%s202 + $0x2c] sm:%s194] %v225
          %v227 = vld [vmem:[%s201 + $0x28] sm:%s194]
          %228 = vst [vmem:[%s202 + $0x30] sm:%s194] %v227
          %v229 = vld [vmem:[%s201 + $0x38] sm:%s194]
          %230 = vst [vmem:[%s202 + $0x34] sm:%s194] %v229
          %v231 = vld [vmem:[%s201 + $0x2c] sm:%s194]
          %232 = vst [vmem:[%s202 + $0x38] sm:%s194] %v231
          %v233 = vld [vmem:[%s201 + $0x3c] sm:%s194]
          %234 = vst [vmem:[%s202 + $0x3c] sm:%s194] %v233
          %v235 = vld [vmem:[%s201 + $0x40] sm:%s194]
          %236 = vst [vmem:[%s202 + $0x40] sm:%s194] %v235
          %v237 = vld [vmem:[%s201 + $0x50] sm:%s194]
          %238 = vst [vmem:[%s202 + $0x44] sm:%s194] %v237
          %v239 = vld [vmem:[%s201 + $0x44] sm:%s194]
          %240 = vst [vmem:[%s202 + $0x48] sm:%s194] %v239
          %v241 = vld [vmem:[%s201 + $0x54] sm:%s194]
          %242 = vst [vmem:[%s202 + $0x4c] sm:%s194] %v241
          %v243 = vld [vmem:[%s201 + $0x48] sm:%s194]
          %244 = vst [vmem:[%s202 + $0x50] sm:%s194] %v243
          %v245 = vld [vmem:[%s201 + $0x58] sm:%s194]
          %246 = vst [vmem:[%s202 + $0x54] sm:%s194] %v245
          %v247 = vld [vmem:[%s201 + $0x4c] sm:%s194]
          %248 = vst [vmem:[%s202 + $0x58] sm:%s194] %v247
          %v249 = vld [vmem:[%s201 + $0x5c] sm:%s194]
          %250 = vst [vmem:[%s202 + $0x5c] sm:%s194] %v249
          %v251 = vld [vmem:[%s201 + $0x60] sm:%s194]
          %252 = vst [vmem:[%s202 + $0x60] sm:%s194] %v251
          %v253 = vld [vmem:[%s201 + $0x70] sm:%s194]
          %254 = vst [vmem:[%s202 + $0x64] sm:%s194] %v253
          %v255 = vld [vmem:[%s201 + $0x64] sm:%s194]
          %256 = vst [vmem:[%s202 + $0x68] sm:%s194] %v255
          %v257 = vld [vmem:[%s201 + $0x74] sm:%s194]
          %258 = vst [vmem:[%s202 + $0x6c] sm:%s194] %v257
          %v259 = vld [vmem:[%s201 + $0x68] sm:%s194]
          %260 = vst [vmem:[%s202 + $0x70] sm:%s194] %v259
          %v261 = vld [vmem:[%s201 + $0x78] sm:%s194]
          %262 = vst [vmem:[%s202 + $0x74] sm:%s194] %v261
          %v263 = vld [vmem:[%s201 + $0x6c] sm:%s194]
          %264 = vst [vmem:[%s202 + $0x78] sm:%s194] %v263
          %v265 = vld [vmem:[%s201 + $0x7c] sm:%s194]
          %266 = vst [vmem:[%s202 + $0x7c] sm:%s194] %v265
          %v267 = vld [vmem:[%s201 + $0x80] sm:%s194]
          %268 = vst [vmem:[%s202 + $0x80] sm:%s194] %v267
          %v269 = vld [vmem:[%s201 + $0x90] sm:%s194]
          %270 = vst [vmem:[%s202 + $0x84] sm:%s194] %v269
          %v271 = vld [vmem:[%s201 + $0x84] sm:%s194]
          %272 = vst [vmem:[%s202 + $0x88] sm:%s194] %v271
          %v273 = vld [vmem:[%s201 + $0x94] sm:%s194]
          %274 = vst [vmem:[%s202 + $0x8c] sm:%s194] %v273
          %v275 = vld [vmem:[%s201 + $0x88] sm:%s194]
          %276 = vst [vmem:[%s202 + $0x90] sm:%s194] %v275
          %v277 = vld [vmem:[%s201 + $0x98] sm:%s194]
          %278 = vst [vmem:[%s202 + $0x94] sm:%s194] %v277
          %v279 = vld [vmem:[%s201 + $0x8c] sm:%s194]
          %280 = vst [vmem:[%s202 + $0x98] sm:%s194] %v279
          %v281 = vld [vmem:[%s201 + $0x9c] sm:%s194]
          %282 = vst [vmem:[%s202 + $0x9c] sm:%s194] %v281
          %v283 = vld [vmem:[%s201 + $0xa0] sm:%s194]
          %284 = vst [vmem:[%s202 + $0xa0] sm:%s194] %v283
          %v285 = vld [vmem:[%s201 + $0xb0] sm:%s194]
          %286 = vst [vmem:[%s202 + $0xa4] sm:%s194] %v285
          %v287 = vld [vmem:[%s201 + $0xa4] sm:%s194]
          %288 = vst [vmem:[%s202 + $0xa8] sm:%s194] %v287
          %v289 = vld [vmem:[%s201 + $0xb4] sm:%s194]
          %290 = vst [vmem:[%s202 + $0xac] sm:%s194] %v289
          %v291 = vld [vmem:[%s201 + $0xa8] sm:%s194]
          %292 = vst [vmem:[%s202 + $0xb0] sm:%s194] %v291
          %v293 = vld [vmem:[%s201 + $0xb8] sm:%s194]
          %294 = vst [vmem:[%s202 + $0xb4] sm:%s194] %v293
          %v295 = vld [vmem:[%s201 + $0xac] sm:%s194]
          %296 = vst [vmem:[%s202 + $0xb8] sm:%s194] %v295
          %v297 = vld [vmem:[%s201 + $0xbc] sm:%s194]
          %298 = vst [vmem:[%s202 + $0xbc] sm:%s194] %v297
          %v299 = vld [vmem:[%s201 + $0xc0] sm:%s194]
          %300 = vst [vmem:[%s202 + $0xc0] sm:%s194] %v299
          %v301 = vld [vmem:[%s201 + $0xd0] sm:%s194]
          %302 = vst [vmem:[%s202 + $0xc4] sm:%s194] %v301
          %v303 = vld [vmem:[%s201 + $0xc4] sm:%s194]
          %304 = vst [vmem:[%s202 + $0xc8] sm:%s194] %v303
          %v305 = vld [vmem:[%s201 + $0xd4] sm:%s194]
          %306 = vst [vmem:[%s202 + $0xcc] sm:%s194] %v305
          %v307 = vld [vmem:[%s201 + $0xc8] sm:%s194]
          %308 = vst [vmem:[%s202 + $0xd0] sm:%s194] %v307
          %v309 = vld [vmem:[%s201 + $0xd8] sm:%s194]
          %310 = vst [vmem:[%s202 + $0xd4] sm:%s194] %v309
          %v311 = vld [vmem:[%s201 + $0xcc] sm:%s194]
          %312 = vst [vmem:[%s202 + $0xd8] sm:%s194] %v311
          %v313 = vld [vmem:[%s201 + $0xdc] sm:%s194]
          %314 = vst [vmem:[%s202 + $0xdc] sm:%s194] %v313
          %v315 = vld [vmem:[%s201 + $0xe0] sm:%s194]
          %316 = vst [vmem:[%s202 + $0xe0] sm:%s194] %v315
          %v317 = vld [vmem:[%s201 + $0xf0] sm:%s194]
          %318 = vst [vmem:[%s202 + $0xe4] sm:%s194] %v317
          %v319 = vld [vmem:[%s201 + $0xe4] sm:%s194]
          %320 = vst [vmem:[%s202 + $0xe8] sm:%s194] %v319
          %v321 = vld [vmem:[%s201 + $0xf4] sm:%s194]
          %322 = vst [vmem:[%s202 + $0xec] sm:%s194] %v321
          %v323 = vld [vmem:[%s201 + $0xe8] sm:%s194]
          %324 = vst [vmem:[%s202 + $0xf0] sm:%s194] %v323
          %v325 = vld [vmem:[%s201 + $0xf8] sm:%s194]
          %326 = vst [vmem:[%s202 + $0xf4] sm:%s194] %v325
          %v327 = vld [vmem:[%s201 + $0xec] sm:%s194]
          %328 = vst [vmem:[%s202 + $0xf8] sm:%s194] %v327
          %v329 = vld [vmem:[%s201 + $0xfc] sm:%s194]
          %330 = vst [vmem:[%s202 + $0xfc] sm:%s194] %v329
        $region60: #{seq2seq_forward.1} parent=47 // loop_footer
          %s200 = sadd.s32 1, %s196
        $region61: #{seq2seq_forward.1} parent=47 // loop_footer_branch
          %195 = sbr.rel target = $region57
        $region62: #{seq2seq_forward.1} parent=47 // loop_exit
          _
      $region48: #{seq2seq_forward.1} parent=32 // pred_fallthru
        _
    $region33: #{seq2seq_forward.1} parent=1 // pred_fallthru
      _
    // Predicated region
    $region34: #{seq2seq_forward.1} parent=1 // pred_check
      %p36 = pneg %p32
    $region35: #{seq2seq_forward.1} parent=1 // pred_check_branch
      %38 = sbr.rel (%p36) target = $region37
    $region36: #{seq2seq_forward.1} parent=1 // pred_region
      %s39 = sshllo.u32 0, 4
      loop: start=0, step=1, limit=1
      $region38: #{seq2seq_forward.1} parent=36 // loop_pre_header
        _
      $region39: #{seq2seq_forward.1} parent=36 // loop_header
        %s41 = sphi 0, %s45
        %p42 = scmp.ge.s32.totalorder %s41, 1
        %s46 = sphi %s7, %s7
        %s47 = sphi [#allocation5], [#allocation5]
      $region40: #{seq2seq_forward.1} parent=36 // loop_header_branch
        %44 = sbr.rel (%p42) target = $region44
      $region41: #{seq2seq_forward.1} parent=36 // loop_body
        %v48 = vld [vmem:[%s46] sm:%s39]
        %49 = vst [vmem:[%s47] sm:%s39] %v48
        %v50 = vld [vmem:[%s46 + $0x10] sm:%s39]
        %51 = vst [vmem:[%s47 + $0x4] sm:%s39] %v50
        %v52 = vld [vmem:[%s46 + $0x4] sm:%s39]
        %53 = vst [vmem:[%s47 + $0x8] sm:%s39] %v52
        %v54 = vld [vmem:[%s46 + $0x14] sm:%s39]
        %55 = vst [vmem:[%s47 + $0xc] sm:%s39] %v54
        %v56 = vld [vmem:[%s46 + $0x8] sm:%s39]
        %57 = vst [vmem:[%s47 + $0x10] sm:%s39] %v56
        %v58 = vld [vmem:[%s46 + $0x18] sm:%s39]
        %59 = vst [vmem:[%s47 + $0x14] sm:%s39] %v58
        %v60 = vld [vmem:[%s46 + $0xc] sm:%s39]
        %61 = vst [vmem:[%s47 + $0x18] sm:%s39] %v60
        %v62 = vld [vmem:[%s46 + $0x1c] sm:%s39]
        %63 = vst [vmem:[%s47 + $0x1c] sm:%s39] %v62
        %v64 = vld [vmem:[%s46 + $0x20] sm:%s39]
        %65 = vst [vmem:[%s47 + $0x20] sm:%s39] %v64
        %v66 = vld [vmem:[%s46 + $0x30] sm:%s39]
        %67 = vst [vmem:[%s47 + $0x24] sm:%s39] %v66
        %v68 = vld [vmem:[%s46 + $0x24] sm:%s39]
        %69 = vst [vmem:[%s47 + $0x28] sm:%s39] %v68
        %v70 = vld [vmem:[%s46 + $0x34] sm:%s39]
        %71 = vst [vmem:[%s47 + $0x2c] sm:%s39] %v70
        %v72 = vld [vmem:[%s46 + $0x28] sm:%s39]
        %73 = vst [vmem:[%s47 + $0x30] sm:%s39] %v72
        %v74 = vld [vmem:[%s46 + $0x38] sm:%s39]
        %75 = vst [vmem:[%s47 + $0x34] sm:%s39] %v74
        %v76 = vld [vmem:[%s46 + $0x2c] sm:%s39]
        %77 = vst [vmem:[%s47 + $0x38] sm:%s39] %v76
        %v78 = vld [vmem:[%s46 + $0x3c] sm:%s39]
        %79 = vst [vmem:[%s47 + $0x3c] sm:%s39] %v78
        %v80 = vld [vmem:[%s46 + $0x40] sm:%s39]
        %81 = vst [vmem:[%s47 + $0x40] sm:%s39] %v80
        %v82 = vld [vmem:[%s46 + $0x50] sm:%s39]
        %83 = vst [vmem:[%s47 + $0x44] sm:%s39] %v82
        %v84 = vld [vmem:[%s46 + $0x44] sm:%s39]
        %85 = vst [vmem:[%s47 + $0x48] sm:%s39] %v84
        %v86 = vld [vmem:[%s46 + $0x54] sm:%s39]
        %87 = vst [vmem:[%s47 + $0x4c] sm:%s39] %v86
        %v88 = vld [vmem:[%s46 + $0x48] sm:%s39]
        %89 = vst [vmem:[%s47 + $0x50] sm:%s39] %v88
        %v90 = vld [vmem:[%s46 + $0x58] sm:%s39]
        %91 = vst [vmem:[%s47 + $0x54] sm:%s39] %v90
        %v92 = vld [vmem:[%s46 + $0x4c] sm:%s39]
        %93 = vst [vmem:[%s47 + $0x58] sm:%s39] %v92
        %v94 = vld [vmem:[%s46 + $0x5c] sm:%s39]
        %95 = vst [vmem:[%s47 + $0x5c] sm:%s39] %v94
        %v96 = vld [vmem:[%s46 + $0x60] sm:%s39]
        %97 = vst [vmem:[%s47 + $0x60] sm:%s39] %v96
        %v98 = vld [vmem:[%s46 + $0x70] sm:%s39]
        %99 = vst [vmem:[%s47 + $0x64] sm:%s39] %v98
        %v100 = vld [vmem:[%s46 + $0x64] sm:%s39]
        %101 = vst [vmem:[%s47 + $0x68] sm:%s39] %v100
        %v102 = vld [vmem:[%s46 + $0x74] sm:%s39]
        %103 = vst [vmem:[%s47 + $0x6c] sm:%s39] %v102
        %v104 = vld [vmem:[%s46 + $0x68] sm:%s39]
        %105 = vst [vmem:[%s47 + $0x70] sm:%s39] %v104
        %v106 = vld [vmem:[%s46 + $0x78] sm:%s39]
        %107 = vst [vmem:[%s47 + $0x74] sm:%s39] %v106
        %v108 = vld [vmem:[%s46 + $0x6c] sm:%s39]
        %109 = vst [vmem:[%s47 + $0x78] sm:%s39] %v108
        %v110 = vld [vmem:[%s46 + $0x7c] sm:%s39]
        %111 = vst [vmem:[%s47 + $0x7c] sm:%s39] %v110
        %v112 = vld [vmem:[%s46 + $0x80] sm:%s39]
        %113 = vst [vmem:[%s47 + $0x80] sm:%s39] %v112
        %v114 = vld [vmem:[%s46 + $0x90] sm:%s39]
        %115 = vst [vmem:[%s47 + $0x84] sm:%s39] %v114
        %v116 = vld [vmem:[%s46 + $0x84] sm:%s39]
        %117 = vst [vmem:[%s47 + $0x88] sm:%s39] %v116
        %v118 = vld [vmem:[%s46 + $0x94] sm:%s39]
        %119 = vst [vmem:[%s47 + $0x8c] sm:%s39] %v118
        %v120 = vld [vmem:[%s46 + $0x88] sm:%s39]
        %121 = vst [vmem:[%s47 + $0x90] sm:%s39] %v120
        %v122 = vld [vmem:[%s46 + $0x98] sm:%s39]
        %123 = vst [vmem:[%s47 + $0x94] sm:%s39] %v122
        %v124 = vld [vmem:[%s46 + $0x8c] sm:%s39]
        %125 = vst [vmem:[%s47 + $0x98] sm:%s39] %v124
        %v126 = vld [vmem:[%s46 + $0x9c] sm:%s39]
        %127 = vst [vmem:[%s47 + $0x9c] sm:%s39] %v126
        %v128 = vld [vmem:[%s46 + $0xa0] sm:%s39]
        %129 = vst [vmem:[%s47 + $0xa0] sm:%s39] %v128
        %v130 = vld [vmem:[%s46 + $0xb0] sm:%s39]
        %131 = vst [vmem:[%s47 + $0xa4] sm:%s39] %v130
        %v132 = vld [vmem:[%s46 + $0xa4] sm:%s39]
        %133 = vst [vmem:[%s47 + $0xa8] sm:%s39] %v132
        %v134 = vld [vmem:[%s46 + $0xb4] sm:%s39]
        %135 = vst [vmem:[%s47 + $0xac] sm:%s39] %v134
        %v136 = vld [vmem:[%s46 + $0xa8] sm:%s39]
        %137 = vst [vmem:[%s47 + $0xb0] sm:%s39] %v136
        %v138 = vld [vmem:[%s46 + $0xb8] sm:%s39]
        %139 = vst [vmem:[%s47 + $0xb4] sm:%s39] %v138
        %v140 = vld [vmem:[%s46 + $0xac] sm:%s39]
        %141 = vst [vmem:[%s47 + $0xb8] sm:%s39] %v140
        %v142 = vld [vmem:[%s46 + $0xbc] sm:%s39]
        %143 = vst [vmem:[%s47 + $0xbc] sm:%s39] %v142
        %v144 = vld [vmem:[%s46 + $0xc0] sm:%s39]
        %145 = vst [vmem:[%s47 + $0xc0] sm:%s39] %v144
        %v146 = vld [vmem:[%s46 + $0xd0] sm:%s39]
        %147 = vst [vmem:[%s47 + $0xc4] sm:%s39] %v146
        %v148 = vld [vmem:[%s46 + $0xc4] sm:%s39]
        %149 = vst [vmem:[%s47 + $0xc8] sm:%s39] %v148
        %v150 = vld [vmem:[%s46 + $0xd4] sm:%s39]
        %151 = vst [vmem:[%s47 + $0xcc] sm:%s39] %v150
        %v152 = vld [vmem:[%s46 + $0xc8] sm:%s39]
        %153 = vst [vmem:[%s47 + $0xd0] sm:%s39] %v152
        %v154 = vld [vmem:[%s46 + $0xd8] sm:%s39]
        %155 = vst [vmem:[%s47 + $0xd4] sm:%s39] %v154
        %v156 = vld [vmem:[%s46 + $0xcc] sm:%s39]
        %157 = vst [vmem:[%s47 + $0xd8] sm:%s39] %v156
        %v158 = vld [vmem:[%s46 + $0xdc] sm:%s39]
        %159 = vst [vmem:[%s47 + $0xdc] sm:%s39] %v158
        %v160 = vld [vmem:[%s46 + $0xe0] sm:%s39]
        %161 = vst [vmem:[%s47 + $0xe0] sm:%s39] %v160
        %v162 = vld [vmem:[%s46 + $0xf0] sm:%s39]
        %163 = vst [vmem:[%s47 + $0xe4] sm:%s39] %v162
        %v164 = vld [vmem:[%s46 + $0xe4] sm:%s39]
        %165 = vst [vmem:[%s47 + $0xe8] sm:%s39] %v164
        %v166 = vld [vmem:[%s46 + $0xf4] sm:%s39]
        %167 = vst [vmem:[%s47 + $0xec] sm:%s39] %v166
        %v168 = vld [vmem:[%s46 + $0xe8] sm:%s39]
        %169 = vst [vmem:[%s47 + $0xf0] sm:%s39] %v168
        %v170 = vld [vmem:[%s46 + $0xf8] sm:%s39]
        %171 = vst [vmem:[%s47 + $0xf4] sm:%s39] %v170
        %v172 = vld [vmem:[%s46 + $0xec] sm:%s39]
        %173 = vst [vmem:[%s47 + $0xf8] sm:%s39] %v172
        %v174 = vld [vmem:[%s46 + $0xfc] sm:%s39]
        %175 = vst [vmem:[%s47 + $0xfc] sm:%s39] %v174
      $region42: #{seq2seq_forward.1} parent=36 // loop_footer
        %s45 = sadd.s32 1, %s41
      $region43: #{seq2seq_forward.1} parent=36 // loop_footer_branch
        %40 = sbr.rel target = $region39
      $region44: #{seq2seq_forward.1} parent=36 // loop_exit
        _
    $region37: #{seq2seq_forward.1} parent=1 // pred_fallthru
      _
    // Predicated region
    $region63: #{seq2seq_forward.1} parent=1 // pred_check
      _
    $region64: #{seq2seq_forward.1} parent=1 // pred_check_branch
      %333 = sbr.rel (0) target = $region66
    $region65: #{seq2seq_forward.1} parent=1 // pred_region
      %334 = vsyncadd [#allocation9], 4096
    $region66: #{seq2seq_forward.1} parent=1 // pred_fallthru
      _
    %s335 = scalar_lea.sflag [#allocation9], 1
    %p337 = scmp.lt.u32.totalorder 4, 8
    %p338 = pneg %p337
    // Predicated region
    $region67: #{seq2seq_forward.1} parent=1 // pred_check
      _
    $region68: #{seq2seq_forward.1} parent=1 // pred_check_branch
      %340 = sbr.rel (%p337) target = $region70
    $region69: #{seq2seq_forward.1} parent=1 // pred_region
      %s481 = sand.u32 4, 7
      %p482 = scmp.eq.s32.totalorder %s481, 0
      %p483 = pneg %p482
      // Predicated region
      $region82: #{seq2seq_forward.1} parent=69 // pred_check
        _
      $region83: #{seq2seq_forward.1} parent=69 // pred_check_branch
        %485 = sbr.rel (%p482) target = $region85
      $region84: #{seq2seq_forward.1} parent=69 // pred_region
        %s486 = sand.u32 4, 7
        %s487 = ssub.s32 4, %s486
        %s488 = scalar_lea.vmem %s8, %s487
        %s489 = ssub.s32 4, %s486
        %s490 = scalar_lea.vmem [#allocation6], %s489
        loop: start=0, step=1, limit=1
        $region86: #{seq2seq_forward.1} parent=84 // loop_pre_header
          _
        $region87: #{seq2seq_forward.1} parent=84 // loop_header
          %s492 = sphi 0, %s496
          %p493 = scmp.ge.s32.totalorder %s492, 1
          %s497 = sphi %s8, %s8
          %s498 = sphi [#allocation6], [#allocation6]
        $region88: #{seq2seq_forward.1} parent=84 // loop_header_branch
          %495 = sbr.rel (%p493) target = $region92
        $region89: #{seq2seq_forward.1} parent=84 // loop_body
          _
        $region90: #{seq2seq_forward.1} parent=84 // loop_footer
          %s496 = sadd.s32 1, %s492
        $region91: #{seq2seq_forward.1} parent=84 // loop_footer_branch
          %491 = sbr.rel target = $region87
        $region92: #{seq2seq_forward.1} parent=84 // loop_exit
          _
        %s499 = sshllo.u32 0, %s486
        loop: start=0, step=1, limit=1
        $region93: #{seq2seq_forward.1} parent=84 // loop_pre_header
          _
        $region94: #{seq2seq_forward.1} parent=84 // loop_header
          %s501 = sphi 0, %s505
          %p502 = scmp.ge.s32.totalorder %s501, 1
          %s506 = sphi %s488, %s488
          %s507 = sphi %s490, %s490
        $region95: #{seq2seq_forward.1} parent=84 // loop_header_branch
          %504 = sbr.rel (%p502) target = $region99
        $region96: #{seq2seq_forward.1} parent=84 // loop_body
          %v508 = vld [vmem:[%s506] sm:%s499]
          %509 = vst [vmem:[%s507] sm:%s499] %v508
          %v510 = vld [vmem:[%s506 + $0x10] sm:%s499]
          %511 = vst [vmem:[%s507 + $0x4] sm:%s499] %v510
          %v512 = vld [vmem:[%s506 + $0x4] sm:%s499]
          %513 = vst [vmem:[%s507 + $0x8] sm:%s499] %v512
          %v514 = vld [vmem:[%s506 + $0x14] sm:%s499]
          %515 = vst [vmem:[%s507 + $0xc] sm:%s499] %v514
          %v516 = vld [vmem:[%s506 + $0x8] sm:%s499]
          %517 = vst [vmem:[%s507 + $0x10] sm:%s499] %v516
          %v518 = vld [vmem:[%s506 + $0x18] sm:%s499]
          %519 = vst [vmem:[%s507 + $0x14] sm:%s499] %v518
          %v520 = vld [vmem:[%s506 + $0xc] sm:%s499]
          %521 = vst [vmem:[%s507 + $0x18] sm:%s499] %v520
          %v522 = vld [vmem:[%s506 + $0x1c] sm:%s499]
          %523 = vst [vmem:[%s507 + $0x1c] sm:%s499] %v522
          %v524 = vld [vmem:[%s506 + $0x20] sm:%s499]
          %525 = vst [vmem:[%s507 + $0x20] sm:%s499] %v524
          %v526 = vld [vmem:[%s506 + $0x30] sm:%s499]
          %527 = vst [vmem:[%s507 + $0x24] sm:%s499] %v526
          %v528 = vld [vmem:[%s506 + $0x24] sm:%s499]
          %529 = vst [vmem:[%s507 + $0x28] sm:%s499] %v528
          %v530 = vld [vmem:[%s506 + $0x34] sm:%s499]
          %531 = vst [vmem:[%s507 + $0x2c] sm:%s499] %v530
          %v532 = vld [vmem:[%s506 + $0x28] sm:%s499]
          %533 = vst [vmem:[%s507 + $0x30] sm:%s499] %v532
          %v534 = vld [vmem:[%s506 + $0x38] sm:%s499]
          %535 = vst [vmem:[%s507 + $0x34] sm:%s499] %v534
          %v536 = vld [vmem:[%s506 + $0x2c] sm:%s499]
          %537 = vst [vmem:[%s507 + $0x38] sm:%s499] %v536
          %v538 = vld [vmem:[%s506 + $0x3c] sm:%s499]
          %539 = vst [vmem:[%s507 + $0x3c] sm:%s499] %v538
          %v540 = vld [vmem:[%s506 + $0x40] sm:%s499]
          %541 = vst [vmem:[%s507 + $0x40] sm:%s499] %v540
          %v542 = vld [vmem:[%s506 + $0x50] sm:%s499]
          %543 = vst [vmem:[%s507 + $0x44] sm:%s499] %v542
          %v544 = vld [vmem:[%s506 + $0x44] sm:%s499]
          %545 = vst [vmem:[%s507 + $0x48] sm:%s499] %v544
          %v546 = vld [vmem:[%s506 + $0x54] sm:%s499]
          %547 = vst [vmem:[%s507 + $0x4c] sm:%s499] %v546
          %v548 = vld [vmem:[%s506 + $0x48] sm:%s499]
          %549 = vst [vmem:[%s507 + $0x50] sm:%s499] %v548
          %v550 = vld [vmem:[%s506 + $0x58] sm:%s499]
          %551 = vst [vmem:[%s507 + $0x54] sm:%s499] %v550
          %v552 = vld [vmem:[%s506 + $0x4c] sm:%s499]
          %553 = vst [vmem:[%s507 + $0x58] sm:%s499] %v552
          %v554 = vld [vmem:[%s506 + $0x5c] sm:%s499]
          %555 = vst [vmem:[%s507 + $0x5c] sm:%s499] %v554
          %v556 = vld [vmem:[%s506 + $0x60] sm:%s499]
          %557 = vst [vmem:[%s507 + $0x60] sm:%s499] %v556
          %v558 = vld [vmem:[%s506 + $0x70] sm:%s499]
          %559 = vst [vmem:[%s507 + $0x64] sm:%s499] %v558
          %v560 = vld [vmem:[%s506 + $0x64] sm:%s499]
          %561 = vst [vmem:[%s507 + $0x68] sm:%s499] %v560
          %v562 = vld [vmem:[%s506 + $0x74] sm:%s499]
          %563 = vst [vmem:[%s507 + $0x6c] sm:%s499] %v562
          %v564 = vld [vmem:[%s506 + $0x68] sm:%s499]
          %565 = vst [vmem:[%s507 + $0x70] sm:%s499] %v564
          %v566 = vld [vmem:[%s506 + $0x78] sm:%s499]
          %567 = vst [vmem:[%s507 + $0x74] sm:%s499] %v566
          %v568 = vld [vmem:[%s506 + $0x6c] sm:%s499]
          %569 = vst [vmem:[%s507 + $0x78] sm:%s499] %v568
          %v570 = vld [vmem:[%s506 + $0x7c] sm:%s499]
          %571 = vst [vmem:[%s507 + $0x7c] sm:%s499] %v570
          %v572 = vld [vmem:[%s506 + $0x80] sm:%s499]
          %573 = vst [vmem:[%s507 + $0x80] sm:%s499] %v572
          %v574 = vld [vmem:[%s506 + $0x90] sm:%s499]
          %575 = vst [vmem:[%s507 + $0x84] sm:%s499] %v574
          %v576 = vld [vmem:[%s506 + $0x84] sm:%s499]
          %577 = vst [vmem:[%s507 + $0x88] sm:%s499] %v576
          %v578 = vld [vmem:[%s506 + $0x94] sm:%s499]
          %579 = vst [vmem:[%s507 + $0x8c] sm:%s499] %v578
          %v580 = vld [vmem:[%s506 + $0x88] sm:%s499]
          %581 = vst [vmem:[%s507 + $0x90] sm:%s499] %v580
          %v582 = vld [vmem:[%s506 + $0x98] sm:%s499]
          %583 = vst [vmem:[%s507 + $0x94] sm:%s499] %v582
          %v584 = vld [vmem:[%s506 + $0x8c] sm:%s499]
          %585 = vst [vmem:[%s507 + $0x98] sm:%s499] %v584
          %v586 = vld [vmem:[%s506 + $0x9c] sm:%s499]
          %587 = vst [vmem:[%s507 + $0x9c] sm:%s499] %v586
          %v588 = vld [vmem:[%s506 + $0xa0] sm:%s499]
          %589 = vst [vmem:[%s507 + $0xa0] sm:%s499] %v588
          %v590 = vld [vmem:[%s506 + $0xb0] sm:%s499]
          %591 = vst [vmem:[%s507 + $0xa4] sm:%s499] %v590
          %v592 = vld [vmem:[%s506 + $0xa4] sm:%s499]
          %593 = vst [vmem:[%s507 + $0xa8] sm:%s499] %v592
          %v594 = vld [vmem:[%s506 + $0xb4] sm:%s499]
          %595 = vst [vmem:[%s507 + $0xac] sm:%s499] %v594
          %v596 = vld [vmem:[%s506 + $0xa8] sm:%s499]
          %597 = vst [vmem:[%s507 + $0xb0] sm:%s499] %v596
          %v598 = vld [vmem:[%s506 + $0xb8] sm:%s499]
          %599 = vst [vmem:[%s507 + $0xb4] sm:%s499] %v598
          %v600 = vld [vmem:[%s506 + $0xac] sm:%s499]
          %601 = vst [vmem:[%s507 + $0xb8] sm:%s499] %v600
          %v602 = vld [vmem:[%s506 + $0xbc] sm:%s499]
          %603 = vst [vmem:[%s507 + $0xbc] sm:%s499] %v602
          %v604 = vld [vmem:[%s506 + $0xc0] sm:%s499]
          %605 = vst [vmem:[%s507 + $0xc0] sm:%s499] %v604
          %v606 = vld [vmem:[%s506 + $0xd0] sm:%s499]
          %607 = vst [vmem:[%s507 + $0xc4] sm:%s499] %v606
          %v608 = vld [vmem:[%s506 + $0xc4] sm:%s499]
          %609 = vst [vmem:[%s507 + $0xc8] sm:%s499] %v608
          %v610 = vld [vmem:[%s506 + $0xd4] sm:%s499]
          %611 = vst [vmem:[%s507 + $0xcc] sm:%s499] %v610
          %v612 = vld [vmem:[%s506 + $0xc8] sm:%s499]
          %613 = vst [vmem:[%s507 + $0xd0] sm:%s499] %v612
          %v614 = vld [vmem:[%s506 + $0xd8] sm:%s499]
          %615 = vst [vmem:[%s507 + $0xd4] sm:%s499] %v614
          %v616 = vld [vmem:[%s506 + $0xcc] sm:%s499]
          %617 = vst [vmem:[%s507 + $0xd8] sm:%s499] %v616
          %v618 = vld [vmem:[%s506 + $0xdc] sm:%s499]
          %619 = vst [vmem:[%s507 + $0xdc] sm:%s499] %v618
          %v620 = vld [vmem:[%s506 + $0xe0] sm:%s499]
          %621 = vst [vmem:[%s507 + $0xe0] sm:%s499] %v620
          %v622 = vld [vmem:[%s506 + $0xf0] sm:%s499]
          %623 = vst [vmem:[%s507 + $0xe4] sm:%s499] %v622
          %v624 = vld [vmem:[%s506 + $0xe4] sm:%s499]
          %625 = vst [vmem:[%s507 + $0xe8] sm:%s499] %v624
          %v626 = vld [vmem:[%s506 + $0xf4] sm:%s499]
          %627 = vst [vmem:[%s507 + $0xec] sm:%s499] %v626
          %v628 = vld [vmem:[%s506 + $0xe8] sm:%s499]
          %629 = vst [vmem:[%s507 + $0xf0] sm:%s499] %v628
          %v630 = vld [vmem:[%s506 + $0xf8] sm:%s499]
          %631 = vst [vmem:[%s507 + $0xf4] sm:%s499] %v630
          %v632 = vld [vmem:[%s506 + $0xec] sm:%s499]
          %633 = vst [vmem:[%s507 + $0xf8] sm:%s499] %v632
          %v634 = vld [vmem:[%s506 + $0xfc] sm:%s499]
          %635 = vst [vmem:[%s507 + $0xfc] sm:%s499] %v634
        $region97: #{seq2seq_forward.1} parent=84 // loop_footer
          %s505 = sadd.s32 1, %s501
        $region98: #{seq2seq_forward.1} parent=84 // loop_footer_branch
          %500 = sbr.rel target = $region94
        $region99: #{seq2seq_forward.1} parent=84 // loop_exit
          _
      $region85: #{seq2seq_forward.1} parent=69 // pred_fallthru
        _
    $region70: #{seq2seq_forward.1} parent=1 // pred_fallthru
      _
    // Predicated region
    $region71: #{seq2seq_forward.1} parent=1 // pred_check
      %p341 = pneg %p337
    $region72: #{seq2seq_forward.1} parent=1 // pred_check_branch
      %343 = sbr.rel (%p341) target = $region74
    $region73: #{seq2seq_forward.1} parent=1 // pred_region
      %s344 = sshllo.u32 0, 4
      loop: start=0, step=1, limit=1
      $region75: #{seq2seq_forward.1} parent=73 // loop_pre_header
        _
      $region76: #{seq2seq_forward.1} parent=73 // loop_header
        %s346 = sphi 0, %s350
        %p347 = scmp.ge.s32.totalorder %s346, 1
        %s351 = sphi %s8, %s8
        %s352 = sphi [#allocation6], [#allocation6]
      $region77: #{seq2seq_forward.1} parent=73 // loop_header_branch
        %349 = sbr.rel (%p347) target = $region81
      $region78: #{seq2seq_forward.1} parent=73 // loop_body
        %v353 = vld [vmem:[%s351] sm:%s344]
        %354 = vst [vmem:[%s352] sm:%s344] %v353
        %v355 = vld [vmem:[%s351 + $0x10] sm:%s344]
        %356 = vst [vmem:[%s352 + $0x4] sm:%s344] %v355
        %v357 = vld [vmem:[%s351 + $0x4] sm:%s344]
        %358 = vst [vmem:[%s352 + $0x8] sm:%s344] %v357
        %v359 = vld [vmem:[%s351 + $0x14] sm:%s344]
        %360 = vst [vmem:[%s352 + $0xc] sm:%s344] %v359
        %v361 = vld [vmem:[%s351 + $0x8] sm:%s344]
        %362 = vst [vmem:[%s352 + $0x10] sm:%s344] %v361
        %v363 = vld [vmem:[%s351 + $0x18] sm:%s344]
        %364 = vst [vmem:[%s352 + $0x14] sm:%s344] %v363
        %v365 = vld [vmem:[%s351 + $0xc] sm:%s344]
        %366 = vst [vmem:[%s352 + $0x18] sm:%s344] %v365
        %v367 = vld [vmem:[%s351 + $0x1c] sm:%s344]
        %368 = vst [vmem:[%s352 + $0x1c] sm:%s344] %v367
        %v369 = vld [vmem:[%s351 + $0x20] sm:%s344]
        %370 = vst [vmem:[%s352 + $0x20] sm:%s344] %v369
        %v371 = vld [vmem:[%s351 + $0x30] sm:%s344]
        %372 = vst [vmem:[%s352 + $0x24] sm:%s344] %v371
        %v373 = vld [vmem:[%s351 + $0x24] sm:%s344]
        %374 = vst [vmem:[%s352 + $0x28] sm:%s344] %v373
        %v375 = vld [vmem:[%s351 + $0x34] sm:%s344]
        %376 = vst [vmem:[%s352 + $0x2c] sm:%s344] %v375
        %v377 = vld [vmem:[%s351 + $0x28] sm:%s344]
        %378 = vst [vmem:[%s352 + $0x30] sm:%s344] %v377
        %v379 = vld [vmem:[%s351 + $0x38] sm:%s344]
        %380 = vst [vmem:[%s352 + $0x34] sm:%s344] %v379
        %v381 = vld [vmem:[%s351 + $0x2c] sm:%s344]
        %382 = vst [vmem:[%s352 + $0x38] sm:%s344] %v381
        %v383 = vld [vmem:[%s351 + $0x3c] sm:%s344]
        %384 = vst [vmem:[%s352 + $0x3c] sm:%s344] %v383
        %v385 = vld [vmem:[%s351 + $0x40] sm:%s344]
        %386 = vst [vmem:[%s352 + $0x40] sm:%s344] %v385
        %v387 = vld [vmem:[%s351 + $0x50] sm:%s344]
        %388 = vst [vmem:[%s352 + $0x44] sm:%s344] %v387
        %v389 = vld [vmem:[%s351 + $0x44] sm:%s344]
        %390 = vst [vmem:[%s352 + $0x48] sm:%s344] %v389
        %v391 = vld [vmem:[%s351 + $0x54] sm:%s344]
        %392 = vst [vmem:[%s352 + $0x4c] sm:%s344] %v391
        %v393 = vld [vmem:[%s351 + $0x48] sm:%s344]
        %394 = vst [vmem:[%s352 + $0x50] sm:%s344] %v393
        %v395 = vld [vmem:[%s351 + $0x58] sm:%s344]
        %396 = vst [vmem:[%s352 + $0x54] sm:%s344] %v395
        %v397 = vld [vmem:[%s351 + $0x4c] sm:%s344]
        %398 = vst [vmem:[%s352 + $0x58] sm:%s344] %v397
        %v399 = vld [vmem:[%s351 + $0x5c] sm:%s344]
        %400 = vst [vmem:[%s352 + $0x5c] sm:%s344] %v399
        %v401 = vld [vmem:[%s351 + $0x60] sm:%s344]
        %402 = vst [vmem:[%s352 + $0x60] sm:%s344] %v401
        %v403 = vld [vmem:[%s351 + $0x70] sm:%s344]
        %404 = vst [vmem:[%s352 + $0x64] sm:%s344] %v403
        %v405 = vld [vmem:[%s351 + $0x64] sm:%s344]
        %406 = vst [vmem:[%s352 + $0x68] sm:%s344] %v405
        %v407 = vld [vmem:[%s351 + $0x74] sm:%s344]
        %408 = vst [vmem:[%s352 + $0x6c] sm:%s344] %v407
        %v409 = vld [vmem:[%s351 + $0x68] sm:%s344]
        %410 = vst [vmem:[%s352 + $0x70] sm:%s344] %v409
        %v411 = vld [vmem:[%s351 + $0x78] sm:%s344]
        %412 = vst [vmem:[%s352 + $0x74] sm:%s344] %v411
        %v413 = vld [vmem:[%s351 + $0x6c] sm:%s344]
        %414 = vst [vmem:[%s352 + $0x78] sm:%s344] %v413
        %v415 = vld [vmem:[%s351 + $0x7c] sm:%s344]
        %416 = vst [vmem:[%s352 + $0x7c] sm:%s344] %v415
        %v417 = vld [vmem:[%s351 + $0x80] sm:%s344]
        %418 = vst [vmem:[%s352 + $0x80] sm:%s344] %v417
        %v419 = vld [vmem:[%s351 + $0x90] sm:%s344]
        %420 = vst [vmem:[%s352 + $0x84] sm:%s344] %v419
        %v421 = vld [vmem:[%s351 + $0x84] sm:%s344]
        %422 = vst [vmem:[%s352 + $0x88] sm:%s344] %v421
        %v423 = vld [vmem:[%s351 + $0x94] sm:%s344]
        %424 = vst [vmem:[%s352 + $0x8c] sm:%s344] %v423
        %v425 = vld [vmem:[%s351 + $0x88] sm:%s344]
        %426 = vst [vmem:[%s352 + $0x90] sm:%s344] %v425
        %v427 = vld [vmem:[%s351 + $0x98] sm:%s344]
        %428 = vst [vmem:[%s352 + $0x94] sm:%s344] %v427
        %v429 = vld [vmem:[%s351 + $0x8c] sm:%s344]
        %430 = vst [vmem:[%s352 + $0x98] sm:%s344] %v429
        %v431 = vld [vmem:[%s351 + $0x9c] sm:%s344]
        %432 = vst [vmem:[%s352 + $0x9c] sm:%s344] %v431
        %v433 = vld [vmem:[%s351 + $0xa0] sm:%s344]
        %434 = vst [vmem:[%s352 + $0xa0] sm:%s344] %v433
        %v435 = vld [vmem:[%s351 + $0xb0] sm:%s344]
        %436 = vst [vmem:[%s352 + $0xa4] sm:%s344] %v435
        %v437 = vld [vmem:[%s351 + $0xa4] sm:%s344]
        %438 = vst [vmem:[%s352 + $0xa8] sm:%s344] %v437
        %v439 = vld [vmem:[%s351 + $0xb4] sm:%s344]
        %440 = vst [vmem:[%s352 + $0xac] sm:%s344] %v439
        %v441 = vld [vmem:[%s351 + $0xa8] sm:%s344]
        %442 = vst [vmem:[%s352 + $0xb0] sm:%s344] %v441
        %v443 = vld [vmem:[%s351 + $0xb8] sm:%s344]
        %444 = vst [vmem:[%s352 + $0xb4] sm:%s344] %v443
        %v445 = vld [vmem:[%s351 + $0xac] sm:%s344]
        %446 = vst [vmem:[%s352 + $0xb8] sm:%s344] %v445
        %v447 = vld [vmem:[%s351 + $0xbc] sm:%s344]
        %448 = vst [vmem:[%s352 + $0xbc] sm:%s344] %v447
        %v449 = vld [vmem:[%s351 + $0xc0] sm:%s344]
        %450 = vst [vmem:[%s352 + $0xc0] sm:%s344] %v449
        %v451 = vld [vmem:[%s351 + $0xd0] sm:%s344]
        %452 = vst [vmem:[%s352 + $0xc4] sm:%s344] %v451
        %v453 = vld [vmem:[%s351 + $0xc4] sm:%s344]
        %454 = vst [vmem:[%s352 + $0xc8] sm:%s344] %v453
        %v455 = vld [vmem:[%s351 + $0xd4] sm:%s344]
        %456 = vst [vmem:[%s352 + $0xcc] sm:%s344] %v455
        %v457 = vld [vmem:[%s351 + $0xc8] sm:%s344]
        %458 = vst [vmem:[%s352 + $0xd0] sm:%s344] %v457
        %v459 = vld [vmem:[%s351 + $0xd8] sm:%s344]
        %460 = vst [vmem:[%s352 + $0xd4] sm:%s344] %v459
        %v461 = vld [vmem:[%s351 + $0xcc] sm:%s344]
        %462 = vst [vmem:[%s352 + $0xd8] sm:%s344] %v461
        %v463 = vld [vmem:[%s351 + $0xdc] sm:%s344]
        %464 = vst [vmem:[%s352 + $0xdc] sm:%s344] %v463
        %v465 = vld [vmem:[%s351 + $0xe0] sm:%s344]
        %466 = vst [vmem:[%s352 + $0xe0] sm:%s344] %v465
        %v467 = vld [vmem:[%s351 + $0xf0] sm:%s344]
        %468 = vst [vmem:[%s352 + $0xe4] sm:%s344] %v467
        %v469 = vld [vmem:[%s351 + $0xe4] sm:%s344]
        %470 = vst [vmem:[%s352 + $0xe8] sm:%s344] %v469
        %v471 = vld [vmem:[%s351 + $0xf4] sm:%s344]
        %472 = vst [vmem:[%s352 + $0xec] sm:%s344] %v471
        %v473 = vld [vmem:[%s351 + $0xe8] sm:%s344]
        %474 = vst [vmem:[%s352 + $0xf0] sm:%s344] %v473
        %v475 = vld [vmem:[%s351 + $0xf8] sm:%s344]
        %476 = vst [vmem:[%s352 + $0xf4] sm:%s344] %v475
        %v477 = vld [vmem:[%s351 + $0xec] sm:%s344]
        %478 = vst [vmem:[%s352 + $0xf8] sm:%s344] %v477
        %v479 = vld [vmem:[%s351 + $0xfc] sm:%s344]
        %480 = vst [vmem:[%s352 + $0xfc] sm:%s344] %v479
      $region79: #{seq2seq_forward.1} parent=73 // loop_footer
        %s350 = sadd.s32 1, %s346
      $region80: #{seq2seq_forward.1} parent=73 // loop_footer_branch
        %345 = sbr.rel target = $region76
      $region81: #{seq2seq_forward.1} parent=73 // loop_exit
        _
    $region74: #{seq2seq_forward.1} parent=1 // pred_fallthru
      _
    // Predicated region
    $region100: #{seq2seq_forward.1} parent=1 // pred_check
      _
    $region101: #{seq2seq_forward.1} parent=1 // pred_check_branch
      %638 = sbr.rel (0) target = $region103
    $region102: #{seq2seq_forward.1} parent=1 // pred_region
      %639 = vsyncadd %s335, 4096
    $region103: #{seq2seq_forward.1} parent=1 // pred_fallthru
      _
    %s640 = scalar_lea.sflag [#allocation9], 2
    %s642 = sshll.u32 1, 14
    %s643 = sxor.u32 4294967295, %s642
    %s645 = sld [smem:[#allocation0]]
    %s646 = sadd.s32 2, %s645
    %s648 = sshll.u32 7, 26
    %s649 = sxor.u32 4294967295, %s648
    %s650 = sand.u32 0, %s649
    %s651 = sshll.u32 %s646, 26
    %s652 = sor.u32 %s650, %s651
    %s653 = sshll.u32 [#allocation7], 4
    %s654 = int_to_ptr.vmem [resolvable:$true] %s653
    %657 = sst [smem:[#allocation13]] 512
    %s658 = scalar_lea.smem [#allocation13], 1
    %659 = sst [smem:[%s658]] 512
    %s660 = scalar_lea.smem [#allocation13], 2
    %661 = sst [smem:[%s660]] 4
    %s662 = scalar_lea.smem [#allocation13], 3
    %663 = sst [smem:[%s662]] 64
    %s664 = scalar_lea.smem [#allocation13], 4
    %665 = sst [smem:[%s664]] 128
    %s666 = scalar_lea.smem [#allocation13], 5
    %667 = sst [smem:[%s666]] 2
    %s668 = scalar_lea.smem [#allocation13], 6
    %669 = sst [smem:[%s668]] 256
    %s670 = scalar_lea.smem [#allocation13], 7
    %671 = sst [smem:[%s670]] 64
    %s672 = scalar_lea.smem [#allocation13], 8
    %673 = sst [smem:[%s672]] 4
    %675 = dma.general %s9, 4096, %s654, %s640, [#allocation12], [#allocation13], %s652, 0
    %s676 = scalar_lea.sflag [#allocation9], 3
    %p678 = scmp.lt.u32.totalorder 4, 8
    %p679 = pneg %p678
    // Predicated region
    $region104: #{seq2seq_forward.1} parent=1 // pred_check
      _
    $region105: #{seq2seq_forward.1} parent=1 // pred_check_branch
      %681 = sbr.rel (%p678) target = $region107
    $region106: #{seq2seq_forward.1} parent=1 // pred_region
      %s758 = sand.u32 4, 7
      %p759 = scmp.eq.s32.totalorder %s758, 0
      %p760 = pneg %p759
      // Predicated region
      $region119: #{seq2seq_forward.1} parent=106 // pred_check
        _
      $region120: #{seq2seq_forward.1} parent=106 // pred_check_branch
        %762 = sbr.rel (%p759) target = $region122
      $region121: #{seq2seq_forward.1} parent=106 // pred_region
        %s763 = sand.u32 4, 7
        %s764 = ssub.s32 4, %s763
        %s765 = scalar_lea.vmem %s10, %s764
        %s766 = ssub.s32 4, %s763
        %s767 = scalar_lea.vmem [#allocation8], %s766
        loop: start=0, step=1, limit=1
        $region123: #{seq2seq_forward.1} parent=121 // loop_pre_header
          _
        $region124: #{seq2seq_forward.1} parent=121 // loop_header
          %s769 = sphi 0, %s773
          %p770 = scmp.ge.s32.totalorder %s769, 1
          %s774 = sphi %s10, %s10
          %s775 = sphi [#allocation8], [#allocation8]
        $region125: #{seq2seq_forward.1} parent=121 // loop_header_branch
          %772 = sbr.rel (%p770) target = $region129
        $region126: #{seq2seq_forward.1} parent=121 // loop_body
          _
        $region127: #{seq2seq_forward.1} parent=121 // loop_footer
          %s773 = sadd.s32 1, %s769
        $region128: #{seq2seq_forward.1} parent=121 // loop_footer_branch
          %768 = sbr.rel target = $region124
        $region129: #{seq2seq_forward.1} parent=121 // loop_exit
          _
        %s776 = sshllo.u32 0, %s763
        loop: start=0, step=1, limit=1
        $region130: #{seq2seq_forward.1} parent=121 // loop_pre_header
          _
        $region131: #{seq2seq_forward.1} parent=121 // loop_header
          %s778 = sphi 0, %s782
          %p779 = scmp.ge.s32.totalorder %s778, 1
          %s783 = sphi %s765, %s765
          %s784 = sphi %s767, %s767
        $region132: #{seq2seq_forward.1} parent=121 // loop_header_branch
          %781 = sbr.rel (%p779) target = $region136
        $region133: #{seq2seq_forward.1} parent=121 // loop_body
          %v785 = vld [vmem:[%s783] sm:%s776]
          %786 = vst [vmem:[%s784] sm:%s776] %v785
          %v787 = vld [vmem:[%s783 + $0x8] sm:%s776]
          %788 = vst [vmem:[%s784 + $0x4] sm:%s776] %v787
          %v789 = vld [vmem:[%s783 + $0x4] sm:%s776]
          %790 = vst [vmem:[%s784 + $0x8] sm:%s776] %v789
          %v791 = vld [vmem:[%s783 + $0xc] sm:%s776]
          %792 = vst [vmem:[%s784 + $0xc] sm:%s776] %v791
          %v793 = vld [vmem:[%s783 + $0x10] sm:%s776]
          %794 = vst [vmem:[%s784 + $0x10] sm:%s776] %v793
          %v795 = vld [vmem:[%s783 + $0x18] sm:%s776]
          %796 = vst [vmem:[%s784 + $0x14] sm:%s776] %v795
          %v797 = vld [vmem:[%s783 + $0x14] sm:%s776]
          %798 = vst [vmem:[%s784 + $0x18] sm:%s776] %v797
          %v799 = vld [vmem:[%s783 + $0x1c] sm:%s776]
          %800 = vst [vmem:[%s784 + $0x1c] sm:%s776] %v799
          %v801 = vld [vmem:[%s783 + $0x20] sm:%s776]
          %802 = vst [vmem:[%s784 + $0x20] sm:%s776] %v801
          %v803 = vld [vmem:[%s783 + $0x28] sm:%s776]
          %804 = vst [vmem:[%s784 + $0x24] sm:%s776] %v803
          %v805 = vld [vmem:[%s783 + $0x24] sm:%s776]
          %806 = vst [vmem:[%s784 + $0x28] sm:%s776] %v805
          %v807 = vld [vmem:[%s783 + $0x2c] sm:%s776]
          %808 = vst [vmem:[%s784 + $0x2c] sm:%s776] %v807
          %v809 = vld [vmem:[%s783 + $0x30] sm:%s776]
          %810 = vst [vmem:[%s784 + $0x30] sm:%s776] %v809
          %v811 = vld [vmem:[%s783 + $0x38] sm:%s776]
          %812 = vst [vmem:[%s784 + $0x34] sm:%s776] %v811
          %v813 = vld [vmem:[%s783 + $0x34] sm:%s776]
          %814 = vst [vmem:[%s784 + $0x38] sm:%s776] %v813
          %v815 = vld [vmem:[%s783 + $0x3c] sm:%s776]
          %816 = vst [vmem:[%s784 + $0x3c] sm:%s776] %v815
          %v817 = vld [vmem:[%s783 + $0x40] sm:%s776]
          %818 = vst [vmem:[%s784 + $0x40] sm:%s776] %v817
          %v819 = vld [vmem:[%s783 + $0x48] sm:%s776]
          %820 = vst [vmem:[%s784 + $0x44] sm:%s776] %v819
          %v821 = vld [vmem:[%s783 + $0x44] sm:%s776]
          %822 = vst [vmem:[%s784 + $0x48] sm:%s776] %v821
          %v823 = vld [vmem:[%s783 + $0x4c] sm:%s776]
          %824 = vst [vmem:[%s784 + $0x4c] sm:%s776] %v823
          %v825 = vld [vmem:[%s783 + $0x50] sm:%s776]
          %826 = vst [vmem:[%s784 + $0x50] sm:%s776] %v825
          %v827 = vld [vmem:[%s783 + $0x58] sm:%s776]
          %828 = vst [vmem:[%s784 + $0x54] sm:%s776] %v827
          %v829 = vld [vmem:[%s783 + $0x54] sm:%s776]
          %830 = vst [vmem:[%s784 + $0x58] sm:%s776] %v829
          %v831 = vld [vmem:[%s783 + $0x5c] sm:%s776]
          %832 = vst [vmem:[%s784 + $0x5c] sm:%s776] %v831
          %v833 = vld [vmem:[%s783 + $0x60] sm:%s776]
          %834 = vst [vmem:[%s784 + $0x60] sm:%s776] %v833
          %v835 = vld [vmem:[%s783 + $0x68] sm:%s776]
          %836 = vst [vmem:[%s784 + $0x64] sm:%s776] %v835
          %v837 = vld [vmem:[%s783 + $0x64] sm:%s776]
          %838 = vst [vmem:[%s784 + $0x68] sm:%s776] %v837
          %v839 = vld [vmem:[%s783 + $0x6c] sm:%s776]
          %840 = vst [vmem:[%s784 + $0x6c] sm:%s776] %v839
          %v841 = vld [vmem:[%s783 + $0x70] sm:%s776]
          %842 = vst [vmem:[%s784 + $0x70] sm:%s776] %v841
          %v843 = vld [vmem:[%s783 + $0x78] sm:%s776]
          %844 = vst [vmem:[%s784 + $0x74] sm:%s776] %v843
          %v845 = vld [vmem:[%s783 + $0x74] sm:%s776]
          %846 = vst [vmem:[%s784 + $0x78] sm:%s776] %v845
          %v847 = vld [vmem:[%s783 + $0x7c] sm:%s776]
          %848 = vst [vmem:[%s784 + $0x7c] sm:%s776] %v847
        $region134: #{seq2seq_forward.1} parent=121 // loop_footer
          %s782 = sadd.s32 1, %s778
        $region135: #{seq2seq_forward.1} parent=121 // loop_footer_branch
          %777 = sbr.rel target = $region131
        $region136: #{seq2seq_forward.1} parent=121 // loop_exit
          _
      $region122: #{seq2seq_forward.1} parent=106 // pred_fallthru
        _
    $region107: #{seq2seq_forward.1} parent=1 // pred_fallthru
      _
    // Predicated region
    $region108: #{seq2seq_forward.1} parent=1 // pred_check
      %p682 = pneg %p678
    $region109: #{seq2seq_forward.1} parent=1 // pred_check_branch
      %684 = sbr.rel (%p682) target = $region111
    $region110: #{seq2seq_forward.1} parent=1 // pred_region
      %s685 = sshllo.u32 0, 4
      loop: start=0, step=1, limit=1
      $region112: #{seq2seq_forward.1} parent=110 // loop_pre_header
        _
      $region113: #{seq2seq_forward.1} parent=110 // loop_header
        %s687 = sphi 0, %s691
        %p688 = scmp.ge.s32.totalorder %s687, 1
        %s692 = sphi %s10, %s10
        %s693 = sphi [#allocation8], [#allocation8]
      $region114: #{seq2seq_forward.1} parent=110 // loop_header_branch
        %690 = sbr.rel (%p688) target = $region118
      $region115: #{seq2seq_forward.1} parent=110 // loop_body
        %v694 = vld [vmem:[%s692] sm:%s685]
        %695 = vst [vmem:[%s693] sm:%s685] %v694
        %v696 = vld [vmem:[%s692 + $0x8] sm:%s685]
        %697 = vst [vmem:[%s693 + $0x4] sm:%s685] %v696
        %v698 = vld [vmem:[%s692 + $0x4] sm:%s685]
        %699 = vst [vmem:[%s693 + $0x8] sm:%s685] %v698
        %v700 = vld [vmem:[%s692 + $0xc] sm:%s685]
        %701 = vst [vmem:[%s693 + $0xc] sm:%s685] %v700
        %v702 = vld [vmem:[%s692 + $0x10] sm:%s685]
        %703 = vst [vmem:[%s693 + $0x10] sm:%s685] %v702
        %v704 = vld [vmem:[%s692 + $0x18] sm:%s685]
        %705 = vst [vmem:[%s693 + $0x14] sm:%s685] %v704
        %v706 = vld [vmem:[%s692 + $0x14] sm:%s685]
        %707 = vst [vmem:[%s693 + $0x18] sm:%s685] %v706
        %v708 = vld [vmem:[%s692 + $0x1c] sm:%s685]
        %709 = vst [vmem:[%s693 + $0x1c] sm:%s685] %v708
        %v710 = vld [vmem:[%s692 + $0x20] sm:%s685]
        %711 = vst [vmem:[%s693 + $0x20] sm:%s685] %v710
        %v712 = vld [vmem:[%s692 + $0x28] sm:%s685]
        %713 = vst [vmem:[%s693 + $0x24] sm:%s685] %v712
        %v714 = vld [vmem:[%s692 + $0x24] sm:%s685]
        %715 = vst [vmem:[%s693 + $0x28] sm:%s685] %v714
        %v716 = vld [vmem:[%s692 + $0x2c] sm:%s685]
        %717 = vst [vmem:[%s693 + $0x2c] sm:%s685] %v716
        %v718 = vld [vmem:[%s692 + $0x30] sm:%s685]
        %719 = vst [vmem:[%s693 + $0x30] sm:%s685] %v718
        %v720 = vld [vmem:[%s692 + $0x38] sm:%s685]
        %721 = vst [vmem:[%s693 + $0x34] sm:%s685] %v720
        %v722 = vld [vmem:[%s692 + $0x34] sm:%s685]
        %723 = vst [vmem:[%s693 + $0x38] sm:%s685] %v722
        %v724 = vld [vmem:[%s692 + $0x3c] sm:%s685]
        %725 = vst [vmem:[%s693 + $0x3c] sm:%s685] %v724
        %v726 = vld [vmem:[%s692 + $0x40] sm:%s685]
        %727 = vst [vmem:[%s693 + $0x40] sm:%s685] %v726
        %v728 = vld [vmem:[%s692 + $0x48] sm:%s685]
        %729 = vst [vmem:[%s693 + $0x44] sm:%s685] %v728
        %v730 = vld [vmem:[%s692 + $0x44] sm:%s685]
        %731 = vst [vmem:[%s693 + $0x48] sm:%s685] %v730
        %v732 = vld [vmem:[%s692 + $0x4c] sm:%s685]
        %733 = vst [vmem:[%s693 + $0x4c] sm:%s685] %v732
        %v734 = vld [vmem:[%s692 + $0x50] sm:%s685]
        %735 = vst [vmem:[%s693 + $0x50] sm:%s685] %v734
        %v736 = vld [vmem:[%s692 + $0x58] sm:%s685]
        %737 = vst [vmem:[%s693 + $0x54] sm:%s685] %v736
        %v738 = vld [vmem:[%s692 + $0x54] sm:%s685]
        %739 = vst [vmem:[%s693 + $0x58] sm:%s685] %v738
        %v740 = vld [vmem:[%s692 + $0x5c] sm:%s685]
        %741 = vst [vmem:[%s693 + $0x5c] sm:%s685] %v740
        %v742 = vld [vmem:[%s692 + $0x60] sm:%s685]
        %743 = vst [vmem:[%s693 + $0x60] sm:%s685] %v742
        %v744 = vld [vmem:[%s692 + $0x68] sm:%s685]
        %745 = vst [vmem:[%s693 + $0x64] sm:%s685] %v744
        %v746 = vld [vmem:[%s692 + $0x64] sm:%s685]
        %747 = vst [vmem:[%s693 + $0x68] sm:%s685] %v746
        %v748 = vld [vmem:[%s692 + $0x6c] sm:%s685]
        %749 = vst [vmem:[%s693 + $0x6c] sm:%s685] %v748
        %v750 = vld [vmem:[%s692 + $0x70] sm:%s685]
        %751 = vst [vmem:[%s693 + $0x70] sm:%s685] %v750
        %v752 = vld [vmem:[%s692 + $0x78] sm:%s685]
        %753 = vst [vmem:[%s693 + $0x74] sm:%s685] %v752
        %v754 = vld [vmem:[%s692 + $0x74] sm:%s685]
        %755 = vst [vmem:[%s693 + $0x78] sm:%s685] %v754
        %v756 = vld [vmem:[%s692 + $0x7c] sm:%s685]
        %757 = vst [vmem:[%s693 + $0x7c] sm:%s685] %v756
      $region116: #{seq2seq_forward.1} parent=110 // loop_footer
        %s691 = sadd.s32 1, %s687
      $region117: #{seq2seq_forward.1} parent=110 // loop_footer_branch
        %686 = sbr.rel target = $region113
      $region118: #{seq2seq_forward.1} parent=110 // loop_exit
        _
    $region111: #{seq2seq_forward.1} parent=1 // pred_fallthru
      _
    // Predicated region
    $region137: #{seq2seq_forward.1} parent=1 // pred_check
      _
    $region138: #{seq2seq_forward.1} parent=1 // pred_check_branch
      %851 = sbr.rel (0) target = $region140
    $region139: #{seq2seq_forward.1} parent=1 // pred_region
      %852 = vsyncadd %s676, 2048
    $region140: #{seq2seq_forward.1} parent=1 // pred_fallthru
      _
    %v853 = vld [vmem:[%s0] sm:$0xff]
    %v854 = vld [vmem:[%s0 + $0x8] sm:$0xff]
    %v855 = vld [vmem:[%s0 + $0x10] sm:$0xff]
    %v856 = vld [vmem:[%s0 + $0x18] sm:$0xff]
    %v857 = vld [vmem:[%s0 + $0x20] sm:$0xff]
    %v858 = vld [vmem:[%s0 + $0x28] sm:$0xff]
    %v859 = vld [vmem:[%s0 + $0x30] sm:$0xff]
    %v860 = vld [vmem:[%s0 + $0x38] sm:$0xff]
    %v861 = vpack.c.bf16 %v854, %v853
    %v862 = vpack.c.bf16 %v856, %v855
    %v863 = vpack.c.bf16 %v858, %v857
    %v864 = vpack.c.bf16 %v860, %v859
    %v865 = vld [vmem:[%s2] sm:$0xff]
    %v866 = vld [vmem:[%s2 + $0x8] sm:$0xff]
    %v867 = vld [vmem:[%s2 + $0x10] sm:$0xff]
    %v868 = vld [vmem:[%s2 + $0x18] sm:$0xff]
    %v869 = vld [vmem:[%s2 + $0x20] sm:$0xff]
    %v870 = vld [vmem:[%s2 + $0x28] sm:$0xff]
    %v871 = vld [vmem:[%s2 + $0x30] sm:$0xff]
    %v872 = vld [vmem:[%s2 + $0x38] sm:$0xff]
    %v873 = vld [vmem:[%s2 + $0x40] sm:$0xff]
    %v874 = vld [vmem:[%s2 + $0x48] sm:$0xff]
    %v875 = vld [vmem:[%s2 + $0x50] sm:$0xff]
    %v876 = vld [vmem:[%s2 + $0x58] sm:$0xff]
    %v877 = vld [vmem:[%s2 + $0x60] sm:$0xff]
    %v878 = vld [vmem:[%s2 + $0x68] sm:$0xff]
    %v879 = vld [vmem:[%s2 + $0x70] sm:$0xff]
    %v880 = vld [vmem:[%s2 + $0x78] sm:$0xff]
    %v881 = vld [vmem:[%s2 + $0x80] sm:$0xff]
    %v882 = vld [vmem:[%s2 + $0x88] sm:$0xff]
    %v883 = vld [vmem:[%s2 + $0x90] sm:$0xff]
    %v884 = vld [vmem:[%s2 + $0x98] sm:$0xff]
    %v885 = vld [vmem:[%s2 + $0xa0] sm:$0xff]
    %v886 = vld [vmem:[%s2 + $0xa8] sm:$0xff]
    %v887 = vld [vmem:[%s2 + $0xb0] sm:$0xff]
    %v888 = vld [vmem:[%s2 + $0xb8] sm:$0xff]
    %v889 = vld [vmem:[%s2 + $0xc0] sm:$0xff]
    %v890 = vld [vmem:[%s2 + $0xc8] sm:$0xff]
    %v891 = vld [vmem:[%s2 + $0xd0] sm:$0xff]
    %v892 = vld [vmem:[%s2 + $0xd8] sm:$0xff]
    %v893 = vld [vmem:[%s2 + $0xe0] sm:$0xff]
    %v894 = vld [vmem:[%s2 + $0xe8] sm:$0xff]
    %v895 = vld [vmem:[%s2 + $0xf0] sm:$0xff]
    %v896 = vld [vmem:[%s2 + $0xf8] sm:$0xff]
    %v897 = vld [vmem:[%s4] sm:$0xf]
    %v899 = vlaneseq
    %v900 = vshrl.u32 %v899, 7
    %v901 = vsub.s32 0, %v900
    %v902 = vrot.slane %v897, %v901
    %v903 = vlaneseq
    %v904 = vshrl.u32 %v903, 7
    %v905 = vsub.s32 1, %v904
    %v906 = vrot.slane %v897, %v905
    %v907 = vlaneseq
    %v908 = vshrl.u32 %v907, 7
    %v909 = vsub.s32 2, %v908
    %v910 = vrot.slane %v897, %v909
    %v911 = vlaneseq
    %v912 = vshrl.u32 %v911, 7
    %v913 = vsub.s32 3, %v912
    %v914 = vrot.slane %v897, %v913
    %v951 = vunpack.c.l.b16 %v865
    %v952 = vunpack.c.h.b16 %v865
    %v953 = vunpack.c.l.b16 %v866
    %v954 = vunpack.c.h.b16 %v866
    %v955 = vunpack.c.l.b16 %v867
    %v956 = vunpack.c.h.b16 %v867
    %v957 = vunpack.c.l.b16 %v868
    %v958 = vunpack.c.h.b16 %v868
    %v959 = vunpack.c.l.b16 %v869
    %v960 = vunpack.c.h.b16 %v869
    %v961 = vunpack.c.l.b16 %v870
    %v962 = vunpack.c.h.b16 %v870
    %v963 = vunpack.c.l.b16 %v871
    %v964 = vunpack.c.h.b16 %v871
    %v965 = vunpack.c.l.b16 %v872
    %v966 = vunpack.c.h.b16 %v872
    %v967 = vunpack.c.l.b16 %v873
    %v968 = vunpack.c.h.b16 %v873
    %v969 = vunpack.c.l.b16 %v874
    %v970 = vunpack.c.h.b16 %v874
    %v971 = vunpack.c.l.b16 %v875
    %v972 = vunpack.c.h.b16 %v875
    %v973 = vunpack.c.l.b16 %v876
    %v974 = vunpack.c.h.b16 %v876
    %v975 = vunpack.c.l.b16 %v877
    %v976 = vunpack.c.h.b16 %v877
    %v977 = vunpack.c.l.b16 %v878
    %v978 = vunpack.c.h.b16 %v878
    %v979 = vunpack.c.l.b16 %v879
    %v980 = vunpack.c.h.b16 %v879
    %v981 = vunpack.c.l.b16 %v880
    %v982 = vunpack.c.h.b16 %v880
    %v983 = vunpack.c.l.b16 %v881
    %v984 = vunpack.c.h.b16 %v881
    %v985 = vunpack.c.l.b16 %v882
    %v986 = vunpack.c.h.b16 %v882
    %v987 = vunpack.c.l.b16 %v883
    %v988 = vunpack.c.h.b16 %v883
    %v989 = vunpack.c.l.b16 %v884
    %v990 = vunpack.c.h.b16 %v884
    %v991 = vunpack.c.l.b16 %v885
    %v992 = vunpack.c.h.b16 %v885
    %v993 = vunpack.c.l.b16 %v886
    %v994 = vunpack.c.h.b16 %v886
    %v995 = vunpack.c.l.b16 %v887
    %v996 = vunpack.c.h.b16 %v887
    %v997 = vunpack.c.l.b16 %v888
    %v998 = vunpack.c.h.b16 %v888
    %v999 = vunpack.c.l.b16 %v889
    %v1000 = vunpack.c.h.b16 %v889
    %v1001 = vunpack.c.l.b16 %v890
    %v1002 = vunpack.c.h.b16 %v890
    %v1003 = vunpack.c.l.b16 %v891
    %v1004 = vunpack.c.h.b16 %v891
    %v1005 = vunpack.c.l.b16 %v892
    %v1006 = vunpack.c.h.b16 %v892
    %v1007 = vunpack.c.l.b16 %v893
    %v1008 = vunpack.c.h.b16 %v893
    %v1009 = vunpack.c.l.b16 %v894
    %v1010 = vunpack.c.h.b16 %v894
    %v1011 = vunpack.c.l.b16 %v895
    %v1012 = vunpack.c.h.b16 %v895
    %v1013 = vunpack.c.l.b16 %v896
    %v1014 = vunpack.c.h.b16 %v896
    %v1015 = vpack.c.b16 %v955, %v951
    %v1016 = vpack.c.b16 %v956, %v952
    %v1017 = vpack.c.b16 %v957, %v953
    %v1018 = vpack.c.b16 %v958, %v954
    %v1019 = vpack.c.b16 %v963, %v959
    %v1020 = vpack.c.b16 %v964, %v960
    %v1021 = vpack.c.b16 %v965, %v961
    %v1022 = vpack.c.b16 %v966, %v962
    %v1023 = vpack.c.b16 %v971, %v967
    %v1024 = vpack.c.b16 %v972, %v968
    %v1025 = vpack.c.b16 %v973, %v969
    %v1026 = vpack.c.b16 %v974, %v970
    %v1027 = vpack.c.b16 %v979, %v975
    %v1028 = vpack.c.b16 %v980, %v976
    %v1029 = vpack.c.b16 %v981, %v977
    %v1030 = vpack.c.b16 %v982, %v978
    %v1031 = vpack.c.b16 %v987, %v983
    %v1032 = vpack.c.b16 %v988, %v984
    %v1033 = vpack.c.b16 %v989, %v985
    %v1034 = vpack.c.b16 %v990, %v986
    %v1035 = vpack.c.b16 %v995, %v991
    %v1036 = vpack.c.b16 %v996, %v992
    %v1037 = vpack.c.b16 %v997, %v993
    %v1038 = vpack.c.b16 %v998, %v994
    %v1039 = vpack.c.b16 %v1003, %v999
    %v1040 = vpack.c.b16 %v1004, %v1000
    %v1041 = vpack.c.b16 %v1005, %v1001
    %v1042 = vpack.c.b16 %v1006, %v1002
    %v1043 = vpack.c.b16 %v1011, %v1007
    %v1044 = vpack.c.b16 %v1012, %v1008
    %v1045 = vpack.c.b16 %v1013, %v1009
    %v1046 = vpack.c.b16 %v1014, %v1010
    %1079 = vmatprep.subr.bf16.mxu0 %v1016
    %1080 = vmatpush1.bf16.msra.mxu0 %v1015
    %1081 = vmatprep.subr.bf16.mxu0 %v1020
    %1082 = vmatpush1.bf16.msra.mxu0 %v1019
    %1083 = vmatprep.subr.bf16.mxu0 %v1024
    %1084 = vmatpush1.bf16.msra.mxu0 %v1023
    %1085 = vmatprep.subr.bf16.mxu0 %v1028
    %1086 = vmatpush1.bf16.msra.mxu0 %v1027
    %1087 = vmatprep.subr.bf16.mxu0 %v1032
    %1088 = vmatpush1.bf16.msra.mxu0 %v1031
    %1089 = vmatprep.subr.bf16.mxu0 %v1036
    %1090 = vmatpush1.bf16.msra.mxu0 %v1035
    %1091 = vmatprep.subr.bf16.mxu0 %v1040
    %1092 = vmatpush1.bf16.msra.mxu0 %v1039
    %1093 = vmatprep.subr.bf16.mxu0 %v1044
    %1094 = vmatpush1.bf16.msra.mxu0 %v1043
    %1095 = vmatprep.subr.bf16.mxu0 0
    %1096 = vmatpush1.bf16.msra.mxu0 0
    %1097 = vmatprep.subr.bf16.mxu0 0
    %1098 = vmatpush1.bf16.msra.mxu0 0
    %1099 = vmatprep.subr.bf16.mxu0 0
    %1100 = vmatpush1.bf16.msra.mxu0 0
    %1101 = vmatprep.subr.bf16.mxu0 0
    %1102 = vmatpush1.bf16.msra.mxu0 0
    %1103 = vmatprep.subr.bf16.mxu0 0
    %1104 = vmatpush1.bf16.msra.mxu0 0
    %1105 = vmatprep.subr.bf16.mxu0 0
    %1106 = vmatpush1.bf16.msra.mxu0 0
    %1107 = vmatprep.subr.bf16.mxu0 0
    %1108 = vmatpush1.bf16.msra.mxu0 0
    %1109 = vmatprep.subr.bf16.mxu0 0
    %1110 = vmatpush1.bf16.msra.mxu0 0
    %1111 = vmatprep.mubr.bf16.mxu0 0
    %1112 = vmatmul.mubr.bf16.gmra.mrb[0].mxu0 %v861
    %v1113 = vpop.f32.mrb[0].mxu0
    %v1114 = vadd.f32 %v902, %v1113
    %v1115 = vpop.f32.mrb[0].mxu0
    %v1116 = vadd.f32 %v906, %v1115
    %v1117 = vpop.f32.mrb[0].mxu0
    %v1118 = vadd.f32 %v902, %v1117
    %v1119 = vpop.f32.mrb[0].mxu0
    %v1120 = vadd.f32 %v906, %v1119
    %1121 = vmatprep.mubr.bf16.mxu0 0
    %1122 = vmatmul.mubr.bf16.gmra.mrb[0].mxu0 %v862
    %v1123 = vpop.f32.mrb[0].mxu0
    %v1124 = vadd.f32 %v902, %v1123
    %v1125 = vpop.f32.mrb[0].mxu0
    %v1126 = vadd.f32 %v906, %v1125
    %v1127 = vpop.f32.mrb[0].mxu0
    %v1128 = vadd.f32 %v902, %v1127
    %v1129 = vpop.f32.mrb[0].mxu0
    %v1130 = vadd.f32 %v906, %v1129
    %1131 = vmatprep.mubr.bf16.mxu0 0
    %1132 = vmatmul.mubr.bf16.gmra.mrb[0].mxu0 %v863
    %v1133 = vpop.f32.mrb[0].mxu0
    %v1134 = vadd.f32 %v902, %v1133
    %v1135 = vpop.f32.mrb[0].mxu0
    %v1136 = vadd.f32 %v906, %v1135
    %v1137 = vpop.f32.mrb[0].mxu0
    %v1138 = vadd.f32 %v902, %v1137
    %v1139 = vpop.f32.mrb[0].mxu0
    %v1140 = vadd.f32 %v906, %v1139
    %1141 = vmatprep.mubr.bf16.mxu0 0
    %1142 = vmatmul.mubr.bf16.gmra.mrb[0].mxu0 %v864
    %v1143 = vpop.f32.mrb[0].mxu0
    %v1144 = vadd.f32 %v902, %v1143
    %v1145 = vpop.f32.mrb[0].mxu0
    %v1146 = vadd.f32 %v906, %v1145
    %v1147 = vpop.f32.mrb[0].mxu0
    %v1148 = vadd.f32 %v902, %v1147
    %v1149 = vpop.f32.mrb[0].mxu0
    %v1150 = vadd.f32 %v906, %v1149
    %1151 = vdwg.mxu0
    %1152 = vmatprep.subr.bf16.mxu0 %v1018
    %1153 = vmatpush1.bf16.msra.mxu0 %v1017
    %1154 = vmatprep.subr.bf16.mxu0 %v1022
    %1155 = vmatpush1.bf16.msra.mxu0 %v1021
    %1156 = vmatprep.subr.bf16.mxu0 %v1026
    %1157 = vmatpush1.bf16.msra.mxu0 %v1025
    %1158 = vmatprep.subr.bf16.mxu0 %v1030
    %1159 = vmatpush1.bf16.msra.mxu0 %v1029
    %1160 = vmatprep.subr.bf16.mxu0 %v1034
    %1161 = vmatpush1.bf16.msra.mxu0 %v1033
    %1162 = vmatprep.subr.bf16.mxu0 %v1038
    %1163 = vmatpush1.bf16.msra.mxu0 %v1037
    %1164 = vmatprep.subr.bf16.mxu0 %v1042
    %1165 = vmatpush1.bf16.msra.mxu0 %v1041
    %1166 = vmatprep.subr.bf16.mxu0 %v1046
    %1167 = vmatpush1.bf16.msra.mxu0 %v1045
    %1168 = vmatprep.subr.bf16.mxu0 0
    %1169 = vmatpush1.bf16.msra.mxu0 0
    %1170 = vmatprep.subr.bf16.mxu0 0
    %1171 = vmatpush1.bf16.msra.mxu0 0
    %1172 = vmatprep.subr.bf16.mxu0 0
    %1173 = vmatpush1.bf16.msra.mxu0 0
    %1174 = vmatprep.subr.bf16.mxu0 0
    %1175 = vmatpush1.bf16.msra.mxu0 0
    %1176 = vmatprep.subr.bf16.mxu0 0
    %1177 = vmatpush1.bf16.msra.mxu0 0
    %1178 = vmatprep.subr.bf16.mxu0 0
    %1179 = vmatpush1.bf16.msra.mxu0 0
    %1180 = vmatprep.subr.bf16.mxu0 0
    %1181 = vmatpush1.bf16.msra.mxu0 0
    %1182 = vmatprep.subr.bf16.mxu0 0
    %1183 = vmatpush1.bf16.msra.mxu0 0
    %1184 = vmatprep.mubr.bf16.mxu0 0
    %1185 = vmatmul.mubr.bf16.gmra.mrb[0].mxu0 %v861
    %v1186 = vpop.f32.mrb[0].mxu0
    %v1187 = vadd.f32 %v910, %v1186
    %v1188 = vpop.f32.mrb[0].mxu0
    %v1189 = vadd.f32 %v914, %v1188
    %v1190 = vpop.f32.mrb[0].mxu0
    %v1191 = vadd.f32 %v910, %v1190
    %v1192 = vpop.f32.mrb[0].mxu0
    %v1193 = vadd.f32 %v914, %v1192
    %1194 = vmatprep.mubr.bf16.mxu0 0
    %1195 = vmatmul.mubr.bf16.gmra.mrb[0].mxu0 %v862
    %v1196 = vpop.f32.mrb[0].mxu0
    %v1197 = vadd.f32 %v910, %v1196
    %v1198 = vpop.f32.mrb[0].mxu0
    %v1199 = vadd.f32 %v914, %v1198
    %v1200 = vpop.f32.mrb[0].mxu0
    %v1201 = vadd.f32 %v910, %v1200
    %v1202 = vpop.f32.mrb[0].mxu0
    %v1203 = vadd.f32 %v914, %v1202
    %1204 = vmatprep.mubr.bf16.mxu0 0
    %1205 = vmatmul.mubr.bf16.gmra.mrb[0].mxu0 %v863
    %v1206 = vpop.f32.mrb[0].mxu0
    %v1207 = vadd.f32 %v910, %v1206
    %v1208 = vpop.f32.mrb[0].mxu0
    %v1209 = vadd.f32 %v914, %v1208
    %v1210 = vpop.f32.mrb[0].mxu0
    %v1211 = vadd.f32 %v910, %v1210
    %v1212 = vpop.f32.mrb[0].mxu0
    %v1213 = vadd.f32 %v914, %v1212
    %1214 = vmatprep.mubr.bf16.mxu0 0
    %1215 = vmatmul.mubr.bf16.gmra.mrb[0].mxu0 %v864
    %v1216 = vpop.f32.mrb[0].mxu0
    %v1217 = vadd.f32 %v910, %v1216
    %v1218 = vpop.f32.mrb[0].mxu0
    %v1219 = vadd.f32 %v914, %v1218
    %v1220 = vpop.f32.mrb[0].mxu0
    %v1221 = vadd.f32 %v910, %v1220
    %v1222 = vpop.f32.mrb[0].mxu0
    %v1223 = vadd.f32 %v914, %v1222
    %1224 = vdwg.mxu0
    %1225 = vst [vmem:[#allocation2] sm:$0xff] %v1114
    %1226 = vst [vmem:[#allocation2 + $0x8] sm:$0xff] %v1116
    %1227 = vst [vmem:[#allocation2 + $0x10] sm:$0xff] %v1187
    %1228 = vst [vmem:[#allocation2 + $0x18] sm:$0xff] %v1189
    %1229 = vst [vmem:[#allocation2 + $0x20] sm:$0xff] %v1118
    %1230 = vst [vmem:[#allocation2 + $0x28] sm:$0xff] %v1120
    %1231 = vst [vmem:[#allocation2 + $0x30] sm:$0xff] %v1191
    %1232 = vst [vmem:[#allocation2 + $0x38] sm:$0xff] %v1193
    %1233 = vst [vmem:[#allocation2 + $0x40] sm:$0xff] %v1124
    %1234 = vst [vmem:[#allocation2 + $0x48] sm:$0xff] %v1126
    %1235 = vst [vmem:[#allocation2 + $0x50] sm:$0xff] %v1197
    %1236 = vst [vmem:[#allocation2 + $0x58] sm:$0xff] %v1199
    %1237 = vst [vmem:[#allocation2 + $0x60] sm:$0xff] %v1128
    %1238 = vst [vmem:[#allocation2 + $0x68] sm:$0xff] %v1130
    %1239 = vst [vmem:[#allocation2 + $0x70] sm:$0xff] %v1201
    %1240 = vst [vmem:[#allocation2 + $0x78] sm:$0xff] %v1203
    %1241 = vst [vmem:[#allocation2 + $0x80] sm:$0xff] %v1134
    %1242 = vst [vmem:[#allocation2 + $0x88] sm:$0xff] %v1136
    %1243 = vst [vmem:[#allocation2 + $0x90] sm:$0xff] %v1207
    %1244 = vst [vmem:[#allocation2 + $0x98] sm:$0xff] %v1209
    %1245 = vst [vmem:[#allocation2 + $0xa0] sm:$0xff] %v1138
    %1246 = vst [vmem:[#allocation2 + $0xa8] sm:$0xff] %v1140
    %1247 = vst [vmem:[#allocation2 + $0xb0] sm:$0xff] %v1211
    %1248 = vst [vmem:[#allocation2 + $0xb8] sm:$0xff] %v1213
    %1249 = vst [vmem:[#allocation2 + $0xc0] sm:$0xff] %v1144
    %1250 = vst [vmem:[#allocation2 + $0xc8] sm:$0xff] %v1146
    %1251 = vst [vmem:[#allocation2 + $0xd0] sm:$0xff] %v1217
    %1252 = vst [vmem:[#allocation2 + $0xd8] sm:$0xff] %v1219
    %1253 = vst [vmem:[#allocation2 + $0xe0] sm:$0xff] %v1148
    %1254 = vst [vmem:[#allocation2 + $0xe8] sm:$0xff] %v1150
    %1255 = vst [vmem:[#allocation2 + $0xf0] sm:$0xff] %v1221
    %1256 = vst [vmem:[#allocation2 + $0xf8] sm:$0xff] %v1223
    %v1257 = vld [vmem:[#allocation2] sm:$0xff]
    %v1258 = vld [vmem:[#allocation2 + $0x8] sm:$0xff]
    %v1259 = vld [vmem:[#allocation2 + $0x10] sm:$0xff]
    %v1260 = vld [vmem:[#allocation2 + $0x18] sm:$0xff]
    %v1261 = vld [vmem:[%s3] sm:$0xff]
    %v1262 = vld [vmem:[%s3 + $0x8] sm:$0xff]
    %v1263 = vld [vmem:[%s3 + $0x10] sm:$0xff]
    %v1264 = vld [vmem:[%s3 + $0x18] sm:$0xff]
    %v1265 = vld [vmem:[%s3 + $0x20] sm:$0xff]
    %v1266 = vld [vmem:[%s3 + $0x28] sm:$0xff]
    %v1267 = vld [vmem:[%s3 + $0x30] sm:$0xff]
    %v1268 = vld [vmem:[%s3 + $0x38] sm:$0xff]
    %v1269 = vld [vmem:[%s3 + $0x40] sm:$0xff]
    %v1270 = vld [vmem:[%s3 + $0x48] sm:$0xff]
    %v1271 = vld [vmem:[%s3 + $0x50] sm:$0xff]
    %v1272 = vld [vmem:[%s3 + $0x58] sm:$0xff]
    %v1273 = vld [vmem:[%s3 + $0x60] sm:$0xff]
    %v1274 = vld [vmem:[%s3 + $0x68] sm:$0xff]
    %v1275 = vld [vmem:[%s3 + $0x70] sm:$0xff]
    %v1276 = vld [vmem:[%s3 + $0x78] sm:$0xff]
    %v1277 = vld [vmem:[%s3 + $0x80] sm:$0xff]
    %v1278 = vld [vmem:[%s3 + $0x88] sm:$0xff]
    %v1279 = vld [vmem:[%s3 + $0x90] sm:$0xff]
    %v1280 = vld [vmem:[%s3 + $0x98] sm:$0xff]
    %v1281 = vld [vmem:[%s3 + $0xa0] sm:$0xff]
    %v1282 = vld [vmem:[%s3 + $0xa8] sm:$0xff]
    %v1283 = vld [vmem:[%s3 + $0xb0] sm:$0xff]
    %v1284 = vld [vmem:[%s3 + $0xb8] sm:$0xff]
    %v1285 = vld [vmem:[%s3 + $0xc0] sm:$0xff]
    %v1286 = vld [vmem:[%s3 + $0xc8] sm:$0xff]
    %v1287 = vld [vmem:[%s3 + $0xd0] sm:$0xff]
    %v1288 = vld [vmem:[%s3 + $0xd8] sm:$0xff]
    %v1289 = vld [vmem:[%s3 + $0xe0] sm:$0xff]
    %v1290 = vld [vmem:[%s3 + $0xe8] sm:$0xff]
    %v1291 = vld [vmem:[%s3 + $0xf0] sm:$0xff]
    %v1292 = vld [vmem:[%s3 + $0xf8] sm:$0xff]
    %v1325 = vunpack.c.l.b16 %v1261
    %v1326 = vunpack.c.h.b16 %v1261
    %v1327 = vunpack.c.l.b16 %v1262
    %v1328 = vunpack.c.h.b16 %v1262
    %v1329 = vunpack.c.l.b16 %v1263
    %v1330 = vunpack.c.h.b16 %v1263
    %v1331 = vunpack.c.l.b16 %v1264
    %v1332 = vunpack.c.h.b16 %v1264
    %v1333 = vunpack.c.l.b16 %v1265
    %v1334 = vunpack.c.h.b16 %v1265
    %v1335 = vunpack.c.l.b16 %v1266
    %v1336 = vunpack.c.h.b16 %v1266
    %v1337 = vunpack.c.l.b16 %v1267
    %v1338 = vunpack.c.h.b16 %v1267
    %v1339 = vunpack.c.l.b16 %v1268
    %v1340 = vunpack.c.h.b16 %v1268
    %v1341 = vunpack.c.l.b16 %v1269
    %v1342 = vunpack.c.h.b16 %v1269
    %v1343 = vunpack.c.l.b16 %v1270
    %v1344 = vunpack.c.h.b16 %v1270
    %v1345 = vunpack.c.l.b16 %v1271
    %v1346 = vunpack.c.h.b16 %v1271
    %v1347 = vunpack.c.l.b16 %v1272
    %v1348 = vunpack.c.h.b16 %v1272
    %v1349 = vunpack.c.l.b16 %v1273
    %v1350 = vunpack.c.h.b16 %v1273
    %v1351 = vunpack.c.l.b16 %v1274
    %v1352 = vunpack.c.h.b16 %v1274
    %v1353 = vunpack.c.l.b16 %v1275
    %v1354 = vunpack.c.h.b16 %v1275
    %v1355 = vunpack.c.l.b16 %v1276
    %v1356 = vunpack.c.h.b16 %v1276
    %v1357 = vunpack.c.l.b16 %v1277
    %v1358 = vunpack.c.h.b16 %v1277
    %v1359 = vunpack.c.l.b16 %v1278
    %v1360 = vunpack.c.h.b16 %v1278
    %v1361 = vunpack.c.l.b16 %v1279
    %v1362 = vunpack.c.h.b16 %v1279
    %v1363 = vunpack.c.l.b16 %v1280
    %v1364 = vunpack.c.h.b16 %v1280
    %v1365 = vunpack.c.l.b16 %v1281
    %v1366 = vunpack.c.h.b16 %v1281
    %v1367 = vunpack.c.l.b16 %v1282
    %v1368 = vunpack.c.h.b16 %v1282
    %v1369 = vunpack.c.l.b16 %v1283
    %v1370 = vunpack.c.h.b16 %v1283
    %v1371 = vunpack.c.l.b16 %v1284
    %v1372 = vunpack.c.h.b16 %v1284
    %v1373 = vunpack.c.l.b16 %v1285
    %v1374 = vunpack.c.h.b16 %v1285
    %v1375 = vunpack.c.l.b16 %v1286
    %v1376 = vunpack.c.h.b16 %v1286
    %v1377 = vunpack.c.l.b16 %v1287
    %v1378 = vunpack.c.h.b16 %v1287
    %v1379 = vunpack.c.l.b16 %v1288
    %v1380 = vunpack.c.h.b16 %v1288
    %v1381 = vunpack.c.l.b16 %v1289
    %v1382 = vunpack.c.h.b16 %v1289
    %v1383 = vunpack.c.l.b16 %v1290
    %v1384 = vunpack.c.h.b16 %v1290
    %v1385 = vunpack.c.l.b16 %v1291
    %v1386 = vunpack.c.h.b16 %v1291
    %v1387 = vunpack.c.l.b16 %v1292
    %v1388 = vunpack.c.h.b16 %v1292
    %v1389 = vpack.c.b16 %v1329, %v1325
    %v1390 = vpack.c.b16 %v1330, %v1326
    %v1391 = vpack.c.b16 %v1331, %v1327
    %v1392 = vpack.c.b16 %v1332, %v1328
    %v1393 = vpack.c.b16 %v1337, %v1333
    %v1394 = vpack.c.b16 %v1338, %v1334
    %v1395 = vpack.c.b16 %v1339, %v1335
    %v1396 = vpack.c.b16 %v1340, %v1336
    %v1397 = vpack.c.b16 %v1345, %v1341
    %v1398 = vpack.c.b16 %v1346, %v1342
    %v1399 = vpack.c.b16 %v1347, %v1343
    %v1400 = vpack.c.b16 %v1348, %v1344
    %v1401 = vpack.c.b16 %v1353, %v1349
    %v1402 = vpack.c.b16 %v1354, %v1350
    %v1403 = vpack.c.b16 %v1355, %v1351
    %v1404 = vpack.c.b16 %v1356, %v1352
    %v1405 = vpack.c.b16 %v1361, %v1357
    %v1406 = vpack.c.b16 %v1362, %v1358
    %v1407 = vpack.c.b16 %v1363, %v1359
    %v1408 = vpack.c.b16 %v1364, %v1360
    %v1409 = vpack.c.b16 %v1369, %v1365
    %v1410 = vpack.c.b16 %v1370, %v1366
    %v1411 = vpack.c.b16 %v1371, %v1367
    %v1412 = vpack.c.b16 %v1372, %v1368
    %v1413 = vpack.c.b16 %v1377, %v1373
    %v1414 = vpack.c.b16 %v1378, %v1374
    %v1415 = vpack.c.b16 %v1379, %v1375
    %v1416 = vpack.c.b16 %v1380, %v1376
    %v1417 = vpack.c.b16 %v1385, %v1381
    %v1418 = vpack.c.b16 %v1386, %v1382
    %v1419 = vpack.c.b16 %v1387, %v1383
    %v1420 = vpack.c.b16 %v1388, %v1384
    %1453 = vmatprep.subr.bf16.mxu0 %v1390
    %1454 = vmatpush1.bf16.msra.mxu0 %v1389
    %1455 = vmatprep.subr.bf16.mxu0 %v1394
    %1456 = vmatpush1.bf16.msra.mxu0 %v1393
    %1457 = vmatprep.subr.bf16.mxu0 %v1398
    %1458 = vmatpush1.bf16.msra.mxu0 %v1397
    %1459 = vmatprep.subr.bf16.mxu0 %v1402
    %1460 = vmatpush1.bf16.msra.mxu0 %v1401
    %1461 = vmatprep.subr.bf16.mxu0 %v1406
    %1462 = vmatpush1.bf16.msra.mxu0 %v1405
    %1463 = vmatprep.subr.bf16.mxu0 %v1410
    %1464 = vmatpush1.bf16.msra.mxu0 %v1409
    %1465 = vmatprep.subr.bf16.mxu0 %v1414
    %1466 = vmatpush1.bf16.msra.mxu0 %v1413
    %1467 = vmatprep.subr.bf16.mxu0 %v1418
    %1468 = vmatpush1.bf16.msra.mxu0 %v1417
    %1469 = vmatprep.subr.bf16.mxu0 0
    %1470 = vmatpush1.bf16.msra.mxu0 0
    %1471 = vmatprep.subr.bf16.mxu0 0
    %1472 = vmatpush1.bf16.msra.mxu0 0
    %1473 = vmatprep.subr.bf16.mxu0 0
    %1474 = vmatpush1.bf16.msra.mxu0 0
    %1475 = vmatprep.subr.bf16.mxu0 0
    %1476 = vmatpush1.bf16.msra.mxu0 0
    %1477 = vmatprep.subr.bf16.mxu0 0
    %1478 = vmatpush1.bf16.msra.mxu0 0
    %1479 = vmatprep.subr.bf16.mxu0 0
    %1480 = vmatpush1.bf16.msra.mxu0 0
    %1481 = vmatprep.subr.bf16.mxu0 0
    %1482 = vmatpush1.bf16.msra.mxu0 0
    %1483 = vmatprep.subr.bf16.mxu0 0
    %1484 = vmatpush1.bf16.msra.mxu0 0
    %1485 = vmatprep.mubr.bf16.mxu0 0
    %1486 = vmatmul.mubr.bf16.gmra.mrb[0].mxu0 0
    %v1487 = vpop.f32.mrb[0].mxu0
    %v1488 = vadd.f32 0.0, %v1487
    %v1489 = vpop.f32.mrb[0].mxu0
    %v1490 = vadd.f32 0.0, %v1489
    %v1491 = vpop.f32.mrb[0].mxu0
    %v1492 = vpop.f32.mrb[0].mxu0
    %1493 = vdwg.mxu0
    %1494 = vmatprep.subr.bf16.mxu0 %v1392
    %1495 = vmatpush1.bf16.msra.mxu0 %v1391
    %1496 = vmatprep.subr.bf16.mxu0 %v1396
    %1497 = vmatpush1.bf16.msra.mxu0 %v1395
    %1498 = vmatprep.subr.bf16.mxu0 %v1400
    %1499 = vmatpush1.bf16.msra.mxu0 %v1399
    %1500 = vmatprep.subr.bf16.mxu0 %v1404
    %1501 = vmatpush1.bf16.msra.mxu0 %v1403
    %1502 = vmatprep.subr.bf16.mxu0 %v1408
    %1503 = vmatpush1.bf16.msra.mxu0 %v1407
    %1504 = vmatprep.subr.bf16.mxu0 %v1412
    %1505 = vmatpush1.bf16.msra.mxu0 %v1411
    %1506 = vmatprep.subr.bf16.mxu0 %v1416
    %1507 = vmatpush1.bf16.msra.mxu0 %v1415
    %1508 = vmatprep.subr.bf16.mxu0 %v1420
    %1509 = vmatpush1.bf16.msra.mxu0 %v1419
    %1510 = vmatprep.subr.bf16.mxu0 0
    %1511 = vmatpush1.bf16.msra.mxu0 0
    %1512 = vmatprep.subr.bf16.mxu0 0
    %1513 = vmatpush1.bf16.msra.mxu0 0
    %1514 = vmatprep.subr.bf16.mxu0 0
    %1515 = vmatpush1.bf16.msra.mxu0 0
    %1516 = vmatprep.subr.bf16.mxu0 0
    %1517 = vmatpush1.bf16.msra.mxu0 0
    %1518 = vmatprep.subr.bf16.mxu0 0
    %1519 = vmatpush1.bf16.msra.mxu0 0
    %1520 = vmatprep.subr.bf16.mxu0 0
    %1521 = vmatpush1.bf16.msra.mxu0 0
    %1522 = vmatprep.subr.bf16.mxu0 0
    %1523 = vmatpush1.bf16.msra.mxu0 0
    %1524 = vmatprep.subr.bf16.mxu0 0
    %1525 = vmatpush1.bf16.msra.mxu0 0
    %1526 = vmatprep.mubr.bf16.mxu0 0
    %1527 = vmatmul.mubr.bf16.gmra.mrb[0].mxu0 0
    %v1528 = vpop.f32.mrb[0].mxu0
    %v1529 = vadd.f32 0.0, %v1528
    %v1530 = vpop.f32.mrb[0].mxu0
    %v1531 = vadd.f32 0.0, %v1530
    %v1532 = vpop.f32.mrb[0].mxu0
    %v1533 = vpop.f32.mrb[0].mxu0
    %1534 = vdwg.mxu0
    %v1535 = vadd.f32 %v1257, %v1488
    %v1536 = vadd.f32 %v1258, %v1490
    %v1537 = vadd.f32 %v1259, %v1529
    %v1538 = vadd.f32 %v1260, %v1531
    %v1539 = vmul.f32 %v1535, 0.5
    %v1540 = vtanh.pop %v1539
    %v1541 = vmul.f32 %v1540, 0.5
    %v1542 = vadd.f32 %v1541, 0.5
    %v1543 = vmul.f32 %v1536, 0.5
    %v1544 = vtanh.pop %v1543
    %v1545 = vmul.f32 %v1544, 0.5
    %v1546 = vadd.f32 %v1545, 0.5
    %v1547 = vtanh.pop %v1537
    %v1548 = vmul.f32 %v1538, 0.5
    %v1549 = vtanh.pop %v1548
    %v1550 = vmul.f32 %v1549, 0.5
    %v1551 = vadd.f32 %v1550, 0.5
    %v1552 = vmul.f32 %v1546, 0.0
    %v1553 = vmul.f32 %v1542, %v1547
    %v1554 = vadd.f32 %v1552, %v1553
    %v1555 = vtanh.pop %v1554
    %v1556 = vmul.f32 %v1551, %v1555
    %v1557 = vld [vmem:[#allocation2 + $0x20] sm:$0xff]
    %v1558 = vld [vmem:[#allocation2 + $0x28] sm:$0xff]
    %v1559 = vld [vmem:[#allocation2 + $0x30] sm:$0xff]
    %v1560 = vld [vmem:[#allocation2 + $0x38] sm:$0xff]
    %v1561 = vpack.c.bf16 %v1556, %v1556
    %1562 = vmatprep.subr.bf16.mxu0 %v1390
    %1563 = vmatpush1.bf16.msra.mxu0 %v1389
    %1564 = vmatprep.subr.bf16.mxu0 %v1394
    %1565 = vmatpush1.bf16.msra.mxu0 %v1393
    %1566 = vmatprep.subr.bf16.mxu0 %v1398
    %1567 = vmatpush1.bf16.msra.mxu0 %v1397
    %1568 = vmatprep.subr.bf16.mxu0 %v1402
    %1569 = vmatpush1.bf16.msra.mxu0 %v1401
    %1570 = vmatprep.subr.bf16.mxu0 %v1406
    %1571 = vmatpush1.bf16.msra.mxu0 %v1405
    %1572 = vmatprep.subr.bf16.mxu0 %v1410
    %1573 = vmatpush1.bf16.msra.mxu0 %v1409
    %1574 = vmatprep.subr.bf16.mxu0 %v1414
    %1575 = vmatpush1.bf16.msra.mxu0 %v1413
    %1576 = vmatprep.subr.bf16.mxu0 %v1418
    %1577 = vmatpush1.bf16.msra.mxu0 %v1417
    %1578 = vmatprep.subr.bf16.mxu0 0
    %1579 = vmatpush1.bf16.msra.mxu0 0
    %1580 = vmatprep.subr.bf16.mxu0 0
    %1581 = vmatpush1.bf16.msra.mxu0 0
    %1582 = vmatprep.subr.bf16.mxu0 0
    %1583 = vmatpush1.bf16.msra.mxu0 0
    %1584 = vmatprep.subr.bf16.mxu0 0
    %1585 = vmatpush1.bf16.msra.mxu0 0
    %1586 = vmatprep.subr.bf16.mxu0 0
    %1587 = vmatpush1.bf16.msra.mxu0 0
    %1588 = vmatprep.subr.bf16.mxu0 0
    %1589 = vmatpush1.bf16.msra.mxu0 0
    %1590 = vmatprep.subr.bf16.mxu0 0
    %1591 = vmatpush1.bf16.msra.mxu0 0
    %1592 = vmatprep.subr.bf16.mxu0 0
    %1593 = vmatpush1.bf16.msra.mxu0 0
    %1594 = vmatprep.mubr.bf16.mxu0 0
    %1595 = vmatmul.mubr.bf16.gmra.mrb[0].mxu0 %v1561
    %v1596 = vpop.f32.mrb[0].mxu0
    %v1597 = vadd.f32 0.0, %v1596
    %v1598 = vpop.f32.mrb[0].mxu0
    %v1599 = vadd.f32 0.0, %v1598
    %v1600 = vpop.f32.mrb[0].mxu0
    %v1601 = vpop.f32.mrb[0].mxu0
    %1602 = vdwg.mxu0
    %1603 = vmatprep.subr.bf16.mxu0 %v1392
    %1604 = vmatpush1.bf16.msra.mxu0 %v1391
    %1605 = vmatprep.subr.bf16.mxu0 %v1396
    %1606 = vmatpush1.bf16.msra.mxu0 %v1395
    %1607 = vmatprep.subr.bf16.mxu0 %v1400
    %1608 = vmatpush1.bf16.msra.mxu0 %v1399
    %1609 = vmatprep.subr.bf16.mxu0 %v1404
    %1610 = vmatpush1.bf16.msra.mxu0 %v1403
    %1611 = vmatprep.subr.bf16.mxu0 %v1408
    %1612 = vmatpush1.bf16.msra.mxu0 %v1407
    %1613 = vmatprep.subr.bf16.mxu0 %v1412
    %1614 = vmatpush1.bf16.msra.mxu0 %v1411
    %1615 = vmatprep.subr.bf16.mxu0 %v1416
    %1616 = vmatpush1.bf16.msra.mxu0 %v1415
    %1617 = vmatprep.subr.bf16.mxu0 %v1420
    %1618 = vmatpush1.bf16.msra.mxu0 %v1419
    %1619 = vmatprep.subr.bf16.mxu0 0
    %1620 = vmatpush1.bf16.msra.mxu0 0
    %1621 = vmatprep.subr.bf16.mxu0 0
    %1622 = vmatpush1.bf16.msra.mxu0 0
    %1623 = vmatprep.subr.bf16.mxu0 0
    %1624 = vmatpush1.bf16.msra.mxu0 0
    %1625 = vmatprep.subr.bf16.mxu0 0
    %1626 = vmatpush1.bf16.msra.mxu0 0
    %1627 = vmatprep.subr.bf16.mxu0 0
    %1628 = vmatpush1.bf16.msra.mxu0 0
    %1629 = vmatprep.subr.bf16.mxu0 0
    %1630 = vmatpush1.bf16.msra.mxu0 0
    %1631 = vmatprep.subr.bf16.mxu0 0
    %1632 = vmatpush1.bf16.msra.mxu0 0
    %1633 = vmatprep.subr.bf16.mxu0 0
    %1634 = vmatpush1.bf16.msra.mxu0 0
    %1635 = vmatprep.mubr.bf16.mxu0 0
    %1636 = vmatmul.mubr.bf16.gmra.mrb[0].mxu0 %v1561
    %v1637 = vpop.f32.mrb[0].mxu0
    %v1638 = vadd.f32 0.0, %v1637
    %v1639 = vpop.f32.mrb[0].mxu0
    %v1640 = vadd.f32 0.0, %v1639
    %v1641 = vpop.f32.mrb[0].mxu0
    %v1642 = vpop.f32.mrb[0].mxu0
    %1643 = vdwg.mxu0
    %v1644 = vadd.f32 %v1557, %v1597
    %v1645 = vadd.f32 %v1558, %v1599
    %v1646 = vadd.f32 %v1559, %v1638
    %v1647 = vadd.f32 %v1560, %v1640
    %v1648 = vmul.f32 %v1644, 0.5
    %v1649 = vtanh.pop %v1648
    %v1650 = vmul.f32 %v1649, 0.5
    %v1651 = vadd.f32 %v1650, 0.5
    %v1652 = vmul.f32 %v1645, 0.5
    %v1653 = vtanh.pop %v1652
    %v1654 = vmul.f32 %v1653, 0.5
    %v1655 = vadd.f32 %v1654, 0.5
    %v1656 = vtanh.pop %v1646
    %v1657 = vmul.f32 %v1647, 0.5
    %v1658 = vtanh.pop %v1657
    %v1659 = vmul.f32 %v1658, 0.5
    %v1660 = vadd.f32 %v1659, 0.5
    %v1661 = vmul.f32 %v1655, %v1554
    %v1662 = vmul.f32 %v1651, %v1656
    %v1663 = vadd.f32 %v1661, %v1662
    %v1664 = vtanh.pop %v1663
    %v1665 = vmul.f32 %v1660, %v1664
    %v1666 = vld [vmem:[#allocation2 + $0x40] sm:$0xff]
    %v1667 = vld [vmem:[#allocation2 + $0x48] sm:$0xff]
    %v1668 = vld [vmem:[#allocation2 + $0x50] sm:$0xff]
    %v1669 = vld [vmem:[#allocation2 + $0x58] sm:$0xff]
    %v1670 = vpack.c.bf16 %v1665, %v1665
    %1671 = vmatprep.subr.bf16.mxu0 %v1390
    %1672 = vmatpush1.bf16.msra.mxu0 %v1389
    %1673 = vmatprep.subr.bf16.mxu0 %v1394
    %1674 = vmatpush1.bf16.msra.mxu0 %v1393
    %1675 = vmatprep.subr.bf16.mxu0 %v1398
    %1676 = vmatpush1.bf16.msra.mxu0 %v1397
    %1677 = vmatprep.subr.bf16.mxu0 %v1402
    %1678 = vmatpush1.bf16.msra.mxu0 %v1401
    %1679 = vmatprep.subr.bf16.mxu0 %v1406
    %1680 = vmatpush1.bf16.msra.mxu0 %v1405
    %1681 = vmatprep.subr.bf16.mxu0 %v1410
    %1682 = vmatpush1.bf16.msra.mxu0 %v1409
    %1683 = vmatprep.subr.bf16.mxu0 %v1414
    %1684 = vmatpush1.bf16.msra.mxu0 %v1413
    %1685 = vmatprep.subr.bf16.mxu0 %v1418
    %1686 = vmatpush1.bf16.msra.mxu0 %v1417
    %1687 = vmatprep.subr.bf16.mxu0 0
    %1688 = vmatpush1.bf16.msra.mxu0 0
    %1689 = vmatprep.subr.bf16.mxu0 0
    %1690 = vmatpush1.bf16.msra.mxu0 0
    %1691 = vmatprep.subr.bf16.mxu0 0
    %1692 = vmatpush1.bf16.msra.mxu0 0
    %1693 = vmatprep.subr.bf16.mxu0 0
    %1694 = vmatpush1.bf16.msra.mxu0 0
    %1695 = vmatprep.subr.bf16.mxu0 0
    %1696 = vmatpush1.bf16.msra.mxu0 0
    %1697 = vmatprep.subr.bf16.mxu0 0
    %1698 = vmatpush1.bf16.msra.mxu0 0
    %1699 = vmatprep.subr.bf16.mxu0 0
    %1700 = vmatpush1.bf16.msra.mxu0 0
    %1701 = vmatprep.subr.bf16.mxu0 0
    %1702 = vmatpush1.bf16.msra.mxu0 0
    %1703 = vmatprep.mubr.bf16.mxu0 0
    %1704 = vmatmul.mubr.bf16.gmra.mrb[0].mxu0 %v1670
    %v1705 = vpop.f32.mrb[0].mxu0
    %v1706 = vadd.f32 0.0, %v1705
    %v1707 = vpop.f32.mrb[0].mxu0
    %v1708 = vadd.f32 0.0, %v1707
    %v1709 = vpop.f32.mrb[0].mxu0
    %v1710 = vpop.f32.mrb[0].mxu0
    %1711 = vdwg.mxu0
    %1712 = vmatprep.subr.bf16.mxu0 %v1392
    %1713 = vmatpush1.bf16.msra.mxu0 %v1391
    %1714 = vmatprep.subr.bf16.mxu0 %v1396
    %1715 = vmatpush1.bf16.msra.mxu0 %v1395
    %1716 = vmatprep.subr.bf16.mxu0 %v1400
    %1717 = vmatpush1.bf16.msra.mxu0 %v1399
    %1718 = vmatprep.subr.bf16.mxu0 %v1404
    %1719 = vmatpush1.bf16.msra.mxu0 %v1403
    %1720 = vmatprep.subr.bf16.mxu0 %v1408
    %1721 = vmatpush1.bf16.msra.mxu0 %v1407
    %1722 = vmatprep.subr.bf16.mxu0 %v1412
    %1723 = vmatpush1.bf16.msra.mxu0 %v1411
    %1724 = vmatprep.subr.bf16.mxu0 %v1416
    %1725 = vmatpush1.bf16.msra.mxu0 %v1415
    %1726 = vmatprep.subr.bf16.mxu0 %v1420
    %1727 = vmatpush1.bf16.msra.mxu0 %v1419
    %1728 = vmatprep.subr.bf16.mxu0 0
    %1729 = vmatpush1.bf16.msra.mxu0 0
    %1730 = vmatprep.subr.bf16.mxu0 0
    %1731 = vmatpush1.bf16.msra.mxu0 0
    %1732 = vmatprep.subr.bf16.mxu0 0
    %1733 = vmatpush1.bf16.msra.mxu0 0
    %1734 = vmatprep.subr.bf16.mxu0 0
    %1735 = vmatpush1.bf16.msra.mxu0 0
    %1736 = vmatprep.subr.bf16.mxu0 0
    %1737 = vmatpush1.bf16.msra.mxu0 0
    %1738 = vmatprep.subr.bf16.mxu0 0
    %1739 = vmatpush1.bf16.msra.mxu0 0
    %1740 = vmatprep.subr.bf16.mxu0 0
    %1741 = vmatpush1.bf16.msra.mxu0 0
    %1742 = vmatprep.subr.bf16.mxu0 0
    %1743 = vmatpush1.bf16.msra.mxu0 0
    %1744 = vmatprep.mubr.bf16.mxu0 0
    %1745 = vmatmul.mubr.bf16.gmra.mrb[0].mxu0 %v1670
    %v1746 = vpop.f32.mrb[0].mxu0
    %v1747 = vadd.f32 0.0, %v1746
    %v1748 = vpop.f32.mrb[0].mxu0
    %v1749 = vadd.f32 0.0, %v1748
    %v1750 = vpop.f32.mrb[0].mxu0
    %v1751 = vpop.f32.mrb[0].mxu0
    %1752 = vdwg.mxu0
    %v1753 = vadd.f32 %v1666, %v1706
    %v1754 = vadd.f32 %v1667, %v1708
    %v1755 = vadd.f32 %v1668, %v1747
    %v1756 = vadd.f32 %v1669, %v1749
    %v1757 = vmul.f32 %v1753, 0.5
    %v1758 = vtanh.pop %v1757
    %v1759 = vmul.f32 %v1758, 0.5
    %v1760 = vadd.f32 %v1759, 0.5
    %v1761 = vmul.f32 %v1754, 0.5
    %v1762 = vtanh.pop %v1761
    %v1763 = vmul.f32 %v1762, 0.5
    %v1764 = vadd.f32 %v1763, 0.5
    %v1765 = vtanh.pop %v1755
    %v1766 = vmul.f32 %v1756, 0.5
    %v1767 = vtanh.pop %v1766
    %v1768 = vmul.f32 %v1767, 0.5
    %v1769 = vadd.f32 %v1768, 0.5
    %v1770 = vmul.f32 %v1764, %v1663
    %v1771 = vmul.f32 %v1760, %v1765
    %v1772 = vadd.f32 %v1770, %v1771
    %v1773 = vtanh.pop %v1772
    %v1774 = vmul.f32 %v1769, %v1773
    %v1775 = vld [vmem:[#allocation2 + $0x60] sm:$0xff]
    %v1776 = vld [vmem:[#allocation2 + $0x68] sm:$0xff]
    %v1777 = vld [vmem:[#allocation2 + $0x70] sm:$0xff]
    %v1778 = vld [vmem:[#allocation2 + $0x78] sm:$0xff]
    %v1779 = vpack.c.bf16 %v1774, %v1774
    %1780 = vmatprep.subr.bf16.mxu0 %v1390
    %1781 = vmatpush1.bf16.msra.mxu0 %v1389
    %1782 = vmatprep.subr.bf16.mxu0 %v1394
    %1783 = vmatpush1.bf16.msra.mxu0 %v1393
    %1784 = vmatprep.subr.bf16.mxu0 %v1398
    %1785 = vmatpush1.bf16.msra.mxu0 %v1397
    %1786 = vmatprep.subr.bf16.mxu0 %v1402
    %1787 = vmatpush1.bf16.msra.mxu0 %v1401
    %1788 = vmatprep.subr.bf16.mxu0 %v1406
    %1789 = vmatpush1.bf16.msra.mxu0 %v1405
    %1790 = vmatprep.subr.bf16.mxu0 %v1410
    %1791 = vmatpush1.bf16.msra.mxu0 %v1409
    %1792 = vmatprep.subr.bf16.mxu0 %v1414
    %1793 = vmatpush1.bf16.msra.mxu0 %v1413
    %1794 = vmatprep.subr.bf16.mxu0 %v1418
    %1795 = vmatpush1.bf16.msra.mxu0 %v1417
    %1796 = vmatprep.subr.bf16.mxu0 0
    %1797 = vmatpush1.bf16.msra.mxu0 0
    %1798 = vmatprep.subr.bf16.mxu0 0
    %1799 = vmatpush1.bf16.msra.mxu0 0
    %1800 = vmatprep.subr.bf16.mxu0 0
    %1801 = vmatpush1.bf16.msra.mxu0 0
    %1802 = vmatprep.subr.bf16.mxu0 0
    %1803 = vmatpush1.bf16.msra.mxu0 0
    %1804 = vmatprep.subr.bf16.mxu0 0
    %1805 = vmatpush1.bf16.msra.mxu0 0
    %1806 = vmatprep.subr.bf16.mxu0 0
    %1807 = vmatpush1.bf16.msra.mxu0 0
    %1808 = vmatprep.subr.bf16.mxu0 0
    %1809 = vmatpush1.bf16.msra.mxu0 0
    %1810 = vmatprep.subr.bf16.mxu0 0
    %1811 = vmatpush1.bf16.msra.mxu0 0
    %1812 = vmatprep.mubr.bf16.mxu0 0
    %1813 = vmatmul.mubr.bf16.gmra.mrb[0].mxu0 %v1779
    %v1814 = vpop.f32.mrb[0].mxu0
    %v1815 = vadd.f32 0.0, %v1814
    %v1816 = vpop.f32.mrb[0].mxu0
    %v1817 = vadd.f32 0.0, %v1816
    %v1818 = vpop.f32.mrb[0].mxu0
    %v1819 = vpop.f32.mrb[0].mxu0
    %1820 = vdwg.mxu0
    %1821 = vmatprep.subr.bf16.mxu0 %v1392
    %1822 = vmatpush1.bf16.msra.mxu0 %v1391
    %1823 = vmatprep.subr.bf16.mxu0 %v1396
    %1824 = vmatpush1.bf16.msra.mxu0 %v1395
    %1825 = vmatprep.subr.bf16.mxu0 %v1400
    %1826 = vmatpush1.bf16.msra.mxu0 %v1399
    %1827 = vmatprep.subr.bf16.mxu0 %v1404
    %1828 = vmatpush1.bf16.msra.mxu0 %v1403
    %1829 = vmatprep.subr.bf16.mxu0 %v1408
    %1830 = vmatpush1.bf16.msra.mxu0 %v1407
    %1831 = vmatprep.subr.bf16.mxu0 %v1412
    %1832 = vmatpush1.bf16.msra.mxu0 %v1411
    %1833 = vmatprep.subr.bf16.mxu0 %v1416
    %1834 = vmatpush1.bf16.msra.mxu0 %v1415
    %1835 = vmatprep.subr.bf16.mxu0 %v1420
    %1836 = vmatpush1.bf16.msra.mxu0 %v1419
    %1837 = vmatprep.subr.bf16.mxu0 0
    %1838 = vmatpush1.bf16.msra.mxu0 0
    %1839 = vmatprep.subr.bf16.mxu0 0
    %1840 = vmatpush1.bf16.msra.mxu0 0
    %1841 = vmatprep.subr.bf16.mxu0 0
    %1842 = vmatpush1.bf16.msra.mxu0 0
    %1843 = vmatprep.subr.bf16.mxu0 0
    %1844 = vmatpush1.bf16.msra.mxu0 0
    %1845 = vmatprep.subr.bf16.mxu0 0
    %1846 = vmatpush1.bf16.msra.mxu0 0
    %1847 = vmatprep.subr.bf16.mxu0 0
    %1848 = vmatpush1.bf16.msra.mxu0 0
    %1849 = vmatprep.subr.bf16.mxu0 0
    %1850 = vmatpush1.bf16.msra.mxu0 0
    %1851 = vmatprep.subr.bf16.mxu0 0
    %1852 = vmatpush1.bf16.msra.mxu0 0
    %1853 = vmatprep.mubr.bf16.mxu0 0
    %1854 = vmatmul.mubr.bf16.gmra.mrb[0].mxu0 %v1779
    %v1855 = vpop.f32.mrb[0].mxu0
    %v1856 = vadd.f32 0.0, %v1855
    %v1857 = vpop.f32.mrb[0].mxu0
    %v1858 = vadd.f32 0.0, %v1857
    %v1859 = vpop.f32.mrb[0].mxu0
    %v1860 = vpop.f32.mrb[0].mxu0
    %1861 = vdwg.mxu0
    %v1862 = vadd.f32 %v1775, %v1815
    %v1863 = vadd.f32 %v1776, %v1817
    %v1864 = vadd.f32 %v1777, %v1856
    %v1865 = vadd.f32 %v1778, %v1858
    %v1866 = vmul.f32 %v1862, 0.5
    %v1867 = vtanh.pop %v1866
    %v1868 = vmul.f32 %v1867, 0.5
    %v1869 = vadd.f32 %v1868, 0.5
    %v1870 = vmul.f32 %v1863, 0.5
    %v1871 = vtanh.pop %v1870
    %v1872 = vmul.f32 %v1871, 0.5
    %v1873 = vadd.f32 %v1872, 0.5
    %v1874 = vtanh.pop %v1864
    %v1875 = vmul.f32 %v1865, 0.5
    %v1876 = vtanh.pop %v1875
    %v1877 = vmul.f32 %v1876, 0.5
    %v1878 = vadd.f32 %v1877, 0.5
    %v1879 = vmul.f32 %v1873, %v1772
    %v1880 = vmul.f32 %v1869, %v1874
    %v1881 = vadd.f32 %v1879, %v1880
    %v1882 = vtanh.pop %v1881
    %v1883 = vmul.f32 %v1878, %v1882
    %v1884 = vld [vmem:[#allocation2 + $0x80] sm:$0xff]
    %v1885 = vld [vmem:[#allocation2 + $0x88] sm:$0xff]
    %v1886 = vld [vmem:[#allocation2 + $0x90] sm:$0xff]
    %v1887 = vld [vmem:[#allocation2 + $0x98] sm:$0xff]
    %v1888 = vpack.c.bf16 %v1883, %v1883
    %1889 = vmatprep.subr.bf16.mxu0 %v1390
    %1890 = vmatpush1.bf16.msra.mxu0 %v1389
    %1891 = vmatprep.subr.bf16.mxu0 %v1394
    %1892 = vmatpush1.bf16.msra.mxu0 %v1393
    %1893 = vmatprep.subr.bf16.mxu0 %v1398
    %1894 = vmatpush1.bf16.msra.mxu0 %v1397
    %1895 = vmatprep.subr.bf16.mxu0 %v1402
    %1896 = vmatpush1.bf16.msra.mxu0 %v1401
    %1897 = vmatprep.subr.bf16.mxu0 %v1406
    %1898 = vmatpush1.bf16.msra.mxu0 %v1405
    %1899 = vmatprep.subr.bf16.mxu0 %v1410
    %1900 = vmatpush1.bf16.msra.mxu0 %v1409
    %1901 = vmatprep.subr.bf16.mxu0 %v1414
    %1902 = vmatpush1.bf16.msra.mxu0 %v1413
    %1903 = vmatprep.subr.bf16.mxu0 %v1418
    %1904 = vmatpush1.bf16.msra.mxu0 %v1417
    %1905 = vmatprep.subr.bf16.mxu0 0
    %1906 = vmatpush1.bf16.msra.mxu0 0
    %1907 = vmatprep.subr.bf16.mxu0 0
    %1908 = vmatpush1.bf16.msra.mxu0 0
    %1909 = vmatprep.subr.bf16.mxu0 0
    %1910 = vmatpush1.bf16.msra.mxu0 0
    %1911 = vmatprep.subr.bf16.mxu0 0
    %1912 = vmatpush1.bf16.msra.mxu0 0
    %1913 = vmatprep.subr.bf16.mxu0 0
    %1914 = vmatpush1.bf16.msra.mxu0 0
    %1915 = vmatprep.subr.bf16.mxu0 0
    %1916 = vmatpush1.bf16.msra.mxu0 0
    %1917 = vmatprep.subr.bf16.mxu0 0
    %1918 = vmatpush1.bf16.msra.mxu0 0
    %1919 = vmatprep.subr.bf16.mxu0 0
    %1920 = vmatpush1.bf16.msra.mxu0 0
    %1921 = vmatprep.mubr.bf16.mxu0 0
    %1922 = vmatmul.mubr.bf16.gmra.mrb[0].mxu0 %v1888
    %v1923 = vpop.f32.mrb[0].mxu0
    %v1924 = vadd.f32 0.0, %v1923
    %v1925 = vpop.f32.mrb[0].mxu0
    %v1926 = vadd.f32 0.0, %v1925
    %v1927 = vpop.f32.mrb[0].mxu0
    %v1928 = vpop.f32.mrb[0].mxu0
    %1929 = vdwg.mxu0
    %1930 = vmatprep.subr.bf16.mxu0 %v1392
    %1931 = vmatpush1.bf16.msra.mxu0 %v1391
    %1932 = vmatprep.subr.bf16.mxu0 %v1396
    %1933 = vmatpush1.bf16.msra.mxu0 %v1395
    %1934 = vmatprep.subr.bf16.mxu0 %v1400
    %1935 = vmatpush1.bf16.msra.mxu0 %v1399
    %1936 = vmatprep.subr.bf16.mxu0 %v1404
    %1937 = vmatpush1.bf16.msra.mxu0 %v1403
    %1938 = vmatprep.subr.bf16.mxu0 %v1408
    %1939 = vmatpush1.bf16.msra.mxu0 %v1407
    %1940 = vmatprep.subr.bf16.mxu0 %v1412
    %1941 = vmatpush1.bf16.msra.mxu0 %v1411
    %1942 = vmatprep.subr.bf16.mxu0 %v1416
    %1943 = vmatpush1.bf16.msra.mxu0 %v1415
    %1944 = vmatprep.subr.bf16.mxu0 %v1420
    %1945 = vmatpush1.bf16.msra.mxu0 %v1419
    %1946 = vmatprep.subr.bf16.mxu0 0
    %1947 = vmatpush1.bf16.msra.mxu0 0
    %1948 = vmatprep.subr.bf16.mxu0 0
    %1949 = vmatpush1.bf16.msra.mxu0 0
    %1950 = vmatprep.subr.bf16.mxu0 0
    %1951 = vmatpush1.bf16.msra.mxu0 0
    %1952 = vmatprep.subr.bf16.mxu0 0
    %1953 = vmatpush1.bf16.msra.mxu0 0
    %1954 = vmatprep.subr.bf16.mxu0 0
    %1955 = vmatpush1.bf16.msra.mxu0 0
    %1956 = vmatprep.subr.bf16.mxu0 0
    %1957 = vmatpush1.bf16.msra.mxu0 0
    %1958 = vmatprep.subr.bf16.mxu0 0
    %1959 = vmatpush1.bf16.msra.mxu0 0
    %1960 = vmatprep.subr.bf16.mxu0 0
    %1961 = vmatpush1.bf16.msra.mxu0 0
    %1962 = vmatprep.mubr.bf16.mxu0 0
    %1963 = vmatmul.mubr.bf16.gmra.mrb[0].mxu0 %v1888
    %v1964 = vpop.f32.mrb[0].mxu0
    %v1965 = vadd.f32 0.0, %v1964
    %v1966 = vpop.f32.mrb[0].mxu0
    %v1967 = vadd.f32 0.0, %v1966
    %v1968 = vpop.f32.mrb[0].mxu0
    %v1969 = vpop.f32.mrb[0].mxu0
    %1970 = vdwg.mxu0
    %v1971 = vadd.f32 %v1884, %v1924
    %v1972 = vadd.f32 %v1885, %v1926
    %v1973 = vadd.f32 %v1886, %v1965
    %v1974 = vadd.f32 %v1887, %v1967
    %v1975 = vmul.f32 %v1971, 0.5
    %v1976 = vtanh.pop %v1975
    %v1977 = vmul.f32 %v1976, 0.5
    %v1978 = vadd.f32 %v1977, 0.5
    %v1979 = vmul.f32 %v1972, 0.5
    %v1980 = vtanh.pop %v1979
    %v1981 = vmul.f32 %v1980, 0.5
    %v1982 = vadd.f32 %v1981, 0.5
    %v1983 = vtanh.pop %v1973
    %v1984 = vmul.f32 %v1974, 0.5
    %v1985 = vtanh.pop %v1984
    %v1986 = vmul.f32 %v1985, 0.5
    %v1987 = vadd.f32 %v1986, 0.5
    %v1988 = vmul.f32 %v1982, %v1881
    %v1989 = vmul.f32 %v1978, %v1983
    %v1990 = vadd.f32 %v1988, %v1989
    %v1991 = vtanh.pop %v1990
    %v1992 = vmul.f32 %v1987, %v1991
    %v1993 = vld [vmem:[#allocation2 + $0xa0] sm:$0xff]
    %v1994 = vld [vmem:[#allocation2 + $0xa8] sm:$0xff]
    %v1995 = vld [vmem:[#allocation2 + $0xb0] sm:$0xff]
    %v1996 = vld [vmem:[#allocation2 + $0xb8] sm:$0xff]
    %v1997 = vpack.c.bf16 %v1992, %v1992
    %1998 = vmatprep.subr.bf16.mxu0 %v1390
    %1999 = vmatpush1.bf16.msra.mxu0 %v1389
    %2000 = vmatprep.subr.bf16.mxu0 %v1394
    %2001 = vmatpush1.bf16.msra.mxu0 %v1393
    %2002 = vmatprep.subr.bf16.mxu0 %v1398
    %2003 = vmatpush1.bf16.msra.mxu0 %v1397
    %2004 = vmatprep.subr.bf16.mxu0 %v1402
    %2005 = vmatpush1.bf16.msra.mxu0 %v1401
    %2006 = vmatprep.subr.bf16.mxu0 %v1406
    %2007 = vmatpush1.bf16.msra.mxu0 %v1405
    %2008 = vmatprep.subr.bf16.mxu0 %v1410
    %2009 = vmatpush1.bf16.msra.mxu0 %v1409
    %2010 = vmatprep.subr.bf16.mxu0 %v1414
    %2011 = vmatpush1.bf16.msra.mxu0 %v1413
    %2012 = vmatprep.subr.bf16.mxu0 %v1418
    %2013 = vmatpush1.bf16.msra.mxu0 %v1417
    %2014 = vmatprep.subr.bf16.mxu0 0
    %2015 = vmatpush1.bf16.msra.mxu0 0
    %2016 = vmatprep.subr.bf16.mxu0 0
    %2017 = vmatpush1.bf16.msra.mxu0 0
    %2018 = vmatprep.subr.bf16.mxu0 0
    %2019 = vmatpush1.bf16.msra.mxu0 0
    %2020 = vmatprep.subr.bf16.mxu0 0
    %2021 = vmatpush1.bf16.msra.mxu0 0
    %2022 = vmatprep.subr.bf16.mxu0 0
    %2023 = vmatpush1.bf16.msra.mxu0 0
    %2024 = vmatprep.subr.bf16.mxu0 0
    %2025 = vmatpush1.bf16.msra.mxu0 0
    %2026 = vmatprep.subr.bf16.mxu0 0
    %2027 = vmatpush1.bf16.msra.mxu0 0
    %2028 = vmatprep.subr.bf16.mxu0 0
    %2029 = vmatpush1.bf16.msra.mxu0 0
    %2030 = vmatprep.mubr.bf16.mxu0 0
    %2031 = vmatmul.mubr.bf16.gmra.mrb[0].mxu0 %v1997
    %v2032 = vpop.f32.mrb[0].mxu0
    %v2033 = vadd.f32 0.0, %v2032
    %v2034 = vpop.f32.mrb[0].mxu0
    %v2035 = vadd.f32 0.0, %v2034
    %v2036 = vpop.f32.mrb[0].mxu0
    %v2037 = vpop.f32.mrb[0].mxu0
    %2038 = vdwg.mxu0
    %2039 = vmatprep.subr.bf16.mxu0 %v1392
    %2040 = vmatpush1.bf16.msra.mxu0 %v1391
    %2041 = vmatprep.subr.bf16.mxu0 %v1396
    %2042 = vmatpush1.bf16.msra.mxu0 %v1395
    %2043 = vmatprep.subr.bf16.mxu0 %v1400
    %2044 = vmatpush1.bf16.msra.mxu0 %v1399
    %2045 = vmatprep.subr.bf16.mxu0 %v1404
    %2046 = vmatpush1.bf16.msra.mxu0 %v1403
    %2047 = vmatprep.subr.bf16.mxu0 %v1408
    %2048 = vmatpush1.bf16.msra.mxu0 %v1407
    %2049 = vmatprep.subr.bf16.mxu0 %v1412
    %2050 = vmatpush1.bf16.msra.mxu0 %v1411
    %2051 = vmatprep.subr.bf16.mxu0 %v1416
    %2052 = vmatpush1.bf16.msra.mxu0 %v1415
    %2053 = vmatprep.subr.bf16.mxu0 %v1420
    %2054 = vmatpush1.bf16.msra.mxu0 %v1419
    %2055 = vmatprep.subr.bf16.mxu0 0
    %2056 = vmatpush1.bf16.msra.mxu0 0
    %2057 = vmatprep.subr.bf16.mxu0 0
    %2058 = vmatpush1.bf16.msra.mxu0 0
    %2059 = vmatprep.subr.bf16.mxu0 0
    %2060 = vmatpush1.bf16.msra.mxu0 0
    %2061 = vmatprep.subr.bf16.mxu0 0
    %2062 = vmatpush1.bf16.msra.mxu0 0
    %2063 = vmatprep.subr.bf16.mxu0 0
    %2064 = vmatpush1.bf16.msra.mxu0 0
    %2065 = vmatprep.subr.bf16.mxu0 0
    %2066 = vmatpush1.bf16.msra.mxu0 0
    %2067 = vmatprep.subr.bf16.mxu0 0
    %2068 = vmatpush1.bf16.msra.mxu0 0
    %2069 = vmatprep.subr.bf16.mxu0 0
    %2070 = vmatpush1.bf16.msra.mxu0 0
    %2071 = vmatprep.mubr.bf16.mxu0 0
    %2072 = vmatmul.mubr.bf16.gmra.mrb[0].mxu0 %v1997
    %v2073 = vpop.f32.mrb[0].mxu0
    %v2074 = vadd.f32 0.0, %v2073
    %v2075 = vpop.f32.mrb[0].mxu0
    %v2076 = vadd.f32 0.0, %v2075
    %v2077 = vpop.f32.mrb[0].mxu0
    %v2078 = vpop.f32.mrb[0].mxu0
    %2079 = vdwg.mxu0
    %v2080 = vadd.f32 %v1993, %v2033
    %v2081 = vadd.f32 %v1994, %v2035
    %v2082 = vadd.f32 %v1995, %v2074
    %v2083 = vadd.f32 %v1996, %v2076
    %v2084 = vmul.f32 %v2080, 0.5
    %v2085 = vtanh.pop %v2084
    %v2086 = vmul.f32 %v2085, 0.5
    %v2087 = vadd.f32 %v2086, 0.5
    %v2088 = vmul.f32 %v2081, 0.5
    %v2089 = vtanh.pop %v2088
    %v2090 = vmul.f32 %v2089, 0.5
    %v2091 = vadd.f32 %v2090, 0.5
    %v2092 = vtanh.pop %v2082
    %v2093 = vmul.f32 %v2083, 0.5
    %v2094 = vtanh.pop %v2093
    %v2095 = vmul.f32 %v2094, 0.5
    %v2096 = vadd.f32 %v2095, 0.5
    %v2097 = vmul.f32 %v2091, %v1990
    %v2098 = vmul.f32 %v2087, %v2092
    %v2099 = vadd.f32 %v2097, %v2098
    %v2100 = vtanh.pop %v2099
    %v2101 = vmul.f32 %v2096, %v2100
    %v2102 = vld [vmem:[#allocation2 + $0xc0] sm:$0xff]
    %v2103 = vld [vmem:[#allocation2 + $0xc8] sm:$0xff]
    %v2104 = vld [vmem:[#allocation2 + $0xd0] sm:$0xff]
    %v2105 = vld [vmem:[#allocation2 + $0xd8] sm:$0xff]
    %v2106 = vpack.c.bf16 %v2101, %v2101
    %2107 = vmatprep.subr.bf16.mxu0 %v1390
    %2108 = vmatpush1.bf16.msra.mxu0 %v1389
    %2109 = vmatprep.subr.bf16.mxu0 %v1394
    %2110 = vmatpush1.bf16.msra.mxu0 %v1393
    %2111 = vmatprep.subr.bf16.mxu0 %v1398
    %2112 = vmatpush1.bf16.msra.mxu0 %v1397
    %2113 = vmatprep.subr.bf16.mxu0 %v1402
    %2114 = vmatpush1.bf16.msra.mxu0 %v1401
    %2115 = vmatprep.subr.bf16.mxu0 %v1406
    %2116 = vmatpush1.bf16.msra.mxu0 %v1405
    %2117 = vmatprep.subr.bf16.mxu0 %v1410
    %2118 = vmatpush1.bf16.msra.mxu0 %v1409
    %2119 = vmatprep.subr.bf16.mxu0 %v1414
    %2120 = vmatpush1.bf16.msra.mxu0 %v1413
    %2121 = vmatprep.subr.bf16.mxu0 %v1418
    %2122 = vmatpush1.bf16.msra.mxu0 %v1417
    %2123 = vmatprep.subr.bf16.mxu0 0
    %2124 = vmatpush1.bf16.msra.mxu0 0
    %2125 = vmatprep.subr.bf16.mxu0 0
    %2126 = vmatpush1.bf16.msra.mxu0 0
    %2127 = vmatprep.subr.bf16.mxu0 0
    %2128 = vmatpush1.bf16.msra.mxu0 0
    %2129 = vmatprep.subr.bf16.mxu0 0
    %2130 = vmatpush1.bf16.msra.mxu0 0
    %2131 = vmatprep.subr.bf16.mxu0 0
    %2132 = vmatpush1.bf16.msra.mxu0 0
    %2133 = vmatprep.subr.bf16.mxu0 0
    %2134 = vmatpush1.bf16.msra.mxu0 0
    %2135 = vmatprep.subr.bf16.mxu0 0
    %2136 = vmatpush1.bf16.msra.mxu0 0
    %2137 = vmatprep.subr.bf16.mxu0 0
    %2138 = vmatpush1.bf16.msra.mxu0 0
    %2139 = vmatprep.mubr.bf16.mxu0 0
    %2140 = vmatmul.mubr.bf16.gmra.mrb[0].mxu0 %v2106
    %v2141 = vpop.f32.mrb[0].mxu0
    %v2142 = vadd.f32 0.0, %v2141
    %v2143 = vpop.f32.mrb[0].mxu0
    %v2144 = vadd.f32 0.0, %v2143
    %v2145 = vpop.f32.mrb[0].mxu0
    %v2146 = vpop.f32.mrb[0].mxu0
    %2147 = vdwg.mxu0
    %2148 = vmatprep.subr.bf16.mxu0 %v1392
    %2149 = vmatpush1.bf16.msra.mxu0 %v1391
    %2150 = vmatprep.subr.bf16.mxu0 %v1396
    %2151 = vmatpush1.bf16.msra.mxu0 %v1395
    %2152 = vmatprep.subr.bf16.mxu0 %v1400
    %2153 = vmatpush1.bf16.msra.mxu0 %v1399
    %2154 = vmatprep.subr.bf16.mxu0 %v1404
    %2155 = vmatpush1.bf16.msra.mxu0 %v1403
    %2156 = vmatprep.subr.bf16.mxu0 %v1408
    %2157 = vmatpush1.bf16.msra.mxu0 %v1407
    %2158 = vmatprep.subr.bf16.mxu0 %v1412
    %2159 = vmatpush1.bf16.msra.mxu0 %v1411
    %2160 = vmatprep.subr.bf16.mxu0 %v1416
    %2161 = vmatpush1.bf16.msra.mxu0 %v1415
    %2162 = vmatprep.subr.bf16.mxu0 %v1420
    %2163 = vmatpush1.bf16.msra.mxu0 %v1419
    %2164 = vmatprep.subr.bf16.mxu0 0
    %2165 = vmatpush1.bf16.msra.mxu0 0
    %2166 = vmatprep.subr.bf16.mxu0 0
    %2167 = vmatpush1.bf16.msra.mxu0 0
    %2168 = vmatprep.subr.bf16.mxu0 0
    %2169 = vmatpush1.bf16.msra.mxu0 0
    %2170 = vmatprep.subr.bf16.mxu0 0
    %2171 = vmatpush1.bf16.msra.mxu0 0
    %2172 = vmatprep.subr.bf16.mxu0 0
    %2173 = vmatpush1.bf16.msra.mxu0 0
    %2174 = vmatprep.subr.bf16.mxu0 0
    %2175 = vmatpush1.bf16.msra.mxu0 0
    %2176 = vmatprep.subr.bf16.mxu0 0
    %2177 = vmatpush1.bf16.msra.mxu0 0
    %2178 = vmatprep.subr.bf16.mxu0 0
    %2179 = vmatpush1.bf16.msra.mxu0 0
    %2180 = vmatprep.mubr.bf16.mxu0 0
    %2181 = vmatmul.mubr.bf16.gmra.mrb[0].mxu0 %v2106
    %v2182 = vpop.f32.mrb[0].mxu0
    %v2183 = vadd.f32 0.0, %v2182
    %v2184 = vpop.f32.mrb[0].mxu0
    %v2185 = vadd.f32 0.0, %v2184
    %v2186 = vpop.f32.mrb[0].mxu0
    %v2187 = vpop.f32.mrb[0].mxu0
    %2188 = vdwg.mxu0
    %v2189 = vadd.f32 %v2102, %v2142
    %v2190 = vadd.f32 %v2103, %v2144
    %v2191 = vadd.f32 %v2104, %v2183
    %v2192 = vadd.f32 %v2105, %v2185
    %v2193 = vmul.f32 %v2189, 0.5
    %v2194 = vtanh.pop %v2193
    %v2195 = vmul.f32 %v2194, 0.5
    %v2196 = vadd.f32 %v2195, 0.5
    %v2197 = vmul.f32 %v2190, 0.5
    %v2198 = vtanh.pop %v2197
    %v2199 = vmul.f32 %v2198, 0.5
    %v2200 = vadd.f32 %v2199, 0.5
    %v2201 = vtanh.pop %v2191
    %v2202 = vmul.f32 %v2192, 0.5
    %v2203 = vtanh.pop %v2202
    %v2204 = vmul.f32 %v2203, 0.5
    %v2205 = vadd.f32 %v2204, 0.5
    %v2206 = vmul.f32 %v2200, %v2099
    %v2207 = vmul.f32 %v2196, %v2201
    %v2208 = vadd.f32 %v2206, %v2207
    %v2209 = vtanh.pop %v2208
    %v2210 = vmul.f32 %v2205, %v2209
    %v2211 = vld [vmem:[#allocation2 + $0xe0] sm:$0xff]
    %v2212 = vld [vmem:[#allocation2 + $0xe8] sm:$0xff]
    %v2213 = vld [vmem:[#allocation2 + $0xf0] sm:$0xff]
    %v2214 = vld [vmem:[#allocation2 + $0xf8] sm:$0xff]
    %v2215 = vpack.c.bf16 %v2210, %v2210
    %2216 = vmatprep.subr.bf16.mxu0 %v1390
    %2217 = vmatpush1.bf16.msra.mxu0 %v1389
    %2218 = vmatprep.subr.bf16.mxu0 %v1394
    %2219 = vmatpush1.bf16.msra.mxu0 %v1393
    %2220 = vmatprep.subr.bf16.mxu0 %v1398
    %2221 = vmatpush1.bf16.msra.mxu0 %v1397
    %2222 = vmatprep.subr.bf16.mxu0 %v1402
    %2223 = vmatpush1.bf16.msra.mxu0 %v1401
    %2224 = vmatprep.subr.bf16.mxu0 %v1406
    %2225 = vmatpush1.bf16.msra.mxu0 %v1405
    %2226 = vmatprep.subr.bf16.mxu0 %v1410
    %2227 = vmatpush1.bf16.msra.mxu0 %v1409
    %2228 = vmatprep.subr.bf16.mxu0 %v1414
    %2229 = vmatpush1.bf16.msra.mxu0 %v1413
    %2230 = vmatprep.subr.bf16.mxu0 %v1418
    %2231 = vmatpush1.bf16.msra.mxu0 %v1417
    %2232 = vmatprep.subr.bf16.mxu0 0
    %2233 = vmatpush1.bf16.msra.mxu0 0
    %2234 = vmatprep.subr.bf16.mxu0 0
    %2235 = vmatpush1.bf16.msra.mxu0 0
    %2236 = vmatprep.subr.bf16.mxu0 0
    %2237 = vmatpush1.bf16.msra.mxu0 0
    %2238 = vmatprep.subr.bf16.mxu0 0
    %2239 = vmatpush1.bf16.msra.mxu0 0
    %2240 = vmatprep.subr.bf16.mxu0 0
    %2241 = vmatpush1.bf16.msra.mxu0 0
    %2242 = vmatprep.subr.bf16.mxu0 0
    %2243 = vmatpush1.bf16.msra.mxu0 0
    %2244 = vmatprep.subr.bf16.mxu0 0
    %2245 = vmatpush1.bf16.msra.mxu0 0
    %2246 = vmatprep.subr.bf16.mxu0 0
    %2247 = vmatpush1.bf16.msra.mxu0 0
    %2248 = vmatprep.mubr.bf16.mxu0 0
    %2249 = vmatmul.mubr.bf16.gmra.mrb[0].mxu0 %v2215
    %v2250 = vpop.f32.mrb[0].mxu0
    %v2251 = vadd.f32 0.0, %v2250
    %v2252 = vpop.f32.mrb[0].mxu0
    %v2253 = vadd.f32 0.0, %v2252
    %v2254 = vpop.f32.mrb[0].mxu0
    %v2255 = vpop.f32.mrb[0].mxu0
    %2256 = vdwg.mxu0
    %2257 = vmatprep.subr.bf16.mxu0 %v1392
    %2258 = vmatpush1.bf16.msra.mxu0 %v1391
    %2259 = vmatprep.subr.bf16.mxu0 %v1396
    %2260 = vmatpush1.bf16.msra.mxu0 %v1395
    %2261 = vmatprep.subr.bf16.mxu0 %v1400
    %2262 = vmatpush1.bf16.msra.mxu0 %v1399
    %2263 = vmatprep.subr.bf16.mxu0 %v1404
    %2264 = vmatpush1.bf16.msra.mxu0 %v1403
    %2265 = vmatprep.subr.bf16.mxu0 %v1408
    %2266 = vmatpush1.bf16.msra.mxu0 %v1407
    %2267 = vmatprep.subr.bf16.mxu0 %v1412
    %2268 = vmatpush1.bf16.msra.mxu0 %v1411
    %2269 = vmatprep.subr.bf16.mxu0 %v1416
    %2270 = vmatpush1.bf16.msra.mxu0 %v1415
    %2271 = vmatprep.subr.bf16.mxu0 %v1420
    %2272 = vmatpush1.bf16.msra.mxu0 %v1419
    %2273 = vmatprep.subr.bf16.mxu0 0
    %2274 = vmatpush1.bf16.msra.mxu0 0
    %2275 = vmatprep.subr.bf16.mxu0 0
    %2276 = vmatpush1.bf16.msra.mxu0 0
    %2277 = vmatprep.subr.bf16.mxu0 0
    %2278 = vmatpush1.bf16.msra.mxu0 0
    %2279 = vmatprep.subr.bf16.mxu0 0
    %2280 = vmatpush1.bf16.msra.mxu0 0
    %2281 = vmatprep.subr.bf16.mxu0 0
    %2282 = vmatpush1.bf16.msra.mxu0 0
    %2283 = vmatprep.subr.bf16.mxu0 0
    %2284 = vmatpush1.bf16.msra.mxu0 0
    %2285 = vmatprep.subr.bf16.mxu0 0
    %2286 = vmatpush1.bf16.msra.mxu0 0
    %2287 = vmatprep.subr.bf16.mxu0 0
    %2288 = vmatpush1.bf16.msra.mxu0 0
    %2289 = vmatprep.mubr.bf16.mxu0 0
    %2290 = vmatmul.mubr.bf16.gmra.mrb[0].mxu0 %v2215
    %v2291 = vpop.f32.mrb[0].mxu0
    %v2292 = vadd.f32 0.0, %v2291
    %v2293 = vpop.f32.mrb[0].mxu0
    %v2294 = vadd.f32 0.0, %v2293
    %v2295 = vpop.f32.mrb[0].mxu0
    %v2296 = vpop.f32.mrb[0].mxu0
    %2297 = vdwg.mxu0
    %v2298 = vadd.f32 %v2211, %v2251
    %v2299 = vadd.f32 %v2212, %v2253
    %v2300 = vadd.f32 %v2213, %v2292
    %v2301 = vadd.f32 %v2214, %v2294
    %v2302 = vmul.f32 %v2298, 0.5
    %v2303 = vtanh.pop %v2302
    %v2304 = vmul.f32 %v2303, 0.5
    %v2305 = vadd.f32 %v2304, 0.5
    %v2306 = vmul.f32 %v2299, 0.5
    %v2307 = vtanh.pop %v2306
    %v2308 = vmul.f32 %v2307, 0.5
    %v2309 = vadd.f32 %v2308, 0.5
    %v2310 = vtanh.pop %v2300
    %v2311 = vmul.f32 %v2301, 0.5
    %v2312 = vtanh.pop %v2311
    %v2313 = vmul.f32 %v2312, 0.5
    %v2314 = vadd.f32 %v2313, 0.5
    %v2315 = vmul.f32 %v2309, %v2208
    %v2316 = vmul.f32 %v2305, %v2310
    %v2317 = vadd.f32 %v2315, %v2316
    %v2318 = vtanh.pop %v2317
    %v2319 = vmul.f32 %v2314, %v2318
    %s2320 = smul.u32 4, 16
    %s2321 = smul.u32 %s2320, 4
    %s2322 = sshll.u32 %s2321, 4
    %2323 = dma.done [#allocation9], %s2322
    %s2324 = sshll.u32 %s2321, 4
    %2325 = dma.done %s335, %s2324
    %v2326 = vld [vmem:[%s1] sm:$0xff]
    %v2327 = vpack.c.bf16 %v2326, %v2326
    %v2328 = vld [vmem:[#allocation5] sm:$0xff]
    %v2329 = vld [vmem:[#allocation5 + $0x8] sm:$0xff]
    %v2330 = vld [vmem:[#allocation5 + $0x10] sm:$0xff]
    %v2331 = vld [vmem:[#allocation5 + $0x18] sm:$0xff]
    %v2332 = vld [vmem:[#allocation5 + $0x20] sm:$0xff]
    %v2333 = vld [vmem:[#allocation5 + $0x28] sm:$0xff]
    %v2334 = vld [vmem:[#allocation5 + $0x30] sm:$0xff]
    %v2335 = vld [vmem:[#allocation5 + $0x38] sm:$0xff]
    %v2336 = vld [vmem:[#allocation5 + $0x40] sm:$0xff]
    %v2337 = vld [vmem:[#allocation5 + $0x48] sm:$0xff]
    %v2338 = vld [vmem:[#allocation5 + $0x50] sm:$0xff]
    %v2339 = vld [vmem:[#allocation5 + $0x58] sm:$0xff]
    %v2340 = vld [vmem:[#allocation5 + $0x60] sm:$0xff]
    %v2341 = vld [vmem:[#allocation5 + $0x68] sm:$0xff]
    %v2342 = vld [vmem:[#allocation5 + $0x70] sm:$0xff]
    %v2343 = vld [vmem:[#allocation5 + $0x78] sm:$0xff]
    %v2344 = vld [vmem:[#allocation5 + $0x80] sm:$0xff]
    %v2345 = vld [vmem:[#allocation5 + $0x88] sm:$0xff]
    %v2346 = vld [vmem:[#allocation5 + $0x90] sm:$0xff]
    %v2347 = vld [vmem:[#allocation5 + $0x98] sm:$0xff]
    %v2348 = vld [vmem:[#allocation5 + $0xa0] sm:$0xff]
    %v2349 = vld [vmem:[#allocation5 + $0xa8] sm:$0xff]
    %v2350 = vld [vmem:[#allocation5 + $0xb0] sm:$0xff]
    %v2351 = vld [vmem:[#allocation5 + $0xb8] sm:$0xff]
    %v2352 = vld [vmem:[#allocation5 + $0xc0] sm:$0xff]
    %v2353 = vld [vmem:[#allocation5 + $0xc8] sm:$0xff]
    %v2354 = vld [vmem:[#allocation5 + $0xd0] sm:$0xff]
    %v2355 = vld [vmem:[#allocation5 + $0xd8] sm:$0xff]
    %v2356 = vld [vmem:[#allocation5 + $0xe0] sm:$0xff]
    %v2357 = vld [vmem:[#allocation5 + $0xe8] sm:$0xff]
    %v2358 = vld [vmem:[#allocation5 + $0xf0] sm:$0xff]
    %v2359 = vld [vmem:[#allocation5 + $0xf8] sm:$0xff]
    %v2360 = vld [vmem:[%s5] sm:$0xf]
    %v2362 = vlaneseq
    %v2363 = vshrl.u32 %v2362, 7
    %v2364 = vsub.s32 0, %v2363
    %v2365 = vrot.slane %v2360, %v2364
    %v2366 = vlaneseq
    %v2367 = vshrl.u32 %v2366, 7
    %v2368 = vsub.s32 1, %v2367
    %v2369 = vrot.slane %v2360, %v2368
    %v2370 = vlaneseq
    %v2371 = vshrl.u32 %v2370, 7
    %v2372 = vsub.s32 2, %v2371
    %v2373 = vrot.slane %v2360, %v2372
    %v2374 = vlaneseq
    %v2375 = vshrl.u32 %v2374, 7
    %v2376 = vsub.s32 3, %v2375
    %v2377 = vrot.slane %v2360, %v2376
    %2382 = vmatprep.subr.bf16.mxu0 %v2329
    %2383 = vmatpush1.bf16.msra.mxu0 %v2328
    %2384 = vmatprep.subr.bf16.mxu0 %v2333
    %2385 = vmatpush1.bf16.msra.mxu0 %v2332
    %2386 = vmatprep.subr.bf16.mxu0 %v2337
    %2387 = vmatpush1.bf16.msra.mxu0 %v2336
    %2388 = vmatprep.subr.bf16.mxu0 %v2341
    %2389 = vmatpush1.bf16.msra.mxu0 %v2340
    %2390 = vmatprep.subr.bf16.mxu0 %v2345
    %2391 = vmatpush1.bf16.msra.mxu0 %v2344
    %2392 = vmatprep.subr.bf16.mxu0 %v2349
    %2393 = vmatpush1.bf16.msra.mxu0 %v2348
    %2394 = vmatprep.subr.bf16.mxu0 %v2353
    %2395 = vmatpush1.bf16.msra.mxu0 %v2352
    %2396 = vmatprep.subr.bf16.mxu0 %v2357
    %2397 = vmatpush1.bf16.msra.mxu0 %v2356
    %2398 = vmatprep.subr.bf16.mxu0 0
    %2399 = vmatpush1.bf16.msra.mxu0 0
    %2400 = vmatprep.subr.bf16.mxu0 0
    %2401 = vmatpush1.bf16.msra.mxu0 0
    %2402 = vmatprep.subr.bf16.mxu0 0
    %2403 = vmatpush1.bf16.msra.mxu0 0
    %2404 = vmatprep.subr.bf16.mxu0 0
    %2405 = vmatpush1.bf16.msra.mxu0 0
    %2406 = vmatprep.subr.bf16.mxu0 0
    %2407 = vmatpush1.bf16.msra.mxu0 0
    %2408 = vmatprep.subr.bf16.mxu0 0
    %2409 = vmatpush1.bf16.msra.mxu0 0
    %2410 = vmatprep.subr.bf16.mxu0 0
    %2411 = vmatpush1.bf16.msra.mxu0 0
    %2412 = vmatprep.subr.bf16.mxu0 0
    %2413 = vmatpush1.bf16.msra.mxu0 0
    %2414 = vmatprep.mubr.bf16.mxu0 0
    %2415 = vmatmul.mubr.bf16.gmra.mrb[0].mxu0 %v2327
    %v2416 = vpop.f32.mrb[0].mxu0
    %v2417 = vadd.f32 %v2365, %v2416
    %v2418 = vpop.f32.mrb[0].mxu0
    %v2419 = vadd.f32 %v2369, %v2418
    %v2420 = vpop.f32.mrb[0].mxu0
    %v2421 = vpop.f32.mrb[0].mxu0
    %2422 = vdwg.mxu0
    %2423 = vmatprep.subr.bf16.mxu0 %v2331
    %2424 = vmatpush1.bf16.msra.mxu0 %v2330
    %2425 = vmatprep.subr.bf16.mxu0 %v2335
    %2426 = vmatpush1.bf16.msra.mxu0 %v2334
    %2427 = vmatprep.subr.bf16.mxu0 %v2339
    %2428 = vmatpush1.bf16.msra.mxu0 %v2338
    %2429 = vmatprep.subr.bf16.mxu0 %v2343
    %2430 = vmatpush1.bf16.msra.mxu0 %v2342
    %2431 = vmatprep.subr.bf16.mxu0 %v2347
    %2432 = vmatpush1.bf16.msra.mxu0 %v2346
    %2433 = vmatprep.subr.bf16.mxu0 %v2351
    %2434 = vmatpush1.bf16.msra.mxu0 %v2350
    %2435 = vmatprep.subr.bf16.mxu0 %v2355
    %2436 = vmatpush1.bf16.msra.mxu0 %v2354
    %2437 = vmatprep.subr.bf16.mxu0 %v2359
    %2438 = vmatpush1.bf16.msra.mxu0 %v2358
    %2439 = vmatprep.subr.bf16.mxu0 0
    %2440 = vmatpush1.bf16.msra.mxu0 0
    %2441 = vmatprep.subr.bf16.mxu0 0
    %2442 = vmatpush1.bf16.msra.mxu0 0
    %2443 = vmatprep.subr.bf16.mxu0 0
    %2444 = vmatpush1.bf16.msra.mxu0 0
    %2445 = vmatprep.subr.bf16.mxu0 0
    %2446 = vmatpush1.bf16.msra.mxu0 0
    %2447 = vmatprep.subr.bf16.mxu0 0
    %2448 = vmatpush1.bf16.msra.mxu0 0
    %2449 = vmatprep.subr.bf16.mxu0 0
    %2450 = vmatpush1.bf16.msra.mxu0 0
    %2451 = vmatprep.subr.bf16.mxu0 0
    %2452 = vmatpush1.bf16.msra.mxu0 0
    %2453 = vmatprep.subr.bf16.mxu0 0
    %2454 = vmatpush1.bf16.msra.mxu0 0
    %2455 = vmatprep.mubr.bf16.mxu0 0
    %2456 = vmatmul.mubr.bf16.gmra.mrb[0].mxu0 %v2327
    %v2457 = vpop.f32.mrb[0].mxu0
    %v2458 = vadd.f32 %v2373, %v2457
    %v2459 = vpop.f32.mrb[0].mxu0
    %v2460 = vadd.f32 %v2377, %v2459
    %v2461 = vpop.f32.mrb[0].mxu0
    %v2462 = vpop.f32.mrb[0].mxu0
    %2463 = vdwg.mxu0
    %2464 = vst [vmem:[#allocation3] sm:$0xff] %v2417
    %2465 = vst [vmem:[#allocation3 + $0x8] sm:$0xff] %v2419
    %2466 = vst [vmem:[#allocation3 + $0x10] sm:$0xff] %v2458
    %2467 = vst [vmem:[#allocation3 + $0x18] sm:$0xff] %v2460
    %v2468 = vld [vmem:[%s1 + $0x8] sm:$0xff]
    %v2469 = vld [vmem:[%s1 + $0x10] sm:$0xff]
    %v2470 = vld [vmem:[%s1 + $0x18] sm:$0xff]
    %v2471 = vpack.c.bf16 %v2469, %v2468
    %v2472 = vpack.c.bf16 %v2470, %v2470
    %v2473 = vld [vmem:[#allocation6] sm:$0xff]
    %v2474 = vld [vmem:[#allocation6 + $0x8] sm:$0xff]
    %v2475 = vld [vmem:[#allocation6 + $0x10] sm:$0xff]
    %v2476 = vld [vmem:[#allocation6 + $0x18] sm:$0xff]
    %v2477 = vld [vmem:[#allocation6 + $0x20] sm:$0xff]
    %v2478 = vld [vmem:[#allocation6 + $0x28] sm:$0xff]
    %v2479 = vld [vmem:[#allocation6 + $0x30] sm:$0xff]
    %v2480 = vld [vmem:[#allocation6 + $0x38] sm:$0xff]
    %v2481 = vld [vmem:[#allocation6 + $0x40] sm:$0xff]
    %v2482 = vld [vmem:[#allocation6 + $0x48] sm:$0xff]
    %v2483 = vld [vmem:[#allocation6 + $0x50] sm:$0xff]
    %v2484 = vld [vmem:[#allocation6 + $0x58] sm:$0xff]
    %v2485 = vld [vmem:[#allocation6 + $0x60] sm:$0xff]
    %v2486 = vld [vmem:[#allocation6 + $0x68] sm:$0xff]
    %v2487 = vld [vmem:[#allocation6 + $0x70] sm:$0xff]
    %v2488 = vld [vmem:[#allocation6 + $0x78] sm:$0xff]
    %v2489 = vld [vmem:[#allocation6 + $0x80] sm:$0xff]
    %v2490 = vld [vmem:[#allocation6 + $0x88] sm:$0xff]
    %v2491 = vld [vmem:[#allocation6 + $0x90] sm:$0xff]
    %v2492 = vld [vmem:[#allocation6 + $0x98] sm:$0xff]
    %v2493 = vld [vmem:[#allocation6 + $0xa0] sm:$0xff]
    %v2494 = vld [vmem:[#allocation6 + $0xa8] sm:$0xff]
    %v2495 = vld [vmem:[#allocation6 + $0xb0] sm:$0xff]
    %v2496 = vld [vmem:[#allocation6 + $0xb8] sm:$0xff]
    %v2497 = vld [vmem:[#allocation6 + $0xc0] sm:$0xff]
    %v2498 = vld [vmem:[#allocation6 + $0xc8] sm:$0xff]
    %v2499 = vld [vmem:[#allocation6 + $0xd0] sm:$0xff]
    %v2500 = vld [vmem:[#allocation6 + $0xd8] sm:$0xff]
    %v2501 = vld [vmem:[#allocation6 + $0xe0] sm:$0xff]
    %v2502 = vld [vmem:[#allocation6 + $0xe8] sm:$0xff]
    %v2503 = vld [vmem:[#allocation6 + $0xf0] sm:$0xff]
    %v2504 = vld [vmem:[#allocation6 + $0xf8] sm:$0xff]
    %v2505 = vld [vmem:[%s5] sm:$0xf]
    %v2507 = vlaneseq
    %v2508 = vshrl.u32 %v2507, 7
    %v2509 = vsub.s32 0, %v2508
    %v2510 = vrot.slane %v2505, %v2509
    %v2511 = vlaneseq
    %v2512 = vshrl.u32 %v2511, 7
    %v2513 = vsub.s32 1, %v2512
    %v2514 = vrot.slane %v2505, %v2513
    %v2515 = vlaneseq
    %v2516 = vshrl.u32 %v2515, 7
    %v2517 = vsub.s32 2, %v2516
    %v2518 = vrot.slane %v2505, %v2517
    %v2519 = vlaneseq
    %v2520 = vshrl.u32 %v2519, 7
    %v2521 = vsub.s32 3, %v2520
    %v2522 = vrot.slane %v2505, %v2521
    %2527 = vmatprep.subr.bf16.mxu0 %v2474
    %2528 = vmatpush1.bf16.msra.mxu0 %v2473
    %2529 = vmatprep.subr.bf16.mxu0 %v2478
    %2530 = vmatpush1.bf16.msra.mxu0 %v2477
    %2531 = vmatprep.subr.bf16.mxu0 %v2482
    %2532 = vmatpush1.bf16.msra.mxu0 %v2481
    %2533 = vmatprep.subr.bf16.mxu0 %v2486
    %2534 = vmatpush1.bf16.msra.mxu0 %v2485
    %2535 = vmatprep.subr.bf16.mxu0 %v2490
    %2536 = vmatpush1.bf16.msra.mxu0 %v2489
    %2537 = vmatprep.subr.bf16.mxu0 %v2494
    %2538 = vmatpush1.bf16.msra.mxu0 %v2493
    %2539 = vmatprep.subr.bf16.mxu0 %v2498
    %2540 = vmatpush1.bf16.msra.mxu0 %v2497
    %2541 = vmatprep.subr.bf16.mxu0 %v2502
    %2542 = vmatpush1.bf16.msra.mxu0 %v2501
    %2543 = vmatprep.subr.bf16.mxu0 0
    %2544 = vmatpush1.bf16.msra.mxu0 0
    %2545 = vmatprep.subr.bf16.mxu0 0
    %2546 = vmatpush1.bf16.msra.mxu0 0
    %2547 = vmatprep.subr.bf16.mxu0 0
    %2548 = vmatpush1.bf16.msra.mxu0 0
    %2549 = vmatprep.subr.bf16.mxu0 0
    %2550 = vmatpush1.bf16.msra.mxu0 0
    %2551 = vmatprep.subr.bf16.mxu0 0
    %2552 = vmatpush1.bf16.msra.mxu0 0
    %2553 = vmatprep.subr.bf16.mxu0 0
    %2554 = vmatpush1.bf16.msra.mxu0 0
    %2555 = vmatprep.subr.bf16.mxu0 0
    %2556 = vmatpush1.bf16.msra.mxu0 0
    %2557 = vmatprep.subr.bf16.mxu0 0
    %2558 = vmatpush1.bf16.msra.mxu0 0
    %2559 = vmatprep.mubr.bf16.mxu0 0
    %2560 = vmatmul.mubr.bf16.gmra.mrb[0].mxu0 %v2471
    %v2561 = vpop.f32.mrb[0].mxu0
    %v2562 = vadd.f32 %v2510, %v2561
    %v2563 = vpop.f32.mrb[0].mxu0
    %v2564 = vadd.f32 %v2514, %v2563
    %v2565 = vpop.f32.mrb[0].mxu0
    %v2566 = vadd.f32 %v2510, %v2565
    %v2567 = vpop.f32.mrb[0].mxu0
    %v2568 = vadd.f32 %v2514, %v2567
    %2569 = vmatprep.mubr.bf16.mxu0 0
    %2570 = vmatmul.mubr.bf16.gmra.mrb[0].mxu0 %v2472
    %v2571 = vpop.f32.mrb[0].mxu0
    %v2572 = vadd.f32 %v2510, %v2571
    %v2573 = vpop.f32.mrb[0].mxu0
    %v2574 = vadd.f32 %v2514, %v2573
    %v2575 = vpop.f32.mrb[0].mxu0
    %v2576 = vpop.f32.mrb[0].mxu0
    %2577 = vdwg.mxu0
    %2578 = vmatprep.subr.bf16.mxu0 %v2476
    %2579 = vmatpush1.bf16.msra.mxu0 %v2475
    %2580 = vmatprep.subr.bf16.mxu0 %v2480
    %2581 = vmatpush1.bf16.msra.mxu0 %v2479
    %2582 = vmatprep.subr.bf16.mxu0 %v2484
    %2583 = vmatpush1.bf16.msra.mxu0 %v2483
    %2584 = vmatprep.subr.bf16.mxu0 %v2488
    %2585 = vmatpush1.bf16.msra.mxu0 %v2487
    %2586 = vmatprep.subr.bf16.mxu0 %v2492
    %2587 = vmatpush1.bf16.msra.mxu0 %v2491
    %2588 = vmatprep.subr.bf16.mxu0 %v2496
    %2589 = vmatpush1.bf16.msra.mxu0 %v2495
    %2590 = vmatprep.subr.bf16.mxu0 %v2500
    %2591 = vmatpush1.bf16.msra.mxu0 %v2499
    %2592 = vmatprep.subr.bf16.mxu0 %v2504
    %2593 = vmatpush1.bf16.msra.mxu0 %v2503
    %2594 = vmatprep.subr.bf16.mxu0 0
    %2595 = vmatpush1.bf16.msra.mxu0 0
    %2596 = vmatprep.subr.bf16.mxu0 0
    %2597 = vmatpush1.bf16.msra.mxu0 0
    %2598 = vmatprep.subr.bf16.mxu0 0
    %2599 = vmatpush1.bf16.msra.mxu0 0
    %2600 = vmatprep.subr.bf16.mxu0 0
    %2601 = vmatpush1.bf16.msra.mxu0 0
    %2602 = vmatprep.subr.bf16.mxu0 0
    %2603 = vmatpush1.bf16.msra.mxu0 0
    %2604 = vmatprep.subr.bf16.mxu0 0
    %2605 = vmatpush1.bf16.msra.mxu0 0
    %2606 = vmatprep.subr.bf16.mxu0 0
    %2607 = vmatpush1.bf16.msra.mxu0 0
    %2608 = vmatprep.subr.bf16.mxu0 0
    %2609 = vmatpush1.bf16.msra.mxu0 0
    %2610 = vmatprep.mubr.bf16.mxu0 0
    %2611 = vmatmul.mubr.bf16.gmra.mrb[0].mxu0 %v2471
    %v2612 = vpop.f32.mrb[0].mxu0
    %v2613 = vadd.f32 %v2518, %v2612
    %v2614 = vpop.f32.mrb[0].mxu0
    %v2615 = vadd.f32 %v2522, %v2614
    %v2616 = vpop.f32.mrb[0].mxu0
    %v2617 = vadd.f32 %v2518, %v2616
    %v2618 = vpop.f32.mrb[0].mxu0
    %v2619 = vadd.f32 %v2522, %v2618
    %2620 = vmatprep.mubr.bf16.mxu0 0
    %2621 = vmatmul.mubr.bf16.gmra.mrb[0].mxu0 %v2472
    %v2622 = vpop.f32.mrb[0].mxu0
    %v2623 = vadd.f32 %v2518, %v2622
    %v2624 = vpop.f32.mrb[0].mxu0
    %v2625 = vadd.f32 %v2522, %v2624
    %v2626 = vpop.f32.mrb[0].mxu0
    %v2627 = vpop.f32.mrb[0].mxu0
    %2628 = vdwg.mxu0
    %2629 = vst [vmem:[#allocation3 + $0x20] sm:$0xff] %v2562
    %2630 = vst [vmem:[#allocation3 + $0x28] sm:$0xff] %v2564
    %2631 = vst [vmem:[#allocation3 + $0x30] sm:$0xff] %v2613
    %2632 = vst [vmem:[#allocation3 + $0x38] sm:$0xff] %v2615
    %2633 = vst [vmem:[#allocation3 + $0x40] sm:$0xff] %v2566
    %2634 = vst [vmem:[#allocation3 + $0x48] sm:$0xff] %v2568
    %2635 = vst [vmem:[#allocation3 + $0x50] sm:$0xff] %v2617
    %2636 = vst [vmem:[#allocation3 + $0x58] sm:$0xff] %v2619
    %2637 = vst [vmem:[#allocation3 + $0x60] sm:$0xff] %v2572
    %2638 = vst [vmem:[#allocation3 + $0x68] sm:$0xff] %v2574
    %2639 = vst [vmem:[#allocation3 + $0x70] sm:$0xff] %v2623
    %2640 = vst [vmem:[#allocation3 + $0x78] sm:$0xff] %v2625
    %s2641 = sshll.u32 %s2321, 4
    %2642 = dma.done %s640, %s2641
    %v2643 = vld [vmem:[#allocation3] sm:$0xff]
    %v2644 = vld [vmem:[#allocation3 + $0x8] sm:$0xff]
    %v2645 = vld [vmem:[#allocation3 + $0x10] sm:$0xff]
    %v2646 = vld [vmem:[#allocation3 + $0x18] sm:$0xff]
    %v2647 = vpack.c.bf16 %v2319, %v2319
    %v2648 = vld [vmem:[#allocation7] sm:$0xff]
    %v2649 = vld [vmem:[#allocation7 + $0x8] sm:$0xff]
    %v2650 = vld [vmem:[#allocation7 + $0x10] sm:$0xff]
    %v2651 = vld [vmem:[#allocation7 + $0x18] sm:$0xff]
    %v2652 = vld [vmem:[#allocation7 + $0x20] sm:$0xff]
    %v2653 = vld [vmem:[#allocation7 + $0x28] sm:$0xff]
    %v2654 = vld [vmem:[#allocation7 + $0x30] sm:$0xff]
    %v2655 = vld [vmem:[#allocation7 + $0x38] sm:$0xff]
    %v2656 = vld [vmem:[#allocation7 + $0x40] sm:$0xff]
    %v2657 = vld [vmem:[#allocation7 + $0x48] sm:$0xff]
    %v2658 = vld [vmem:[#allocation7 + $0x50] sm:$0xff]
    %v2659 = vld [vmem:[#allocation7 + $0x58] sm:$0xff]
    %v2660 = vld [vmem:[#allocation7 + $0x60] sm:$0xff]
    %v2661 = vld [vmem:[#allocation7 + $0x68] sm:$0xff]
    %v2662 = vld [vmem:[#allocation7 + $0x70] sm:$0xff]
    %v2663 = vld [vmem:[#allocation7 + $0x78] sm:$0xff]
    %v2664 = vld [vmem:[#allocation7 + $0x80] sm:$0xff]
    %v2665 = vld [vmem:[#allocation7 + $0x88] sm:$0xff]
    %v2666 = vld [vmem:[#allocation7 + $0x90] sm:$0xff]
    %v2667 = vld [vmem:[#allocation7 + $0x98] sm:$0xff]
    %v2668 = vld [vmem:[#allocation7 + $0xa0] sm:$0xff]
    %v2669 = vld [vmem:[#allocation7 + $0xa8] sm:$0xff]
    %v2670 = vld [vmem:[#allocation7 + $0xb0] sm:$0xff]
    %v2671 = vld [vmem:[#allocation7 + $0xb8] sm:$0xff]
    %v2672 = vld [vmem:[#allocation7 + $0xc0] sm:$0xff]
    %v2673 = vld [vmem:[#allocation7 + $0xc8] sm:$0xff]
    %v2674 = vld [vmem:[#allocation7 + $0xd0] sm:$0xff]
    %v2675 = vld [vmem:[#allocation7 + $0xd8] sm:$0xff]
    %v2676 = vld [vmem:[#allocation7 + $0xe0] sm:$0xff]
    %v2677 = vld [vmem:[#allocation7 + $0xe8] sm:$0xff]
    %v2678 = vld [vmem:[#allocation7 + $0xf0] sm:$0xff]
    %v2679 = vld [vmem:[#allocation7 + $0xf8] sm:$0xff]
    %2680 = vmatprep.subr.bf16.mxu0 %v2649
    %2681 = vmatpush1.bf16.msra.mxu0 %v2648
    %2682 = vmatprep.subr.bf16.mxu0 %v2653
    %2683 = vmatpush1.bf16.msra.mxu0 %v2652
    %2684 = vmatprep.subr.bf16.mxu0 %v2657
    %2685 = vmatpush1.bf16.msra.mxu0 %v2656
    %2686 = vmatprep.subr.bf16.mxu0 %v2661
    %2687 = vmatpush1.bf16.msra.mxu0 %v2660
    %2688 = vmatprep.subr.bf16.mxu0 %v2665
    %2689 = vmatpush1.bf16.msra.mxu0 %v2664
    %2690 = vmatprep.subr.bf16.mxu0 %v2669
    %2691 = vmatpush1.bf16.msra.mxu0 %v2668
    %2692 = vmatprep.subr.bf16.mxu0 %v2673
    %2693 = vmatpush1.bf16.msra.mxu0 %v2672
    %2694 = vmatprep.subr.bf16.mxu0 %v2677
    %2695 = vmatpush1.bf16.msra.mxu0 %v2676
    %2696 = vmatprep.subr.bf16.mxu0 0
    %2697 = vmatpush1.bf16.msra.mxu0 0
    %2698 = vmatprep.subr.bf16.mxu0 0
    %2699 = vmatpush1.bf16.msra.mxu0 0
    %2700 = vmatprep.subr.bf16.mxu0 0
    %2701 = vmatpush1.bf16.msra.mxu0 0
    %2702 = vmatprep.subr.bf16.mxu0 0
    %2703 = vmatpush1.bf16.msra.mxu0 0
    %2704 = vmatprep.subr.bf16.mxu0 0
    %2705 = vmatpush1.bf16.msra.mxu0 0
    %2706 = vmatprep.subr.bf16.mxu0 0
    %2707 = vmatpush1.bf16.msra.mxu0 0
    %2708 = vmatprep.subr.bf16.mxu0 0
    %2709 = vmatpush1.bf16.msra.mxu0 0
    %2710 = vmatprep.subr.bf16.mxu0 0
    %2711 = vmatpush1.bf16.msra.mxu0 0
    %2712 = vmatprep.mubr.bf16.mxu0 0
    %2713 = vmatmul.mubr.bf16.gmra.mrb[0].mxu0 %v2647
    %v2714 = vpop.f32.mrb[0].mxu0
    %v2715 = vadd.f32 0.0, %v2714
    %v2716 = vpop.f32.mrb[0].mxu0
    %v2717 = vadd.f32 0.0, %v2716
    %v2718 = vpop.f32.mrb[0].mxu0
    %v2719 = vpop.f32.mrb[0].mxu0
    %2720 = vdwg.mxu0
    %2721 = vmatprep.subr.bf16.mxu0 %v2651
    %2722 = vmatpush1.bf16.msra.mxu0 %v2650
    %2723 = vmatprep.subr.bf16.mxu0 %v2655
    %2724 = vmatpush1.bf16.msra.mxu0 %v2654
    %2725 = vmatprep.subr.bf16.mxu0 %v2659
    %2726 = vmatpush1.bf16.msra.mxu0 %v2658
    %2727 = vmatprep.subr.bf16.mxu0 %v2663
    %2728 = vmatpush1.bf16.msra.mxu0 %v2662
    %2729 = vmatprep.subr.bf16.mxu0 %v2667
    %2730 = vmatpush1.bf16.msra.mxu0 %v2666
    %2731 = vmatprep.subr.bf16.mxu0 %v2671
    %2732 = vmatpush1.bf16.msra.mxu0 %v2670
    %2733 = vmatprep.subr.bf16.mxu0 %v2675
    %2734 = vmatpush1.bf16.msra.mxu0 %v2674
    %2735 = vmatprep.subr.bf16.mxu0 %v2679
    %2736 = vmatpush1.bf16.msra.mxu0 %v2678
    %2737 = vmatprep.subr.bf16.mxu0 0
    %2738 = vmatpush1.bf16.msra.mxu0 0
    %2739 = vmatprep.subr.bf16.mxu0 0
    %2740 = vmatpush1.bf16.msra.mxu0 0
    %2741 = vmatprep.subr.bf16.mxu0 0
    %2742 = vmatpush1.bf16.msra.mxu0 0
    %2743 = vmatprep.subr.bf16.mxu0 0
    %2744 = vmatpush1.bf16.msra.mxu0 0
    %2745 = vmatprep.subr.bf16.mxu0 0
    %2746 = vmatpush1.bf16.msra.mxu0 0
    %2747 = vmatprep.subr.bf16.mxu0 0
    %2748 = vmatpush1.bf16.msra.mxu0 0
    %2749 = vmatprep.subr.bf16.mxu0 0
    %2750 = vmatpush1.bf16.msra.mxu0 0
    %2751 = vmatprep.subr.bf16.mxu0 0
    %2752 = vmatpush1.bf16.msra.mxu0 0
    %2753 = vmatprep.mubr.bf16.mxu0 0
    %2754 = vmatmul.mubr.bf16.gmra.mrb[0].mxu0 %v2647
    %v2755 = vpop.f32.mrb[0].mxu0
    %v2756 = vadd.f32 0.0, %v2755
    %v2757 = vpop.f32.mrb[0].mxu0
    %v2758 = vadd.f32 0.0, %v2757
    %v2759 = vpop.f32.mrb[0].mxu0
    %v2760 = vpop.f32.mrb[0].mxu0
    %2761 = vdwg.mxu0
    %v2762 = vadd.f32 %v2643, %v2715
    %v2763 = vadd.f32 %v2644, %v2717
    %v2764 = vadd.f32 %v2645, %v2756
    %v2765 = vadd.f32 %v2646, %v2758
    %v2766 = vmul.f32 %v2762, 0.5
    %v2767 = vtanh.pop %v2766
    %v2768 = vmul.f32 %v2767, 0.5
    %v2769 = vadd.f32 %v2768, 0.5
    %v2770 = vmul.f32 %v2763, 0.5
    %v2771 = vtanh.pop %v2770
    %v2772 = vmul.f32 %v2771, 0.5
    %v2773 = vadd.f32 %v2772, 0.5
    %v2774 = vtanh.pop %v2764
    %v2775 = vmul.f32 %v2765, 0.5
    %v2776 = vtanh.pop %v2775
    %v2777 = vmul.f32 %v2776, 0.5
    %v2778 = vadd.f32 %v2777, 0.5
    %v2779 = vmul.f32 %v2773, %v2317
    %v2780 = vmul.f32 %v2769, %v2774
    %v2781 = vadd.f32 %v2779, %v2780
    %v2782 = vtanh.pop %v2781
    %v2783 = vmul.f32 %v2778, %v2782
    %v2784 = vmax.f32 %v2783, 0.0
    %2785 = vst [vmem:[#allocation4] sm:$0xff] %v2784
    %v2786 = vld [vmem:[#allocation3 + $0x20] sm:$0xff]
    %v2787 = vld [vmem:[#allocation3 + $0x28] sm:$0xff]
    %v2788 = vld [vmem:[#allocation3 + $0x30] sm:$0xff]
    %v2789 = vld [vmem:[#allocation3 + $0x38] sm:$0xff]
    %v2790 = vpack.c.bf16 %v2783, %v2783
    %v2791 = vld [vmem:[#allocation7] sm:$0xff]
    %v2792 = vld [vmem:[#allocation7 + $0x8] sm:$0xff]
    %v2793 = vld [vmem:[#allocation7 + $0x10] sm:$0xff]
    %v2794 = vld [vmem:[#allocation7 + $0x18] sm:$0xff]
    %v2795 = vld [vmem:[#allocation7 + $0x20] sm:$0xff]
    %v2796 = vld [vmem:[#allocation7 + $0x28] sm:$0xff]
    %v2797 = vld [vmem:[#allocation7 + $0x30] sm:$0xff]
    %v2798 = vld [vmem:[#allocation7 + $0x38] sm:$0xff]
    %v2799 = vld [vmem:[#allocation7 + $0x40] sm:$0xff]
    %v2800 = vld [vmem:[#allocation7 + $0x48] sm:$0xff]
    %v2801 = vld [vmem:[#allocation7 + $0x50] sm:$0xff]
    %v2802 = vld [vmem:[#allocation7 + $0x58] sm:$0xff]
    %v2803 = vld [vmem:[#allocation7 + $0x60] sm:$0xff]
    %v2804 = vld [vmem:[#allocation7 + $0x68] sm:$0xff]
    %v2805 = vld [vmem:[#allocation7 + $0x70] sm:$0xff]
    %v2806 = vld [vmem:[#allocation7 + $0x78] sm:$0xff]
    %v2807 = vld [vmem:[#allocation7 + $0x80] sm:$0xff]
    %v2808 = vld [vmem:[#allocation7 + $0x88] sm:$0xff]
    %v2809 = vld [vmem:[#allocation7 + $0x90] sm:$0xff]
    %v2810 = vld [vmem:[#allocation7 + $0x98] sm:$0xff]
    %v2811 = vld [vmem:[#allocation7 + $0xa0] sm:$0xff]
    %v2812 = vld [vmem:[#allocation7 + $0xa8] sm:$0xff]
    %v2813 = vld [vmem:[#allocation7 + $0xb0] sm:$0xff]
    %v2814 = vld [vmem:[#allocation7 + $0xb8] sm:$0xff]
    %v2815 = vld [vmem:[#allocation7 + $0xc0] sm:$0xff]
    %v2816 = vld [vmem:[#allocation7 + $0xc8] sm:$0xff]
    %v2817 = vld [vmem:[#allocation7 + $0xd0] sm:$0xff]
    %v2818 = vld [vmem:[#allocation7 + $0xd8] sm:$0xff]
    %v2819 = vld [vmem:[#allocation7 + $0xe0] sm:$0xff]
    %v2820 = vld [vmem:[#allocation7 + $0xe8] sm:$0xff]
    %v2821 = vld [vmem:[#allocation7 + $0xf0] sm:$0xff]
    %v2822 = vld [vmem:[#allocation7 + $0xf8] sm:$0xff]
    %2823 = vmatprep.subr.bf16.mxu0 %v2792
    %2824 = vmatpush1.bf16.msra.mxu0 %v2791
    %2825 = vmatprep.subr.bf16.mxu0 %v2796
    %2826 = vmatpush1.bf16.msra.mxu0 %v2795
    %2827 = vmatprep.subr.bf16.mxu0 %v2800
    %2828 = vmatpush1.bf16.msra.mxu0 %v2799
    %2829 = vmatprep.subr.bf16.mxu0 %v2804
    %2830 = vmatpush1.bf16.msra.mxu0 %v2803
    %2831 = vmatprep.subr.bf16.mxu0 %v2808
    %2832 = vmatpush1.bf16.msra.mxu0 %v2807
    %2833 = vmatprep.subr.bf16.mxu0 %v2812
    %2834 = vmatpush1.bf16.msra.mxu0 %v2811
    %2835 = vmatprep.subr.bf16.mxu0 %v2816
    %2836 = vmatpush1.bf16.msra.mxu0 %v2815
    %2837 = vmatprep.subr.bf16.mxu0 %v2820
    %2838 = vmatpush1.bf16.msra.mxu0 %v2819
    %2839 = vmatprep.subr.bf16.mxu0 0
    %2840 = vmatpush1.bf16.msra.mxu0 0
    %2841 = vmatprep.subr.bf16.mxu0 0
    %2842 = vmatpush1.bf16.msra.mxu0 0
    %2843 = vmatprep.subr.bf16.mxu0 0
    %2844 = vmatpush1.bf16.msra.mxu0 0
    %2845 = vmatprep.subr.bf16.mxu0 0
    %2846 = vmatpush1.bf16.msra.mxu0 0
    %2847 = vmatprep.subr.bf16.mxu0 0
    %2848 = vmatpush1.bf16.msra.mxu0 0
    %2849 = vmatprep.subr.bf16.mxu0 0
    %2850 = vmatpush1.bf16.msra.mxu0 0
    %2851 = vmatprep.subr.bf16.mxu0 0
    %2852 = vmatpush1.bf16.msra.mxu0 0
    %2853 = vmatprep.subr.bf16.mxu0 0
    %2854 = vmatpush1.bf16.msra.mxu0 0
    %2855 = vmatprep.mubr.bf16.mxu0 0
    %2856 = vmatmul.mubr.bf16.gmra.mrb[0].mxu0 %v2790
    %v2857 = vpop.f32.mrb[0].mxu0
    %v2858 = vadd.f32 0.0, %v2857
    %v2859 = vpop.f32.mrb[0].mxu0
    %v2860 = vadd.f32 0.0, %v2859
    %v2861 = vpop.f32.mrb[0].mxu0
    %v2862 = vpop.f32.mrb[0].mxu0
    %2863 = vdwg.mxu0
    %2864 = vmatprep.subr.bf16.mxu0 %v2794
    %2865 = vmatpush1.bf16.msra.mxu0 %v2793
    %2866 = vmatprep.subr.bf16.mxu0 %v2798
    %2867 = vmatpush1.bf16.msra.mxu0 %v2797
    %2868 = vmatprep.subr.bf16.mxu0 %v2802
    %2869 = vmatpush1.bf16.msra.mxu0 %v2801
    %2870 = vmatprep.subr.bf16.mxu0 %v2806
    %2871 = vmatpush1.bf16.msra.mxu0 %v2805
    %2872 = vmatprep.subr.bf16.mxu0 %v2810
    %2873 = vmatpush1.bf16.msra.mxu0 %v2809
    %2874 = vmatprep.subr.bf16.mxu0 %v2814
    %2875 = vmatpush1.bf16.msra.mxu0 %v2813
    %2876 = vmatprep.subr.bf16.mxu0 %v2818
    %2877 = vmatpush1.bf16.msra.mxu0 %v2817
    %2878 = vmatprep.subr.bf16.mxu0 %v2822
    %2879 = vmatpush1.bf16.msra.mxu0 %v2821
    %2880 = vmatprep.subr.bf16.mxu0 0
    %2881 = vmatpush1.bf16.msra.mxu0 0
    %2882 = vmatprep.subr.bf16.mxu0 0
    %2883 = vmatpush1.bf16.msra.mxu0 0
    %2884 = vmatprep.subr.bf16.mxu0 0
    %2885 = vmatpush1.bf16.msra.mxu0 0
    %2886 = vmatprep.subr.bf16.mxu0 0
    %2887 = vmatpush1.bf16.msra.mxu0 0
    %2888 = vmatprep.subr.bf16.mxu0 0
    %2889 = vmatpush1.bf16.msra.mxu0 0
    %2890 = vmatprep.subr.bf16.mxu0 0
    %2891 = vmatpush1.bf16.msra.mxu0 0
    %2892 = vmatprep.subr.bf16.mxu0 0
    %2893 = vmatpush1.bf16.msra.mxu0 0
    %2894 = vmatprep.subr.bf16.mxu0 0
    %2895 = vmatpush1.bf16.msra.mxu0 0
    %2896 = vmatprep.mubr.bf16.mxu0 0
    %2897 = vmatmul.mubr.bf16.gmra.mrb[0].mxu0 %v2790
    %v2898 = vpop.f32.mrb[0].mxu0
    %v2899 = vadd.f32 0.0, %v2898
    %v2900 = vpop.f32.mrb[0].mxu0
    %v2901 = vadd.f32 0.0, %v2900
    %v2902 = vpop.f32.mrb[0].mxu0
    %v2903 = vpop.f32.mrb[0].mxu0
    %2904 = vdwg.mxu0
    %v2905 = vadd.f32 %v2786, %v2858
    %v2906 = vadd.f32 %v2787, %v2860
    %v2907 = vadd.f32 %v2788, %v2899
    %v2908 = vadd.f32 %v2789, %v2901
    %v2909 = vmul.f32 %v2905, 0.5
    %v2910 = vtanh.pop %v2909
    %v2911 = vmul.f32 %v2910, 0.5
    %v2912 = vadd.f32 %v2911, 0.5
    %v2913 = vmul.f32 %v2906, 0.5
    %v2914 = vtanh.pop %v2913
    %v2915 = vmul.f32 %v2914, 0.5
    %v2916 = vadd.f32 %v2915, 0.5
    %v2917 = vtanh.pop %v2907
    %v2918 = vmul.f32 %v2908, 0.5
    %v2919 = vtanh.pop %v2918
    %v2920 = vmul.f32 %v2919, 0.5
    %v2921 = vadd.f32 %v2920, 0.5
    %v2922 = vmul.f32 %v2916, %v2781
    %v2923 = vmul.f32 %v2912, %v2917
    %v2924 = vadd.f32 %v2922, %v2923
    %v2925 = vtanh.pop %v2924
    %v2926 = vmul.f32 %v2921, %v2925
    %v2927 = vmax.f32 %v2926, 0.0
    %2928 = vst [vmem:[#allocation4 + $0x8] sm:$0xff] %v2927
    %v2929 = vld [vmem:[#allocation3 + $0x40] sm:$0xff]
    %v2930 = vld [vmem:[#allocation3 + $0x48] sm:$0xff]
    %v2931 = vld [vmem:[#allocation3 + $0x50] sm:$0xff]
    %v2932 = vld [vmem:[#allocation3 + $0x58] sm:$0xff]
    %v2933 = vpack.c.bf16 %v2926, %v2926
    %v2934 = vld [vmem:[#allocation7] sm:$0xff]
    %v2935 = vld [vmem:[#allocation7 + $0x8] sm:$0xff]
    %v2936 = vld [vmem:[#allocation7 + $0x10] sm:$0xff]
    %v2937 = vld [vmem:[#allocation7 + $0x18] sm:$0xff]
    %v2938 = vld [vmem:[#allocation7 + $0x20] sm:$0xff]
    %v2939 = vld [vmem:[#allocation7 + $0x28] sm:$0xff]
    %v2940 = vld [vmem:[#allocation7 + $0x30] sm:$0xff]
    %v2941 = vld [vmem:[#allocation7 + $0x38] sm:$0xff]
    %v2942 = vld [vmem:[#allocation7 + $0x40] sm:$0xff]
    %v2943 = vld [vmem:[#allocation7 + $0x48] sm:$0xff]
    %v2944 = vld [vmem:[#allocation7 + $0x50] sm:$0xff]
    %v2945 = vld [vmem:[#allocation7 + $0x58] sm:$0xff]
    %v2946 = vld [vmem:[#allocation7 + $0x60] sm:$0xff]
    %v2947 = vld [vmem:[#allocation7 + $0x68] sm:$0xff]
    %v2948 = vld [vmem:[#allocation7 + $0x70] sm:$0xff]
    %v2949 = vld [vmem:[#allocation7 + $0x78] sm:$0xff]
    %v2950 = vld [vmem:[#allocation7 + $0x80] sm:$0xff]
    %v2951 = vld [vmem:[#allocation7 + $0x88] sm:$0xff]
    %v2952 = vld [vmem:[#allocation7 + $0x90] sm:$0xff]
    %v2953 = vld [vmem:[#allocation7 + $0x98] sm:$0xff]
    %v2954 = vld [vmem:[#allocation7 + $0xa0] sm:$0xff]
    %v2955 = vld [vmem:[#allocation7 + $0xa8] sm:$0xff]
    %v2956 = vld [vmem:[#allocation7 + $0xb0] sm:$0xff]
    %v2957 = vld [vmem:[#allocation7 + $0xb8] sm:$0xff]
    %v2958 = vld [vmem:[#allocation7 + $0xc0] sm:$0xff]
    %v2959 = vld [vmem:[#allocation7 + $0xc8] sm:$0xff]
    %v2960 = vld [vmem:[#allocation7 + $0xd0] sm:$0xff]
    %v2961 = vld [vmem:[#allocation7 + $0xd8] sm:$0xff]
    %v2962 = vld [vmem:[#allocation7 + $0xe0] sm:$0xff]
    %v2963 = vld [vmem:[#allocation7 + $0xe8] sm:$0xff]
    %v2964 = vld [vmem:[#allocation7 + $0xf0] sm:$0xff]
    %v2965 = vld [vmem:[#allocation7 + $0xf8] sm:$0xff]
    %2966 = vmatprep.subr.bf16.mxu0 %v2935
    %2967 = vmatpush1.bf16.msra.mxu0 %v2934
    %2968 = vmatprep.subr.bf16.mxu0 %v2939
    %2969 = vmatpush1.bf16.msra.mxu0 %v2938
    %2970 = vmatprep.subr.bf16.mxu0 %v2943
    %2971 = vmatpush1.bf16.msra.mxu0 %v2942
    %2972 = vmatprep.subr.bf16.mxu0 %v2947
    %2973 = vmatpush1.bf16.msra.mxu0 %v2946
    %2974 = vmatprep.subr.bf16.mxu0 %v2951
    %2975 = vmatpush1.bf16.msra.mxu0 %v2950
    %2976 = vmatprep.subr.bf16.mxu0 %v2955
    %2977 = vmatpush1.bf16.msra.mxu0 %v2954
    %2978 = vmatprep.subr.bf16.mxu0 %v2959
    %2979 = vmatpush1.bf16.msra.mxu0 %v2958
    %2980 = vmatprep.subr.bf16.mxu0 %v2963
    %2981 = vmatpush1.bf16.msra.mxu0 %v2962
    %2982 = vmatprep.subr.bf16.mxu0 0
    %2983 = vmatpush1.bf16.msra.mxu0 0
    %2984 = vmatprep.subr.bf16.mxu0 0
    %2985 = vmatpush1.bf16.msra.mxu0 0
    %2986 = vmatprep.subr.bf16.mxu0 0
    %2987 = vmatpush1.bf16.msra.mxu0 0
    %2988 = vmatprep.subr.bf16.mxu0 0
    %2989 = vmatpush1.bf16.msra.mxu0 0
    %2990 = vmatprep.subr.bf16.mxu0 0
    %2991 = vmatpush1.bf16.msra.mxu0 0
    %2992 = vmatprep.subr.bf16.mxu0 0
    %2993 = vmatpush1.bf16.msra.mxu0 0
    %2994 = vmatprep.subr.bf16.mxu0 0
    %2995 = vmatpush1.bf16.msra.mxu0 0
    %2996 = vmatprep.subr.bf16.mxu0 0
    %2997 = vmatpush1.bf16.msra.mxu0 0
    %2998 = vmatprep.mubr.bf16.mxu0 0
    %2999 = vmatmul.mubr.bf16.gmra.mrb[0].mxu0 %v2933
    %v3000 = vpop.f32.mrb[0].mxu0
    %v3001 = vadd.f32 0.0, %v3000
    %v3002 = vpop.f32.mrb[0].mxu0
    %v3003 = vadd.f32 0.0, %v3002
    %v3004 = vpop.f32.mrb[0].mxu0
    %v3005 = vpop.f32.mrb[0].mxu0
    %3006 = vdwg.mxu0
    %3007 = vmatprep.subr.bf16.mxu0 %v2937
    %3008 = vmatpush1.bf16.msra.mxu0 %v2936
    %3009 = vmatprep.subr.bf16.mxu0 %v2941
    %3010 = vmatpush1.bf16.msra.mxu0 %v2940
    %3011 = vmatprep.subr.bf16.mxu0 %v2945
    %3012 = vmatpush1.bf16.msra.mxu0 %v2944
    %3013 = vmatprep.subr.bf16.mxu0 %v2949
    %3014 = vmatpush1.bf16.msra.mxu0 %v2948
    %3015 = vmatprep.subr.bf16.mxu0 %v2953
    %3016 = vmatpush1.bf16.msra.mxu0 %v2952
    %3017 = vmatprep.subr.bf16.mxu0 %v2957
    %3018 = vmatpush1.bf16.msra.mxu0 %v2956
    %3019 = vmatprep.subr.bf16.mxu0 %v2961
    %3020 = vmatpush1.bf16.msra.mxu0 %v2960
    %3021 = vmatprep.subr.bf16.mxu0 %v2965
    %3022 = vmatpush1.bf16.msra.mxu0 %v2964
    %3023 = vmatprep.subr.bf16.mxu0 0
    %3024 = vmatpush1.bf16.msra.mxu0 0
    %3025 = vmatprep.subr.bf16.mxu0 0
    %3026 = vmatpush1.bf16.msra.mxu0 0
    %3027 = vmatprep.subr.bf16.mxu0 0
    %3028 = vmatpush1.bf16.msra.mxu0 0
    %3029 = vmatprep.subr.bf16.mxu0 0
    %3030 = vmatpush1.bf16.msra.mxu0 0
    %3031 = vmatprep.subr.bf16.mxu0 0
    %3032 = vmatpush1.bf16.msra.mxu0 0
    %3033 = vmatprep.subr.bf16.mxu0 0
    %3034 = vmatpush1.bf16.msra.mxu0 0
    %3035 = vmatprep.subr.bf16.mxu0 0
    %3036 = vmatpush1.bf16.msra.mxu0 0
    %3037 = vmatprep.subr.bf16.mxu0 0
    %3038 = vmatpush1.bf16.msra.mxu0 0
    %3039 = vmatprep.mubr.bf16.mxu0 0
    %3040 = vmatmul.mubr.bf16.gmra.mrb[0].mxu0 %v2933
    %v3041 = vpop.f32.mrb[0].mxu0
    %v3042 = vadd.f32 0.0, %v3041
    %v3043 = vpop.f32.mrb[0].mxu0
    %v3044 = vadd.f32 0.0, %v3043
    %v3045 = vpop.f32.mrb[0].mxu0
    %v3046 = vpop.f32.mrb[0].mxu0
    %3047 = vdwg.mxu0
    %v3048 = vadd.f32 %v2929, %v3001
    %v3049 = vadd.f32 %v2930, %v3003
    %v3050 = vadd.f32 %v2931, %v3042
    %v3051 = vadd.f32 %v2932, %v3044
    %v3052 = vmul.f32 %v3048, 0.5
    %v3053 = vtanh.pop %v3052
    %v3054 = vmul.f32 %v3053, 0.5
    %v3055 = vadd.f32 %v3054, 0.5
    %v3056 = vmul.f32 %v3049, 0.5
    %v3057 = vtanh.pop %v3056
    %v3058 = vmul.f32 %v3057, 0.5
    %v3059 = vadd.f32 %v3058, 0.5
    %v3060 = vtanh.pop %v3050
    %v3061 = vmul.f32 %v3051, 0.5
    %v3062 = vtanh.pop %v3061
    %v3063 = vmul.f32 %v3062, 0.5
    %v3064 = vadd.f32 %v3063, 0.5
    %v3065 = vmul.f32 %v3059, %v2924
    %v3066 = vmul.f32 %v3055, %v3060
    %v3067 = vadd.f32 %v3065, %v3066
    %v3068 = vtanh.pop %v3067
    %v3069 = vmul.f32 %v3064, %v3068
    %v3070 = vmax.f32 %v3069, 0.0
    %3071 = vst [vmem:[#allocation4 + $0x10] sm:$0xff] %v3070
    %v3072 = vld [vmem:[#allocation3 + $0x60] sm:$0xff]
    %v3073 = vld [vmem:[#allocation3 + $0x68] sm:$0xff]
    %v3074 = vld [vmem:[#allocation3 + $0x70] sm:$0xff]
    %v3075 = vld [vmem:[#allocation3 + $0x78] sm:$0xff]
    %v3076 = vpack.c.bf16 %v3069, %v3069
    %v3077 = vld [vmem:[#allocation7] sm:$0xff]
    %v3078 = vld [vmem:[#allocation7 + $0x8] sm:$0xff]
    %v3079 = vld [vmem:[#allocation7 + $0x10] sm:$0xff]
    %v3080 = vld [vmem:[#allocation7 + $0x18] sm:$0xff]
    %v3081 = vld [vmem:[#allocation7 + $0x20] sm:$0xff]
    %v3082 = vld [vmem:[#allocation7 + $0x28] sm:$0xff]
    %v3083 = vld [vmem:[#allocation7 + $0x30] sm:$0xff]
    %v3084 = vld [vmem:[#allocation7 + $0x38] sm:$0xff]
    %v3085 = vld [vmem:[#allocation7 + $0x40] sm:$0xff]
    %v3086 = vld [vmem:[#allocation7 + $0x48] sm:$0xff]
    %v3087 = vld [vmem:[#allocation7 + $0x50] sm:$0xff]
    %v3088 = vld [vmem:[#allocation7 + $0x58] sm:$0xff]
    %v3089 = vld [vmem:[#allocation7 + $0x60] sm:$0xff]
    %v3090 = vld [vmem:[#allocation7 + $0x68] sm:$0xff]
    %v3091 = vld [vmem:[#allocation7 + $0x70] sm:$0xff]
    %v3092 = vld [vmem:[#allocation7 + $0x78] sm:$0xff]
    %v3093 = vld [vmem:[#allocation7 + $0x80] sm:$0xff]
    %v3094 = vld [vmem:[#allocation7 + $0x88] sm:$0xff]
    %v3095 = vld [vmem:[#allocation7 + $0x90] sm:$0xff]
    %v3096 = vld [vmem:[#allocation7 + $0x98] sm:$0xff]
    %v3097 = vld [vmem:[#allocation7 + $0xa0] sm:$0xff]
    %v3098 = vld [vmem:[#allocation7 + $0xa8] sm:$0xff]
    %v3099 = vld [vmem:[#allocation7 + $0xb0] sm:$0xff]
    %v3100 = vld [vmem:[#allocation7 + $0xb8] sm:$0xff]
    %v3101 = vld [vmem:[#allocation7 + $0xc0] sm:$0xff]
    %v3102 = vld [vmem:[#allocation7 + $0xc8] sm:$0xff]
    %v3103 = vld [vmem:[#allocation7 + $0xd0] sm:$0xff]
    %v3104 = vld [vmem:[#allocation7 + $0xd8] sm:$0xff]
    %v3105 = vld [vmem:[#allocation7 + $0xe0] sm:$0xff]
    %v3106 = vld [vmem:[#allocation7 + $0xe8] sm:$0xff]
    %v3107 = vld [vmem:[#allocation7 + $0xf0] sm:$0xff]
    %v3108 = vld [vmem:[#allocation7 + $0xf8] sm:$0xff]
    %3109 = vmatprep.subr.bf16.mxu0 %v3078
    %3110 = vmatpush1.bf16.msra.mxu0 %v3077
    %3111 = vmatprep.subr.bf16.mxu0 %v3082
    %3112 = vmatpush1.bf16.msra.mxu0 %v3081
    %3113 = vmatprep.subr.bf16.mxu0 %v3086
    %3114 = vmatpush1.bf16.msra.mxu0 %v3085
    %3115 = vmatprep.subr.bf16.mxu0 %v3090
    %3116 = vmatpush1.bf16.msra.mxu0 %v3089
    %3117 = vmatprep.subr.bf16.mxu0 %v3094
    %3118 = vmatpush1.bf16.msra.mxu0 %v3093
    %3119 = vmatprep.subr.bf16.mxu0 %v3098
    %3120 = vmatpush1.bf16.msra.mxu0 %v3097
    %3121 = vmatprep.subr.bf16.mxu0 %v3102
    %3122 = vmatpush1.bf16.msra.mxu0 %v3101
    %3123 = vmatprep.subr.bf16.mxu0 %v3106
    %3124 = vmatpush1.bf16.msra.mxu0 %v3105
    %3125 = vmatprep.subr.bf16.mxu0 0
    %3126 = vmatpush1.bf16.msra.mxu0 0
    %3127 = vmatprep.subr.bf16.mxu0 0
    %3128 = vmatpush1.bf16.msra.mxu0 0
    %3129 = vmatprep.subr.bf16.mxu0 0
    %3130 = vmatpush1.bf16.msra.mxu0 0
    %3131 = vmatprep.subr.bf16.mxu0 0
    %3132 = vmatpush1.bf16.msra.mxu0 0
    %3133 = vmatprep.subr.bf16.mxu0 0
    %3134 = vmatpush1.bf16.msra.mxu0 0
    %3135 = vmatprep.subr.bf16.mxu0 0
    %3136 = vmatpush1.bf16.msra.mxu0 0
    %3137 = vmatprep.subr.bf16.mxu0 0
    %3138 = vmatpush1.bf16.msra.mxu0 0
    %3139 = vmatprep.subr.bf16.mxu0 0
    %3140 = vmatpush1.bf16.msra.mxu0 0
    %3141 = vmatprep.mubr.bf16.mxu0 0
    %3142 = vmatmul.mubr.bf16.gmra.mrb[0].mxu0 %v3076
    %v3143 = vpop.f32.mrb[0].mxu0
    %v3144 = vadd.f32 0.0, %v3143
    %v3145 = vpop.f32.mrb[0].mxu0
    %v3146 = vadd.f32 0.0, %v3145
    %v3147 = vpop.f32.mrb[0].mxu0
    %v3148 = vpop.f32.mrb[0].mxu0
    %3149 = vdwg.mxu0
    %3150 = vmatprep.subr.bf16.mxu0 %v3080
    %3151 = vmatpush1.bf16.msra.mxu0 %v3079
    %3152 = vmatprep.subr.bf16.mxu0 %v3084
    %3153 = vmatpush1.bf16.msra.mxu0 %v3083
    %3154 = vmatprep.subr.bf16.mxu0 %v3088
    %3155 = vmatpush1.bf16.msra.mxu0 %v3087
    %3156 = vmatprep.subr.bf16.mxu0 %v3092
    %3157 = vmatpush1.bf16.msra.mxu0 %v3091
    %3158 = vmatprep.subr.bf16.mxu0 %v3096
    %3159 = vmatpush1.bf16.msra.mxu0 %v3095
    %3160 = vmatprep.subr.bf16.mxu0 %v3100
    %3161 = vmatpush1.bf16.msra.mxu0 %v3099
    %3162 = vmatprep.subr.bf16.mxu0 %v3104
    %3163 = vmatpush1.bf16.msra.mxu0 %v3103
    %3164 = vmatprep.subr.bf16.mxu0 %v3108
    %3165 = vmatpush1.bf16.msra.mxu0 %v3107
    %3166 = vmatprep.subr.bf16.mxu0 0
    %3167 = vmatpush1.bf16.msra.mxu0 0
    %3168 = vmatprep.subr.bf16.mxu0 0
    %3169 = vmatpush1.bf16.msra.mxu0 0
    %3170 = vmatprep.subr.bf16.mxu0 0
    %3171 = vmatpush1.bf16.msra.mxu0 0
    %3172 = vmatprep.subr.bf16.mxu0 0
    %3173 = vmatpush1.bf16.msra.mxu0 0
    %3174 = vmatprep.subr.bf16.mxu0 0
    %3175 = vmatpush1.bf16.msra.mxu0 0
    %3176 = vmatprep.subr.bf16.mxu0 0
    %3177 = vmatpush1.bf16.msra.mxu0 0
    %3178 = vmatprep.subr.bf16.mxu0 0
    %3179 = vmatpush1.bf16.msra.mxu0 0
    %3180 = vmatprep.subr.bf16.mxu0 0
    %3181 = vmatpush1.bf16.msra.mxu0 0
    %3182 = vmatprep.mubr.bf16.mxu0 0
    %3183 = vmatmul.mubr.bf16.gmra.mrb[0].mxu0 %v3076
    %v3184 = vpop.f32.mrb[0].mxu0
    %v3185 = vadd.f32 0.0, %v3184
    %v3186 = vpop.f32.mrb[0].mxu0
    %v3187 = vadd.f32 0.0, %v3186
    %v3188 = vpop.f32.mrb[0].mxu0
    %v3189 = vpop.f32.mrb[0].mxu0
    %3190 = vdwg.mxu0
    %v3191 = vadd.f32 %v3072, %v3144
    %v3192 = vadd.f32 %v3073, %v3146
    %v3193 = vadd.f32 %v3074, %v3185
    %v3194 = vadd.f32 %v3075, %v3187
    %v3195 = vmul.f32 %v3191, 0.5
    %v3196 = vtanh.pop %v3195
    %v3197 = vmul.f32 %v3196, 0.5
    %v3198 = vadd.f32 %v3197, 0.5
    %v3199 = vmul.f32 %v3192, 0.5
    %v3200 = vtanh.pop %v3199
    %v3201 = vmul.f32 %v3200, 0.5
    %v3202 = vadd.f32 %v3201, 0.5
    %v3203 = vtanh.pop %v3193
    %v3204 = vmul.f32 %v3194, 0.5
    %v3205 = vtanh.pop %v3204
    %v3206 = vmul.f32 %v3205, 0.5
    %v3207 = vadd.f32 %v3206, 0.5
    %v3208 = vmul.f32 %v3202, %v3067
    %v3209 = vmul.f32 %v3198, %v3203
    %v3210 = vadd.f32 %v3208, %v3209
    %v3211 = vtanh.pop %v3210
    %v3212 = vmul.f32 %v3207, %v3211
    %v3213 = vmax.f32 %v3212, 0.0
    %3214 = vst [vmem:[#allocation4 + $0x18] sm:$0xff] %v3213
    %s3215 = smul.u32 %s2320, 2
    %s3216 = sshll.u32 %s3215, 4
    %3217 = dma.done %s676, %s3216
    %v3218 = vld [vmem:[#allocation4] sm:$0xff]
    %v3219 = vld [vmem:[#allocation4 + $0x8] sm:$0xff]
    %v3220 = vld [vmem:[#allocation4 + $0x10] sm:$0xff]
    %v3221 = vld [vmem:[#allocation4 + $0x18] sm:$0xff]
    %v3222 = vpack.c.bf16 %v3219, %v3218
    %v3223 = vpack.c.bf16 %v3221, %v3220
    %v3224 = vld [vmem:[#allocation8] sm:$0xff]
    %v3225 = vld [vmem:[#allocation8 + $0x8] sm:$0xff]
    %v3226 = vld [vmem:[#allocation8 + $0x10] sm:$0xff]
    %v3227 = vld [vmem:[#allocation8 + $0x18] sm:$0xff]
    %v3228 = vld [vmem:[#allocation8 + $0x20] sm:$0xff]
    %v3229 = vld [vmem:[#allocation8 + $0x28] sm:$0xff]
    %v3230 = vld [vmem:[#allocation8 + $0x30] sm:$0xff]
    %v3231 = vld [vmem:[#allocation8 + $0x38] sm:$0xff]
    %v3232 = vld [vmem:[#allocation8 + $0x40] sm:$0xff]
    %v3233 = vld [vmem:[#allocation8 + $0x48] sm:$0xff]
    %v3234 = vld [vmem:[#allocation8 + $0x50] sm:$0xff]
    %v3235 = vld [vmem:[#allocation8 + $0x58] sm:$0xff]
    %v3236 = vld [vmem:[#allocation8 + $0x60] sm:$0xff]
    %v3237 = vld [vmem:[#allocation8 + $0x68] sm:$0xff]
    %v3238 = vld [vmem:[#allocation8 + $0x70] sm:$0xff]
    %v3239 = vld [vmem:[#allocation8 + $0x78] sm:$0xff]
    %v3240 = vld [vmem:[%s6] sm:$0x3]
    %v3242 = vlaneseq
    %v3243 = vshrl.u32 %v3242, 7
    %v3244 = vsub.s32 0, %v3243
    %v3245 = vrot.slane %v3240, %v3244
    %v3246 = vlaneseq
    %v3247 = vshrl.u32 %v3246, 7
    %v3248 = vsub.s32 1, %v3247
    %v3249 = vrot.slane %v3240, %v3248
    %3252 = vmatprep.subr.bf16.mxu0 %v3225
    %3253 = vmatpush1.bf16.msra.mxu0 %v3224
    %3254 = vmatprep.subr.bf16.mxu0 %v3227
    %3255 = vmatpush1.bf16.msra.mxu0 %v3226
    %3256 = vmatprep.subr.bf16.mxu0 %v3229
    %3257 = vmatpush1.bf16.msra.mxu0 %v3228
    %3258 = vmatprep.subr.bf16.mxu0 %v3231
    %3259 = vmatpush1.bf16.msra.mxu0 %v3230
    %3260 = vmatprep.subr.bf16.mxu0 %v3233
    %3261 = vmatpush1.bf16.msra.mxu0 %v3232
    %3262 = vmatprep.subr.bf16.mxu0 %v3235
    %3263 = vmatpush1.bf16.msra.mxu0 %v3234
    %3264 = vmatprep.subr.bf16.mxu0 %v3237
    %3265 = vmatpush1.bf16.msra.mxu0 %v3236
    %3266 = vmatprep.subr.bf16.mxu0 %v3239
    %3267 = vmatpush1.bf16.msra.mxu0 %v3238
    %3268 = vmatprep.subr.bf16.mxu0 0
    %3269 = vmatpush1.bf16.msra.mxu0 0
    %3270 = vmatprep.subr.bf16.mxu0 0
    %3271 = vmatpush1.bf16.msra.mxu0 0
    %3272 = vmatprep.subr.bf16.mxu0 0
    %3273 = vmatpush1.bf16.msra.mxu0 0
    %3274 = vmatprep.subr.bf16.mxu0 0
    %3275 = vmatpush1.bf16.msra.mxu0 0
    %3276 = vmatprep.subr.bf16.mxu0 0
    %3277 = vmatpush1.bf16.msra.mxu0 0
    %3278 = vmatprep.subr.bf16.mxu0 0
    %3279 = vmatpush1.bf16.msra.mxu0 0
    %3280 = vmatprep.subr.bf16.mxu0 0
    %3281 = vmatpush1.bf16.msra.mxu0 0
    %3282 = vmatprep.subr.bf16.mxu0 0
    %3283 = vmatpush1.bf16.msra.mxu0 0
    %3284 = vmatprep.mubr.bf16.mxu0 0
    %3285 = vmatmul.mubr.bf16.gmra.mrb[0].mxu0 %v3222
    %v3286 = vpop.f32.mrb[0].mxu0
    %v3287 = vadd.f32 %v3245, %v3286
    %v3288 = vpop.f32.mrb[0].mxu0
    %v3289 = vadd.f32 %v3249, %v3288
    %v3290 = vpop.f32.mrb[0].mxu0
    %v3291 = vadd.f32 %v3245, %v3290
    %v3292 = vpop.f32.mrb[0].mxu0
    %v3293 = vadd.f32 %v3249, %v3292
    %3294 = vmatprep.mubr.bf16.mxu0 0
    %3295 = vmatmul.mubr.bf16.gmra.mrb[0].mxu0 %v3223
    %v3296 = vpop.f32.mrb[0].mxu0
    %v3297 = vadd.f32 %v3245, %v3296
    %v3298 = vpop.f32.mrb[0].mxu0
    %v3299 = vadd.f32 %v3249, %v3298
    %v3300 = vpop.f32.mrb[0].mxu0
    %v3301 = vadd.f32 %v3245, %v3300
    %v3302 = vpop.f32.mrb[0].mxu0
    %v3303 = vadd.f32 %v3249, %v3302
    %3304 = vdwg.mxu0
    %3305 = vst [vmem:[%s11] sm:$0xff] %v3287
    %3306 = vst [vmem:[%s11 + $0x8] sm:$0xff] %v3289
    %3307 = vst [vmem:[%s11 + $0x10] sm:$0xff] %v3291
    %3308 = vst [vmem:[%s11 + $0x18] sm:$0xff] %v3293
    %3309 = vst [vmem:[%s11 + $0x20] sm:$0xff] %v3297
    %3310 = vst [vmem:[%s11 + $0x28] sm:$0xff] %v3299
    %3311 = vst [vmem:[%s11 + $0x30] sm:$0xff] %v3301
    %3312 = vst [vmem:[%s11 + $0x38] sm:$0xff] %v3303
    // Predicated region
    $region141: #{seq2seq_forward.1} parent=1 // pred_check
      _
    $region142: #{seq2seq_forward.1} parent=1 // pred_check_branch
      %3314 = sbr.rel (0) target = $region144
    $region143: #{seq2seq_forward.1} parent=1 // pred_region
      _
    $region144: #{seq2seq_forward.1} parent=1 // pred_fallthru
      _
    // Predicated region
    $region145: #{seq2seq_forward.1} parent=1 // pred_check
      _
    $region146: #{seq2seq_forward.1} parent=1 // pred_check_branch
      %3316 = sbr.rel (0) target = $region148
    $region147: #{seq2seq_forward.1} parent=1 // pred_region
      _
    $region148: #{seq2seq_forward.1} parent=1 // pred_fallthru
      _
  %3317 = vsyncmov [#allocation9]
  %s3318 = vpop.sfrf %3317
  %p3319 = scmp.eq.s32.totalorder %s3318, 0
  %p3320 = pneg %p3319
  %3322 = shalt.err (%p3320)
  %s3323 = scalar_lea.sflag [#allocation9], 1
  %3324 = vsyncmov %s3323
  %s3325 = vpop.sfrf %3324
  %p3326 = scmp.eq.s32.totalorder %s3325, 0
  %p3327 = pneg %p3326
  %3329 = shalt.err (%p3327)
  %s3330 = scalar_lea.sflag [#allocation9], 2
  %3331 = vsyncmov %s3330
  %s3332 = vpop.sfrf %3331
  %p3333 = scmp.eq.s32.totalorder %s3332, 0
  %p3334 = pneg %p3333
  %3336 = shalt.err (%p3334)
  %s3337 = scalar_lea.sflag [#allocation9], 3
  %3338 = vsyncmov %s3337
  %s3339 = vpop.sfrf %3338
  %p3340 = scmp.eq.s32.totalorder %s3339, 0
  %p3341 = pneg %p3340
  %3343 = shalt.err (%p3341)

</llo_original>
